<compile_context>
chip_gen: v6e
topology: v6e:2x2x1
jax: 0.10.0
libtpu: 0.0.40
codegen_flags: <defaults>
</compile_context>

<pallas_src>
import math

import jax
import jax.numpy as jnp
from jax import lax
from jax.experimental import pallas as pl
from jax.experimental.pallas import tpu as pltpu


# --------------------------- recurrent Pallas kernel -------------------------
def _conv1d_lstm_recurrent_kernel(xg_ref, wh_ref, h_out_ref, c_last_ref,
                                  hwin_s, c_s):
    """One grid step = one chunk of Tc timesteps for one batch block.

    Grid = (batch blocks ["parallel"], time chunks ["arbitrary"]).

    xg_ref     : (Bb, Tc, L, 4H) bf16 precomputed input-conv gates (+ biases)
    wh_ref     : (k*H, 4H)       bf16 flattened recurrent-conv weight (const)
    h_out_ref  : (Bb, Tc, L, H)       h_t for this chunk
    c_last_ref : (Bb*L, H)       f32  c_T (written only on the last time chunk)
    hwin_s     : VMEM (Bb*L, k*H) bf16 persistent WINDOWED hidden state: column
                 group j holds h shifted by (j - p) along L with replicate
                 edges, i.e. exactly the LHS operand of the recurrent matmul.
    c_s        : VMEM (Bb*L, H)  f32  persistent cell state
    """
    s = pl.program_id(1)                       # time-chunk axis (innermost)
    Bb, Tc, L, G = xg_ref.shape
    H = G // 4
    kH = wh_ref.shape[0]
    k = kH // H
    p = (k - 1) // 2
    BL = Bb * L

    @pl.when(s == 0)
    def _():
        hwin_s[...] = jnp.zeros_like(hwin_s)
        c_s[...] = jnp.zeros_like(c_s)

    wh = wh_ref[...]                           # constant block across the grid
    # g-gate lane mask, hoisted out of the time loop (iota/broadcast is not
    # CSE'd by JAX, so build it exactly once per chunk).
    lane = lax.broadcasted_iota(jnp.int32, (BL, G), 1)
    is_g = jnp.logical_and(lane >= 2 * H, lane < 3 * H)

    def step(tt, carry):
        # Single contiguous read of the windowed state: no per-step gather /
        # concatenate on the read path in front of the MXU.
        h_win = hwin_s[...]                                     # (BL, kH) bf16
        xg = xg_ref[:, pl.ds(tt, 1), :, :].reshape(BL, G)       # bf16
        gates = xg.astype(jnp.float32) + jnp.dot(
            h_win, wh, preferred_element_type=jnp.float32)      # (BL, 4H) f32

        # Full-vreg nonlinearities: one sigmoid + one tanh pass over all 128
        # lanes, g lanes picked by mask (vs. 4 quarter-filled 32-lane passes).
        acts = jnp.where(is_g, jnp.tanh(gates), jax.nn.sigmoid(gates))
        g_i = acts[:, 0 * H:1 * H]
        g_f = acts[:, 1 * H:2 * H]
        g_g = acts[:, 2 * H:3 * H]
        g_o = acts[:, 3 * H:4 * H]

        c_next = g_f * c_s[...] + g_i * g_g                     # (BL, H) f32
        h_next = g_o * jnp.tanh(c_next)
        c_s[...] = c_next

        h3 = h_next.reshape(Bb, L, H)
        # Update the windowed state for the next step: write h into the k
        # shifted column groups; for k=3 the replicate edges are plain static
        # row slices (no broadcast_to, no separate edge stores).
        taps = []
        for j in range(k):
            d = j - p
            if d == 0:
                taps.append(h3)
            elif d < 0:
                edge = h3[:, :1, :]
                if -d > 1:
                    edge = jnp.broadcast_to(edge, (Bb, -d, H))
                taps.append(jnp.concatenate([edge, h3[:, :L + d, :]], axis=1))
            else:
                edge = h3[:, L - 1:, :]
                if d > 1:
                    edge = jnp.broadcast_to(edge, (Bb, d, H))
                taps.append(jnp.concatenate([h3[:, d:, :], edge], axis=1))
        hwin_s[...] = jnp.concatenate(taps, axis=-1).reshape(BL, kH).astype(
            hwin_s.dtype)

        # TODO(synk): a lane-dense (Bb, Tc, L*H) output slab would avoid the
        # masked sub-128-lane stores, but needs an in-kernel (L,H)->(L*H)
        # relayout per step which would cancel the win.
        h_out_ref[:, pl.ds(tt, 1), :, :] = h3.reshape(Bb, 1, L, H).astype(
            h_out_ref.dtype)
        return carry

    # Bounded-unroll fori_loop: scheduler visibility without fully unrolling a
    # possibly-hundreds-of-steps chunk (compile time / vreg live ranges).
    lax.fori_loop(0, Tc, step, 0, unroll=min(8, Tc))

    # c is only consumed at t = T-1 -> single write on the last time chunk.
    @pl.when(s == pl.num_programs(1) - 1)
    def _():
        c_last_ref[...] = c_s[...].astype(c_last_ref.dtype)


# ------------------------------ hardware queries ------------------------------
def _vmem_capacity_bytes():
    """Physical VMEM per TensorCore; conservative fallback = v7x (64 MiB)."""
    try:
        cap = getattr(pltpu.get_tpu_info(), "vmem_capacity_bytes", None)
        if cap:
            return int(cap)
    except Exception:
        pass
    return 64 << 20


def _num_tensorcores():
    """Best-effort TensorCores per chip: 2 on v7x, 1 on v5e/v6e."""
    try:
        kind = str(getattr(jax.devices()[0], "device_kind", "")).lower()
        if "v7" in kind or "7x" in kind:
            return 2
    except Exception:
        pass
    return 1


def _pick_t_chunk(T, bytes_per_step, vmem_cap):
    """Largest time chunk whose double-buffered in+out blocks fit ~40% of VMEM.
    No divisor-of-T requirement: the tail chunk is handled by padding T with
    'identity' gates so the cell state passes through unchanged."""
    budget = int(vmem_cap * 0.40)
    return max(1, min(T, budget // max(1, 2 * bytes_per_step)))


# ----------------------------- layer wrappers ---------------------------------
def _precompute_input_gates(x_seq, Wx, bias, *, out_dtype=jnp.bfloat16):
    """Hoisted input conv for all (B, T) at once (fully parallel, plain XLA).

    x_seq: (B, T, L, C) ; Wx: (4H, C, k) ; bias: (4H,) = bx + bh.
    Returns (B, T, L, 4H) gates in `out_dtype` (circular padding along L).
    bf16 storage halves the dominant HBM stream into the recurrent kernel and
    the matmul runs on the bf16 MXU path (f32 accumulation).
    """
    B, T, L, C = x_seq.shape
    k = Wx.shape[2]
    p = (k - 1) // 2
    if p > 0:
        xp = jnp.concatenate(
            [x_seq[:, :, L - p:, :], x_seq, x_seq[:, :, :p, :]], axis=2)
    else:
        xp = x_seq
    win = jnp.concatenate([xp[:, :, j:j + L, :] for j in range(k)], axis=-1)
    w_flat = jnp.transpose(Wx, (2, 1, 0)).reshape(k * C, -1)       # (k*C, 4H)
    g = jnp.einsum('btlc,cg->btlg',
                   win.astype(jnp.bfloat16), w_flat.astype(jnp.bfloat16),
                   preferred_element_type=jnp.float32)
    return (g + bias.astype(jnp.float32)).astype(out_dtype)


def run_layer_recurrent(gates_x, wh_flat, hidden_dim, *, out_dtype=jnp.bfloat16):
    """Sequential part of one Conv1dLSTM layer.

    gates_x : (B, T, L, 4H) bf16 precomputed input gates (+ both biases)
    wh_flat : (k*H, 4H)     bf16 flattened recurrent conv weight
    Returns h_seq (B, T, L, H) in `out_dtype` and c_last (B, L, H) f32.
    """
    B, T, L, G = gates_x.shape
    H = hidden_dim
    kH = wh_flat.shape[0]
    k = kH // H

    # Batch split across TensorCores (2-way on v7x, no-op elsewhere). Keeping
    # the batch folded otherwise keeps the per-step matmul M = Bb*L as large as
    # possible on 1-TC parts.
    n_b = math.gcd(B, _num_tensorcores())
    Bb = B // n_b

    in_itemsize = jnp.dtype(gates_x.dtype).itemsize
    out_itemsize = jnp.dtype(out_dtype).itemsize
    bytes_per_step = Bb * L * (G * in_itemsize + H * out_itemsize)
    vmem_cap = _vmem_capacity_bytes()
    t_chunk = _pick_t_chunk(T, bytes_per_step, vmem_cap)
    n_chunks = pl.cdiv(T, t_chunk)
    T_pad = n_chunks * t_chunk

    if T_pad > T:
        # Identity padding of the gate stream: i -> 0, f -> 1 (after the
        # sigmoid), so c is unchanged by the padded steps (c_T stays exact);
        # padded h rows are sliced off below.
        pad = jnp.zeros((G,), jnp.float32)
        pad = pad.at[:H].set(-30000.0).at[H:2 * H].set(30000.0)
        pad = jnp.broadcast_to(pad.astype(gates_x.dtype), (B, T_pad - T, L, G))
        gates_x = jnp.concatenate([gates_x, pad], axis=1)

    # Generation-aware VMEM limit: double-buffered blocks + scratch + weight,
    # capped below the physical capacity (64 MiB on v7x, 128 MiB on v5e/v6e).
    block_bytes = t_chunk * bytes_per_step
    scratch_bytes = Bb * L * (kH * 2 + H * 4)
    weight_bytes = kH * G * in_itemsize
    vmem_need = 2 * block_bytes + scratch_bytes + 2 * weight_bytes
    vmem_limit = int(min(0.9 * vmem_cap, vmem_need + (16 << 20)))

    h_seq, c_last = pl.pallas_call(
        _conv1d_lstm_recurrent_kernel,
        out_shape=(jax.ShapeDtypeStruct((B, T_pad, L, H), out_dtype),
                   jax.ShapeDtypeStruct((B * L, H), jnp.float32)),
        grid_spec=pltpu.PrefetchScalarGridSpec(
            num_scalar_prefetch=0,
            grid=(n_b, n_chunks),               # (batch blocks, time chunks)
            in_specs=[
                pl.BlockSpec((Bb, t_chunk, L, G), lambda b, s: (b, s, 0, 0)),
                # constant block index -> weight stays resident across steps
                pl.BlockSpec((kH, G), lambda b, s: (0, 0)),
            ],
            out_specs=(
                pl.BlockSpec((Bb, t_chunk, L, H), lambda b, s: (b, s, 0, 0)),
                pl.BlockSpec((Bb * L, H), lambda b, s: (b, 0)),
            ),
            scratch_shapes=[pltpu.VMEM((Bb * L, kH), jnp.bfloat16),
                            pltpu.VMEM((Bb * L, H), jnp.float32)],
        ),
        # batch blocks are independent ("parallel", sharded across the two
        # TensorCores on v7x); the time axis carries the recurrence.
        compiler_params=pltpu.CompilerParams(
            dimension_semantics=("parallel", "arbitrary"),
            vmem_limit_bytes=vmem_limit),
    )(gates_x, wh_flat)

    if T_pad > T:
        h_seq = h_seq[:, :T]
    return h_seq, c_last.reshape(B, L, H)


def conv1d_lstm_forward(x_btcl, params):
    """Conv1dLSTM.forward (batch_first=True, return_all_layers=False).

    x_btcl : (B, T, C_in, L) — PyTorch layout.
    params : list of (Wx(4H,Cin,k), Wh(4H,H,k), bx(4H,), bh(4H,)) per layer.
    Returns ([output (B,T,H,L)], [(h_T (B,H,L), c_T (B,H,L))]) — last layer only.
    """
    cur = jnp.transpose(x_btcl, (0, 1, 3, 2))            # (B, T, L, C)
    h_seq = c_last = None
    for (Wx, Wh, bx, bh) in params:
        H, k = Wh.shape[1], Wh.shape[2]
        gates_x = _precompute_input_gates(cur, Wx, bx + bh)        # bf16
        wh_flat = jnp.transpose(Wh, (2, 1, 0)).reshape(k * H, 4 * H)
        h_seq, c_last = run_layer_recurrent(
            gates_x, wh_flat.astype(jnp.bfloat16), H)
        cur = h_seq                                       # bf16 between layers
    # Only the last layer is returned (return_all_layers=False): do not build
    # transposed outputs for earlier layers.
    h_seq32 = h_seq.astype(jnp.float32)
    layer_out = jnp.transpose(h_seq32, (0, 1, 3, 2))      # (B, T, H, L)
    h_last = jnp.transpose(h_seq32[:, -1], (0, 2, 1))     # (B, H, L)
    c_last = jnp.transpose(c_last, (0, 2, 1))             # (B, H, L)
    return [layer_out], [(h_last, c_last)]


# ----------------------- pure-JAX f32 reference (for checking) ----------------
def _ref_conv1d(x, w, b, pad_mode):
    # x: (B, C, L), w: (O, C, k), b: (O,)
    k = w.shape[2]
    p = (k - 1) // 2
    if p > 0:
        if pad_mode == "circular":
            xp = jnp.concatenate([x[:, :, -p:], x, x[:, :, :p]], axis=2)
        else:  # replicate
            xp = jnp.concatenate([jnp.repeat(x[:, :, :1], p, axis=2), x,
                                  jnp.repeat(x[:, :, -1:], p, axis=2)], axis=2)
    else:
        xp = x
    y = jax.lax.conv_general_dilated(xp, w, (1,), "VALID",
                                     dimension_numbers=("NCH", "OIH", "NCH"))
    return y + b[None, :, None]


def ref_forward(x_btcl, params):
    B, T, _, L = x_btcl.shape
    cur = x_btcl
    outs, states = [], []
    for (Wx, Wh, bx, bh) in params:
        H = Wh.shape[1]
        h = jnp.zeros((B, H, L), jnp.float32)
        c = jnp.zeros((B, H, L), jnp.float32)
        hs = []
        for t in range(T):
            xc = _ref_conv1d(cur[:, t], Wx, bx, "circular")
            hc = _ref_conv1d(h, Wh, bh, "replicate")
            xi, xf, xg, xo = jnp.split(xc, 4, axis=1)
            hi, hf, hg, ho = jnp.split(hc, 4, axis=1)
            f = jax.nn.sigmoid(xf + hf)
            i = jax.nn.sigmoid(xi + hi)
            g = jnp.tanh(xg + hg)
            c = f * c + i * g
            o = jax.nn.sigmoid(xo + ho)
            h = o * jnp.tanh(c)
            hs.append(h)
        cur = jnp.stack(hs, axis=1)                       # (B, T, H, L)
        outs.append(cur)
        states.append((h, c))
    return outs[-1:], states[-1:]


if __name__ == "__main__":
    key = jax.random.PRNGKey(0)

    B, T, L = 2, 8, 16          # batch, seq_len, spatial length (input_shape=[16])
    input_dim = 4
    hidden_dims = [32, 32]
    kernel_sizes = [3, 3]

    # Deterministic parameter init mirroring the PyTorch __init__:
    # kaiming_normal_ on conv weights, uniform(-1e-5, 1e-5) on conv biases.
    params = []
    in_dim = input_dim
    for (H, k) in zip(hidden_dims, kernel_sizes):
        key, k1, k2, k3, k4 = jax.random.split(key, 5)
        std_x = (2.0 / (in_dim * k)) ** 0.5
        std_h = (2.0 / (H * k)) ** 0.5
        Wx = jax.random.normal(k1, (4 * H, in_dim, k), jnp.float32) * std_x
        Wh = jax.random.normal(k2, (4 * H, H, k), jnp.float32) * std_h
        bx = jax.random.uniform(k3, (4 * H,), jnp.float32, -1e-5, 1e-5)
        bh = jax.random.uniform(k4, (4 * H,), jnp.float32, -1e-5, 1e-5)
        params.append((Wx, Wh, bx, bh))
        in_dim = H

    key, kx = jax.random.split(key)
    x = jax.random.normal(kx, (B, T, input_dim, L), jnp.float32)  # (B, T, C, L)

    fwd = jax.jit(conv1d_lstm_forward)
    layer_outputs, last_states = fwd(x, params)
    out = jax.block_until_ready(layer_outputs[-1])

    ref_outs, ref_states = ref_forward(x, params)
    # bf16 storage of gates / weights / hidden-state operand (accumulation is
    # still f32) -> tolerances are loosened vs. the pure-f32 reference.
    err = jnp.abs(out - ref_outs[-1])
    assert float(err.max()) < 1.5e-1 and float(err.mean()) < 2e-2, (
        f"h sequence mismatch: max={float(err.max()):.4f}, "
        f"mean={float(err.mean()):.4f}")
    assert jnp.allclose(last_states[-1][0], ref_states[-1][0],
                        atol=1.5e-1, rtol=1e-1), "h_T mismatch"
    assert jnp.allclose(last_states[-1][1], ref_states[-1][1],
                        atol=1.5e-1, rtol=1e-1), "c_T mismatch"

    print("KERNEL_OK")
</pallas_src>

<mosaic_0001>
module attributes {stable_mosaic.version = 11 : i64} {
  func.func @_conv1d_lstm_recurrent_kernel(%arg0: i32, %arg1: i32, %arg2: memref<2x8x16x128xbf16, #tpu.memory_space<vmem>>, %arg3: memref<96x128xbf16, #tpu.memory_space<vmem>>, %arg4: memref<2x8x16x32xbf16, #tpu.memory_space<vmem>>, %arg5: memref<32x32xf32, #tpu.memory_space<vmem>>, %arg6: memref<32x96xbf16, #tpu.memory_space<vmem>>, %arg7: memref<32x32xf32, #tpu.memory_space<vmem>>) attributes {dimension_semantics = [#tpu.dimension_semantics<parallel>, #tpu.dimension_semantics<arbitrary>], iteration_bounds = array<i64: 1, 1>, scalar_prefetch = 0 : i64, scratch_operands = 2 : i64, tpu.core_type = #tpu.core_type<tc>, window_params = [{transform_indices = @transform_0, window_bounds = array<i64: 2, 8, 16, 128>}, {pipeline_mode = #tpu.pipeline_mode<synchronous>, transform_indices = @transform_1, window_bounds = array<i64: 96, 128>}, {transform_indices = @transform_2, window_bounds = array<i64: 2, 8, 16, 32>}, {transform_indices = @transform_3, window_bounds = array<i64: 32, 32>}]} {
    %c0_i32 = arith.constant 0 : i32
    %0 = arith.cmpi eq, %arg1, %c0_i32 : i32
    %1 = arith.extui %0 : i1 to i32
    %c0_i32_0 = arith.constant 0 : i32
    %2 = arith.cmpi ne, %1, %c0_i32_0 : i32
    scf.if %2 {
      %cst_132 = arith.constant 0.000000e+00 : bf16
      %333 = vector.broadcast %cst_132 : bf16 to vector<32x96xbf16>
      %c0_133 = arith.constant 0 : index
      %c0_134 = arith.constant 0 : index
      %334 = vector.load %arg6[%c0_133, %c0_134] : memref<32x96xbf16, #tpu.memory_space<vmem>>, vector<32x96xbf16>
      tpu.vector_store %arg6[%c0_133, %c0_134], %333 {strides = array<i32>} : memref<32x96xbf16, #tpu.memory_space<vmem>>, vector<32x96xbf16>,
      %cst_135 = arith.constant 0.000000e+00 : f32
      %335 = vector.broadcast %cst_135 : f32 to vector<32x32xf32>
      %c0_136 = arith.constant 0 : index
      %c0_137 = arith.constant 0 : index
      %336 = vector.load %arg7[%c0_136, %c0_137] : memref<32x32xf32, #tpu.memory_space<vmem>>, vector<32x32xf32>
      tpu.vector_store %arg7[%c0_136, %c0_137], %335 {strides = array<i32>} : memref<32x32xf32, #tpu.memory_space<vmem>>, vector<32x32xf32>,
    } else {
    }
    %c0 = arith.constant 0 : index
    %c0_1 = arith.constant 0 : index
    %3 = vector.load %arg3[%c0, %c0_1] : memref<96x128xbf16, #tpu.memory_space<vmem>>, vector<96x128xbf16>
    %4 = tpu.iota {dimensions = array<i32: 1>} : vector<32x128xi32>
    %c64_i32 = arith.constant 64 : i32
    %5 = vector.broadcast %c64_i32 : i32 to vector<32x128xi32>
    %6 = arith.cmpi sge, %4, %5 : vector<32x128xi32>
    %c96_i32 = arith.constant 96 : i32
    %7 = vector.broadcast %c96_i32 : i32 to vector<32x128xi32>
    %8 = arith.cmpi slt, %4, %7 : vector<32x128xi32>
    %9 = arith.andi %6, %8 : vector<32x128xi1>
    %c0_i32_2 = arith.constant 0 : i32
    %c0_3 = arith.constant 0 : index
    %c0_4 = arith.constant 0 : index
    %10 = vector.load %arg6[%c0_3, %c0_4] : memref<32x96xbf16, #tpu.memory_space<vmem>>, vector<32x96xbf16>
    %c0_5 = arith.constant 0 : index
    %11 = arith.index_cast %c0_i32_2 : i32 to index
    %c0_6 = arith.constant 0 : index
    %c0_7 = arith.constant 0 : index
    %12 = vector.load %arg2[%c0_5, %11, %c0_6, %c0_7] : memref<2x8x16x128xbf16, #tpu.memory_space<vmem>>, vector<2x1x16x128xbf16>
    %13 = vector.shape_cast %12 : vector<2x1x16x128xbf16> to vector<32x128xbf16>
    %14 = arith.extf %13 : vector<32x128xbf16> to vector<32x128xf32>
    %cst = arith.constant dense<0.000000e+00> : vector<32x128xf32>
    %15 = tpu.matmul %10, %3, %cst {dimension_numbers = #tpu.dot_dimension_numbers<[1], [0], [0], [1], [0, 0, 1, 1], [], []>} : vector<32x96xbf16>, vector<96x128xbf16>, vector<32x128xf32> -> vector<32x128xf32>
    %16 = arith.addf %14, %15 : vector<32x128xf32>
    %17 = math.tanh %16 : vector<32x128xf32>
    %18 = arith.negf %16 : vector<32x128xf32>
    %19 = math.exp %18 : vector<32x128xf32>
    %cst_8 = arith.constant 1.000000e+00 : f32
    %20 = vector.broadcast %cst_8 : f32 to vector<32x128xf32>
    %21 = arith.addf %20, %19 : vector<32x128xf32>
    %22 = arith.divf %20, %21 : vector<32x128xf32>
    %23 = arith.select %9, %17, %22 : vector<32x128xi1>, vector<32x128xf32>
    %24 = vector.extract_strided_slice %23 {offsets = [0, 0], sizes = [32, 32], strides = [1, 1]} : vector<32x128xf32> to vector<32x32xf32>
    %25 = vector.extract_strided_slice %23 {offsets = [0, 32], sizes = [32, 32], strides = [1, 1]} : vector<32x128xf32> to vector<32x32xf32>
    %26 = vector.extract_strided_slice %23 {offsets = [0, 64], sizes = [32, 32], strides = [1, 1]} : vector<32x128xf32> to vector<32x32xf32>
    %27 = vector.extract_strided_slice %23 {offsets = [0, 96], sizes = [32, 32], strides = [1, 1]} : vector<32x128xf32> to vector<32x32xf32>
    %c0_9 = arith.constant 0 : index
    %c0_10 = arith.constant 0 : index
    %28 = vector.load %arg7[%c0_9, %c0_10] : memref<32x32xf32, #tpu.memory_space<vmem>>, vector<32x32xf32>
    %29 = arith.mulf %25, %28 : vector<32x32xf32>
    %30 = arith.mulf %24, %26 : vector<32x32xf32>
    %31 = arith.addf %29, %30 : vector<32x32xf32>
    %32 = math.tanh %31 : vector<32x32xf32>
    %33 = arith.mulf %27, %32 : vector<32x32xf32>
    %c0_11 = arith.constant 0 : index
    %c0_12 = arith.constant 0 : index
    %34 = vector.load %arg7[%c0_11, %c0_12] : memref<32x32xf32, #tpu.memory_space<vmem>>, vector<32x32xf32>
    tpu.vector_store %arg7[%c0_11, %c0_12], %31 {strides = array<i32>} : memref<32x32xf32, #tpu.memory_space<vmem>>, vector<32x32xf32>,
    %35 = vector.shape_cast %33 : vector<32x32xf32> to vector<2x16x32xf32>
    %36 = vector.extract_strided_slice %35 {offsets = [0, 0, 0], sizes = [2, 1, 32], strides = [1, 1, 1]} : vector<2x16x32xf32> to vector<2x1x32xf32>
    %37 = vector.extract_strided_slice %35 {offsets = [0, 0, 0], sizes = [2, 15, 32], strides = [1, 1, 1]} : vector<2x16x32xf32> to vector<2x15x32xf32>
    %38 = tpu.concatenate %36, %37 in 1 : vector<2x1x32xf32>, vector<2x15x32xf32> -> vector<2x16x32xf32>
    %39 = vector.extract_strided_slice %35 {offsets = [0, 15, 0], sizes = [2, 1, 32], strides = [1, 1, 1]} : vector<2x16x32xf32> to vector<2x1x32xf32>
    %40 = vector.extract_strided_slice %35 {offsets = [0, 1, 0], sizes = [2, 15, 32], strides = [1, 1, 1]} : vector<2x16x32xf32> to vector<2x15x32xf32>
    %41 = tpu.concatenate %40, %39 in 1 : vector<2x15x32xf32>, vector<2x1x32xf32> -> vector<2x16x32xf32>
    %42 = tpu.concatenate %38, %35, %41 in 2 : vector<2x16x32xf32>, vector<2x16x32xf32>, vector<2x16x32xf32> -> vector<2x16x96xf32>
    %43 = vector.shape_cast %42 : vector<2x16x96xf32> to vector<32x96xf32>
    %44 = arith.truncf %43 : vector<32x96xf32> to vector<32x96xbf16>
    %c0_13 = arith.constant 0 : index
    %c0_14 = arith.constant 0 : index
    %45 = vector.load %arg6[%c0_13, %c0_14] : memref<32x96xbf16, #tpu.memory_space<vmem>>, vector<32x96xbf16>
    tpu.vector_store %arg6[%c0_13, %c0_14], %44 {strides = array<i32>} : memref<32x96xbf16, #tpu.memory_space<vmem>>, vector<32x96xbf16>,
    %46 = vector.shape_cast %35 : vector<2x16x32xf32> to vector<2x1x16x32xf32>
    %47 = arith.truncf %46 : vector<2x1x16x32xf32> to vector<2x1x16x32xbf16>
    %c0_15 = arith.constant 0 : index
    %48 = arith.index_cast %c0_i32_2 : i32 to index
    %c0_16 = arith.constant 0 : index
    %c0_17 = arith.constant 0 : index
    %49 = vector.load %arg4[%c0_15, %48, %c0_16, %c0_17] : memref<2x8x16x32xbf16, #tpu.memory_space<vmem>>, vector<2x1x16x32xbf16>
    tpu.vector_store %arg4[%c0_15, %48, %c0_16, %c0_17], %47 {strides = array<i32>} : memref<2x8x16x32xbf16, #tpu.memory_space<vmem>>, vector<2x1x16x32xbf16>,
    %c1_i32 = arith.constant 1 : i32
    %c0_18 = arith.constant 0 : index
    %c0_19 = arith.constant 0 : index
    %50 = vector.load %arg6[%c0_18, %c0_19] : memref<32x96xbf16, #tpu.memory_space<vmem>>, vector<32x96xbf16>
    %c0_20 = arith.constant 0 : index
    %51 = arith.index_cast %c1_i32 : i32 to index
    %c0_21 = arith.constant 0 : index
    %c0_22 = arith.constant 0 : index
    %52 = vector.load %arg2[%c0_20, %51, %c0_21, %c0_22] : memref<2x8x16x128xbf16, #tpu.memory_space<vmem>>, vector<2x1x16x128xbf16>
    %53 = vector.shape_cast %52 : vector<2x1x16x128xbf16> to vector<32x128xbf16>
    %54 = arith.extf %53 : vector<32x128xbf16> to vector<32x128xf32>
    %cst_23 = arith.constant dense<0.000000e+00> : vector<32x128xf32>
    %55 = tpu.matmul %50, %3, %cst_23 {dimension_numbers = #tpu.dot_dimension_numbers<[1], [0], [0], [1], [0, 0, 1, 1], [], []>} : vector<32x96xbf16>, vector<96x128xbf16>, vector<32x128xf32> -> vector<32x128xf32>
    %56 = arith.addf %54, %55 : vector<32x128xf32>
    %57 = math.tanh %56 : vector<32x128xf32>
    %58 = arith.negf %56 : vector<32x128xf32>
    %59 = math.exp %58 : vector<32x128xf32>
    %cst_24 = arith.constant 1.000000e+00 : f32
    %60 = vector.broadcast %cst_24 : f32 to vector<32x128xf32>
    %61 = arith.addf %60, %59 : vector<32x128xf32>
    %62 = arith.divf %60, %61 : vector<32x128xf32>
    %63 = arith.select %9, %57, %62 : vector<32x128xi1>, vector<32x128xf32>
    %64 = vector.extract_strided_slice %63 {offsets = [0, 0], sizes = [32, 32], strides = [1, 1]} : vector<32x128xf32> to vector<32x32xf32>
    %65 = vector.extract_strided_slice %63 {offsets = [0, 32], sizes = [32, 32], strides = [1, 1]} : vector<32x128xf32> to vector<32x32xf32>
    %66 = vector.extract_strided_slice %63 {offsets = [0, 64], sizes = [32, 32], strides = [1, 1]} : vector<32x128xf32> to vector<32x32xf32>
    %67 = vector.extract_strided_slice %63 {offsets = [0, 96], sizes = [32, 32], strides = [1, 1]} : vector<32x128xf32> to vector<32x32xf32>
    %c0_25 = arith.constant 0 : index
    %c0_26 = arith.constant 0 : index
    %68 = vector.load %arg7[%c0_25, %c0_26] : memref<32x32xf32, #tpu.memory_space<vmem>>, vector<32x32xf32>
    %69 = arith.mulf %65, %68 : vector<32x32xf32>
    %70 = arith.mulf %64, %66 : vector<32x32xf32>
    %71 = arith.addf %69, %70 : vector<32x32xf32>
    %72 = math.tanh %71 : vector<32x32xf32>
    %73 = arith.mulf %67, %72 : vector<32x32xf32>
    %c0_27 = arith.constant 0 : index
    %c0_28 = arith.constant 0 : index
    %74 = vector.load %arg7[%c0_27, %c0_28] : memref<32x32xf32, #tpu.memory_space<vmem>>, vector<32x32xf32>
    tpu.vector_store %arg7[%c0_27, %c0_28], %71 {strides = array<i32>} : memref<32x32xf32, #tpu.memory_space<vmem>>, vector<32x32xf32>,
    %75 = vector.shape_cast %73 : vector<32x32xf32> to vector<2x16x32xf32>
    %76 = vector.extract_strided_slice %75 {offsets = [0, 0, 0], sizes = [2, 1, 32], strides = [1, 1, 1]} : vector<2x16x32xf32> to vector<2x1x32xf32>
    %77 = vector.extract_strided_slice %75 {offsets = [0, 0, 0], sizes = [2, 15, 32], strides = [1, 1, 1]} : vector<2x16x32xf32> to vector<2x15x32xf32>
    %78 = tpu.concatenate %76, %77 in 1 : vector<2x1x32xf32>, vector<2x15x32xf32> -> vector<2x16x32xf32>
    %79 = vector.extract_strided_slice %75 {offsets = [0, 15, 0], sizes = [2, 1, 32], strides = [1, 1, 1]} : vector<2x16x32xf32> to vector<2x1x32xf32>
    %80 = vector.extract_strided_slice %75 {offsets = [0, 1, 0], sizes = [2, 15, 32], strides = [1, 1, 1]} : vector<2x16x32xf32> to vector<2x15x32xf32>
    %81 = tpu.concatenate %80, %79 in 1 : vector<2x15x32xf32>, vector<2x1x32xf32> -> vector<2x16x32xf32>
    %82 = tpu.concatenate %78, %75, %81 in 2 : vector<2x16x32xf32>, vector<2x16x32xf32>, vector<2x16x32xf32> -> vector<2x16x96xf32>
    %83 = vector.shape_cast %82 : vector<2x16x96xf32> to vector<32x96xf32>
    %84 = arith.truncf %83 : vector<32x96xf32> to vector<32x96xbf16>
    %c0_29 = arith.constant 0 : index
    %c0_30 = arith.constant 0 : index
    %85 = vector.load %arg6[%c0_29, %c0_30] : memref<32x96xbf16, #tpu.memory_space<vmem>>, vector<32x96xbf16>
    tpu.vector_store %arg6[%c0_29, %c0_30], %84 {strides = array<i32>} : memref<32x96xbf16, #tpu.memory_space<vmem>>, vector<32x96xbf16>,
    %86 = vector.shape_cast %75 : vector<2x16x32xf32> to vector<2x1x16x32xf32>
    %87 = arith.truncf %86 : vector<2x1x16x32xf32> to vector<2x1x16x32xbf16>
    %c0_31 = arith.constant 0 : index
    %88 = arith.index_cast %c1_i32 : i32 to index
    %c0_32 = arith.constant 0 : index
    %c0_33 = arith.constant 0 : index
    %89 = vector.load %arg4[%c0_31, %88, %c0_32, %c0_33] : memref<2x8x16x32xbf16, #tpu.memory_space<vmem>>, vector<2x1x16x32xbf16>
    tpu.vector_store %arg4[%c0_31, %88, %c0_32, %c0_33], %87 {strides = array<i32>} : memref<2x8x16x32xbf16, #tpu.memory_space<vmem>>, vector<2x1x16x32xbf16>,
    %c2_i32 = arith.constant 2 : i32
    %c0_34 = arith.constant 0 : index
    %c0_35 = arith.constant 0 : index
    %90 = vector.load %arg6[%c0_34, %c0_35] : memref<32x96xbf16, #tpu.memory_space<vmem>>, vector<32x96xbf16>
    %c0_36 = arith.constant 0 : index
    %91 = arith.index_cast %c2_i32 : i32 to index
    %c0_37 = arith.constant 0 : index
    %c0_38 = arith.constant 0 : index
    %92 = vector.load %arg2[%c0_36, %91, %c0_37, %c0_38] : memref<2x8x16x128xbf16, #tpu.memory_space<vmem>>, vector<2x1x16x128xbf16>
    %93 = vector.shape_cast %92 : vector<2x1x16x128xbf16> to vector<32x128xbf16>
    %94 = arith.extf %93 : vector<32x128xbf16> to vector<32x128xf32>
    %cst_39 = arith.constant dense<0.000000e+00> : vector<32x128xf32>
    %95 = tpu.matmul %90, %3, %cst_39 {dimension_numbers = #tpu.dot_dimension_numbers<[1], [0], [0], [1], [0, 0, 1, 1], [], []>} : vector<32x96xbf16>, vector<96x128xbf16>, vector<32x128xf32> -> vector<32x128xf32>
    %96 = arith.addf %94, %95 : vector<32x128xf32>
    %97 = math.tanh %96 : vector<32x128xf32>
    %98 = arith.negf %96 : vector<32x128xf32>
    %99 = math.exp %98 : vector<32x128xf32>
    %cst_40 = arith.constant 1.000000e+00 : f32
    %100 = vector.broadcast %cst_40 : f32 to vector<32x128xf32>
    %101 = arith.addf %100, %99 : vector<32x128xf32>
    %102 = arith.divf %100, %101 : vector<32x128xf32>
    %103 = arith.select %9, %97, %102 : vector<32x128xi1>, vector<32x128xf32>
    %104 = vector.extract_strided_slice %103 {offsets = [0, 0], sizes = [32, 32], strides = [1, 1]} : vector<32x128xf32> to vector<32x32xf32>
    %105 = vector.extract_strided_slice %103 {offsets = [0, 32], sizes = [32, 32], strides = [1, 1]} : vector<32x128xf32> to vector<32x32xf32>
    %106 = vector.extract_strided_slice %103 {offsets = [0, 64], sizes = [32, 32], strides = [1, 1]} : vector<32x128xf32> to vector<32x32xf32>
    %107 = vector.extract_strided_slice %103 {offsets = [0, 96], sizes = [32, 32], strides = [1, 1]} : vector<32x128xf32> to vector<32x32xf32>
    %c0_41 = arith.constant 0 : index
    %c0_42 = arith.constant 0 : index
    %108 = vector.load %arg7[%c0_41, %c0_42] : memref<32x32xf32, #tpu.memory_space<vmem>>, vector<32x32xf32>
    %109 = arith.mulf %105, %108 : vector<32x32xf32>
    %110 = arith.mulf %104, %106 : vector<32x32xf32>
    %111 = arith.addf %109, %110 : vector<32x32xf32>
    %112 = math.tanh %111 : vector<32x32xf32>
    %113 = arith.mulf %107, %112 : vector<32x32xf32>
    %c0_43 = arith.constant 0 : index
    %c0_44 = arith.constant 0 : index
    %114 = vector.load %arg7[%c0_43, %c0_44] : memref<32x32xf32, #tpu.memory_space<vmem>>, vector<32x32xf32>
    tpu.vector_store %arg7[%c0_43, %c0_44], %111 {strides = array<i32>} : memref<32x32xf32, #tpu.memory_space<vmem>>, vector<32x32xf32>,
    %115 = vector.shape_cast %113 : vector<32x32xf32> to vector<2x16x32xf32>
    %116 = vector.extract_strided_slice %115 {offsets = [0, 0, 0], sizes = [2, 1, 32], strides = [1, 1, 1]} : vector<2x16x32xf32> to vector<2x1x32xf32>
    %117 = vector.extract_strided_slice %115 {offsets = [0, 0, 0], sizes = [2, 15, 32], strides = [1, 1, 1]} : vector<2x16x32xf32> to vector<2x15x32xf32>
    %118 = tpu.concatenate %116, %117 in 1 : vector<2x1x32xf32>, vector<2x15x32xf32> -> vector<2x16x32xf32>
    %119 = vector.extract_strided_slice %115 {offsets = [0, 15, 0], sizes = [2, 1, 32], strides = [1, 1, 1]} : vector<2x16x32xf32> to vector<2x1x32xf32>
    %120 = vector.extract_strided_slice %115 {offsets = [0, 1, 0], sizes = [2, 15, 32], strides = [1, 1, 1]} : vector<2x16x32xf32> to vector<2x15x32xf32>
    %121 = tpu.concatenate %120, %119 in 1 : vector<2x15x32xf32>, vector<2x1x32xf32> -> vector<2x16x32xf32>
    %122 = tpu.concatenate %118, %115, %121 in 2 : vector<2x16x32xf32>, vector<2x16x32xf32>, vector<2x16x32xf32> -> vector<2x16x96xf32>
    %123 = vector.shape_cast %122 : vector<2x16x96xf32> to vector<32x96xf32>
    %124 = arith.truncf %123 : vector<32x96xf32> to vector<32x96xbf16>
    %c0_45 = arith.constant 0 : index
    %c0_46 = arith.constant 0 : index
    %125 = vector.load %arg6[%c0_45, %c0_46] : memref<32x96xbf16, #tpu.memory_space<vmem>>, vector<32x96xbf16>
    tpu.vector_store %arg6[%c0_45, %c0_46], %124 {strides = array<i32>} : memref<32x96xbf16, #tpu.memory_space<vmem>>, vector<32x96xbf16>,
    %126 = vector.shape_cast %115 : vector<2x16x32xf32> to vector<2x1x16x32xf32>
    %127 = arith.truncf %126 : vector<2x1x16x32xf32> to vector<2x1x16x32xbf16>
    %c0_47 = arith.constant 0 : index
    %128 = arith.index_cast %c2_i32 : i32 to index
    %c0_48 = arith.constant 0 : index
    %c0_49 = arith.constant 0 : index
    %129 = vector.load %arg4[%c0_47, %128, %c0_48, %c0_49] : memref<2x8x16x32xbf16, #tpu.memory_space<vmem>>, vector<2x1x16x32xbf16>
    tpu.vector_store %arg4[%c0_47, %128, %c0_48, %c0_49], %127 {strides = array<i32>} : memref<2x8x16x32xbf16, #tpu.memory_space<vmem>>, vector<2x1x16x32xbf16>,
    %c3_i32 = arith.constant 3 : i32
    %c0_50 = arith.constant 0 : index
    %c0_51 = arith.constant 0 : index
    %130 = vector.load %arg6[%c0_50, %c0_51] : memref<32x96xbf16, #tpu.memory_space<vmem>>, vector<32x96xbf16>
    %c0_52 = arith.constant 0 : index
    %131 = arith.index_cast %c3_i32 : i32 to index
    %c0_53 = arith.constant 0 : index
    %c0_54 = arith.constant 0 : index
    %132 = vector.load %arg2[%c0_52, %131, %c0_53, %c0_54] : memref<2x8x16x128xbf16, #tpu.memory_space<vmem>>, vector<2x1x16x128xbf16>
    %133 = vector.shape_cast %132 : vector<2x1x16x128xbf16> to vector<32x128xbf16>
    %134 = arith.extf %133 : vector<32x128xbf16> to vector<32x128xf32>
    %cst_55 = arith.constant dense<0.000000e+00> : vector<32x128xf32>
    %135 = tpu.matmul %130, %3, %cst_55 {dimension_numbers = #tpu.dot_dimension_numbers<[1], [0], [0], [1], [0, 0, 1, 1], [], []>} : vector<32x96xbf16>, vector<96x128xbf16>, vector<32x128xf32> -> vector<32x128xf32>
    %136 = arith.addf %134, %135 : vector<32x128xf32>
    %137 = math.tanh %136 : vector<32x128xf32>
    %138 = arith.negf %136 : vector<32x128xf32>
    %139 = math.exp %138 : vector<32x128xf32>
    %cst_56 = arith.constant 1.000000e+00 : f32
    %140 = vector.broadcast %cst_56 : f32 to vector<32x128xf32>
    %141 = arith.addf %140, %139 : vector<32x128xf32>
    %142 = arith.divf %140, %141 : vector<32x128xf32>
    %143 = arith.select %9, %137, %142 : vector<32x128xi1>, vector<32x128xf32>
    %144 = vector.extract_strided_slice %143 {offsets = [0, 0], sizes = [32, 32], strides = [1, 1]} : vector<32x128xf32> to vector<32x32xf32>
    %145 = vector.extract_strided_slice %143 {offsets = [0, 32], sizes = [32, 32], strides = [1, 1]} : vector<32x128xf32> to vector<32x32xf32>
    %146 = vector.extract_strided_slice %143 {offsets = [0, 64], sizes = [32, 32], strides = [1, 1]} : vector<32x128xf32> to vector<32x32xf32>
    %147 = vector.extract_strided_slice %143 {offsets = [0, 96], sizes = [32, 32], strides = [1, 1]} : vector<32x128xf32> to vector<32x32xf32>
    %c0_57 = arith.constant 0 : index
    %c0_58 = arith.constant 0 : index
    %148 = vector.load %arg7[%c0_57, %c0_58] : memref<32x32xf32, #tpu.memory_space<vmem>>, vector<32x32xf32>
    %149 = arith.mulf %145, %148 : vector<32x32xf32>
    %150 = arith.mulf %144, %146 : vector<32x32xf32>
    %151 = arith.addf %149, %150 : vector<32x32xf32>
    %152 = math.tanh %151 : vector<32x32xf32>
    %153 = arith.mulf %147, %152 : vector<32x32xf32>
    %c0_59 = arith.constant 0 : index
    %c0_60 = arith.constant 0 : index
    %154 = vector.load %arg7[%c0_59, %c0_60] : memref<32x32xf32, #tpu.memory_space<vmem>>, vector<32x32xf32>
    tpu.vector_store %arg7[%c0_59, %c0_60], %151 {strides = array<i32>} : memref<32x32xf32, #tpu.memory_space<vmem>>, vector<32x32xf32>,
    %155 = vector.shape_cast %153 : vector<32x32xf32> to vector<2x16x32xf32>
    %156 = vector.extract_strided_slice %155 {offsets = [0, 0, 0], sizes = [2, 1, 32], strides = [1, 1, 1]} : vector<2x16x32xf32> to vector<2x1x32xf32>
    %157 = vector.extract_strided_slice %155 {offsets = [0, 0, 0], sizes = [2, 15, 32], strides = [1, 1, 1]} : vector<2x16x32xf32> to vector<2x15x32xf32>
    %158 = tpu.concatenate %156, %157 in 1 : vector<2x1x32xf32>, vector<2x15x32xf32> -> vector<2x16x32xf32>
    %159 = vector.extract_strided_slice %155 {offsets = [0, 15, 0], sizes = [2, 1, 32], strides = [1, 1, 1]} : vector<2x16x32xf32> to vector<2x1x32xf32>
    %160 = vector.extract_strided_slice %155 {offsets = [0, 1, 0], sizes = [2, 15, 32], strides = [1, 1, 1]} : vector<2x16x32xf32> to vector<2x15x32xf32>
    %161 = tpu.concatenate %160, %159 in 1 : vector<2x15x32xf32>, vector<2x1x32xf32> -> vector<2x16x32xf32>
    %162 = tpu.concatenate %158, %155, %161 in 2 : vector<2x16x32xf32>, vector<2x16x32xf32>, vector<2x16x32xf32> -> vector<2x16x96xf32>
    %163 = vector.shape_cast %162 : vector<2x16x96xf32> to vector<32x96xf32>
    %164 = arith.truncf %163 : vector<32x96xf32> to vector<32x96xbf16>
    %c0_61 = arith.constant 0 : index
    %c0_62 = arith.constant 0 : index
    %165 = vector.load %arg6[%c0_61, %c0_62] : memref<32x96xbf16, #tpu.memory_space<vmem>>, vector<32x96xbf16>
    tpu.vector_store %arg6[%c0_61, %c0_62], %164 {strides = array<i32>} : memref<32x96xbf16, #tpu.memory_space<vmem>>, vector<32x96xbf16>,
    %166 = vector.shape_cast %155 : vector<2x16x32xf32> to vector<2x1x16x32xf32>
    %167 = arith.truncf %166 : vector<2x1x16x32xf32> to vector<2x1x16x32xbf16>
    %c0_63 = arith.constant 0 : index
    %168 = arith.index_cast %c3_i32 : i32 to index
    %c0_64 = arith.constant 0 : index
    %c0_65 = arith.constant 0 : index
    %169 = vector.load %arg4[%c0_63, %168, %c0_64, %c0_65] : memref<2x8x16x32xbf16, #tpu.memory_space<vmem>>, vector<2x1x16x32xbf16>
    tpu.vector_store %arg4[%c0_63, %168, %c0_64, %c0_65], %167 {strides = array<i32>} : memref<2x8x16x32xbf16, #tpu.memory_space<vmem>>, vector<2x1x16x32xbf16>,
    %c4_i32 = arith.constant 4 : i32
    %c0_66 = arith.constant 0 : index
    %c0_67 = arith.constant 0 : index
    %170 = vector.load %arg6[%c0_66, %c0_67] : memref<32x96xbf16, #tpu.memory_space<vmem>>, vector<32x96xbf16>
    %c0_68 = arith.constant 0 : index
    %171 = arith.index_cast %c4_i32 : i32 to index
    %c0_69 = arith.constant 0 : index
    %c0_70 = arith.constant 0 : index
    %172 = vector.load %arg2[%c0_68, %171, %c0_69, %c0_70] : memref<2x8x16x128xbf16, #tpu.memory_space<vmem>>, vector<2x1x16x128xbf16>
    %173 = vector.shape_cast %172 : vector<2x1x16x128xbf16> to vector<32x128xbf16>
    %174 = arith.extf %173 : vector<32x128xbf16> to vector<32x128xf32>
    %cst_71 = arith.constant dense<0.000000e+00> : vector<32x128xf32>
    %175 = tpu.matmul %170, %3, %cst_71 {dimension_numbers = #tpu.dot_dimension_numbers<[1], [0], [0], [1], [0, 0, 1, 1], [], []>} : vector<32x96xbf16>, vector<96x128xbf16>, vector<32x128xf32> -> vector<32x128xf32>
    %176 = arith.addf %174, %175 : vector<32x128xf32>
    %177 = math.tanh %176 : vector<32x128xf32>
    %178 = arith.negf %176 : vector<32x128xf32>
    %179 = math.exp %178 : vector<32x128xf32>
    %cst_72 = arith.constant 1.000000e+00 : f32
    %180 = vector.broadcast %cst_72 : f32 to vector<32x128xf32>
    %181 = arith.addf %180, %179 : vector<32x128xf32>
    %182 = arith.divf %180, %181 : vector<32x128xf32>
    %183 = arith.select %9, %177, %182 : vector<32x128xi1>, vector<32x128xf32>
    %184 = vector.extract_strided_slice %183 {offsets = [0, 0], sizes = [32, 32], strides = [1, 1]} : vector<32x128xf32> to vector<32x32xf32>
    %185 = vector.extract_strided_slice %183 {offsets = [0, 32], sizes = [32, 32], strides = [1, 1]} : vector<32x128xf32> to vector<32x32xf32>
    %186 = vector.extract_strided_slice %183 {offsets = [0, 64], sizes = [32, 32], strides = [1, 1]} : vector<32x128xf32> to vector<32x32xf32>
    %187 = vector.extract_strided_slice %183 {offsets = [0, 96], sizes = [32, 32], strides = [1, 1]} : vector<32x128xf32> to vector<32x32xf32>
    %c0_73 = arith.constant 0 : index
    %c0_74 = arith.constant 0 : index
    %188 = vector.load %arg7[%c0_73, %c0_74] : memref<32x32xf32, #tpu.memory_space<vmem>>, vector<32x32xf32>
    %189 = arith.mulf %185, %188 : vector<32x32xf32>
    %190 = arith.mulf %184, %186 : vector<32x32xf32>
    %191 = arith.addf %189, %190 : vector<32x32xf32>
    %192 = math.tanh %191 : vector<32x32xf32>
    %193 = arith.mulf %187, %192 : vector<32x32xf32>
    %c0_75 = arith.constant 0 : index
    %c0_76 = arith.constant 0 : index
    %194 = vector.load %arg7[%c0_75, %c0_76] : memref<32x32xf32, #tpu.memory_space<vmem>>, vector<32x32xf32>
    tpu.vector_store %arg7[%c0_75, %c0_76], %191 {strides = array<i32>} : memref<32x32xf32, #tpu.memory_space<vmem>>, vector<32x32xf32>,
    %195 = vector.shape_cast %193 : vector<32x32xf32> to vector<2x16x32xf32>
    %196 = vector.extract_strided_slice %195 {offsets = [0, 0, 0], sizes = [2, 1, 32], strides = [1, 1, 1]} : vector<2x16x32xf32> to vector<2x1x32xf32>
    %197 = vector.extract_strided_slice %195 {offsets = [0, 0, 0], sizes = [2, 15, 32], strides = [1, 1, 1]} : vector<2x16x32xf32> to vector<2x15x32xf32>
    %198 = tpu.concatenate %196, %197 in 1 : vector<2x1x32xf32>, vector<2x15x32xf32> -> vector<2x16x32xf32>
    %199 = vector.extract_strided_slice %195 {offsets = [0, 15, 0], sizes = [2, 1, 32], strides = [1, 1, 1]} : vector<2x16x32xf32> to vector<2x1x32xf32>
    %200 = vector.extract_strided_slice %195 {offsets = [0, 1, 0], sizes = [2, 15, 32], strides = [1, 1, 1]} : vector<2x16x32xf32> to vector<2x15x32xf32>
    %201 = tpu.concatenate %200, %199 in 1 : vector<2x15x32xf32>, vector<2x1x32xf32> -> vector<2x16x32xf32>
    %202 = tpu.concatenate %198, %195, %201 in 2 : vector<2x16x32xf32>, vector<2x16x32xf32>, vector<2x16x32xf32> -> vector<2x16x96xf32>
    %203 = vector.shape_cast %202 : vector<2x16x96xf32> to vector<32x96xf32>
    %204 = arith.truncf %203 : vector<32x96xf32> to vector<32x96xbf16>
    %c0_77 = arith.constant 0 : index
    %c0_78 = arith.constant 0 : index
    %205 = vector.load %arg6[%c0_77, %c0_78] : memref<32x96xbf16, #tpu.memory_space<vmem>>, vector<32x96xbf16>
    tpu.vector_store %arg6[%c0_77, %c0_78], %204 {strides = array<i32>} : memref<32x96xbf16, #tpu.memory_space<vmem>>, vector<32x96xbf16>,
    %206 = vector.shape_cast %195 : vector<2x16x32xf32> to vector<2x1x16x32xf32>
    %207 = arith.truncf %206 : vector<2x1x16x32xf32> to vector<2x1x16x32xbf16>
    %c0_79 = arith.constant 0 : index
    %208 = arith.index_cast %c4_i32 : i32 to index
    %c0_80 = arith.constant 0 : index
    %c0_81 = arith.constant 0 : index
    %209 = vector.load %arg4[%c0_79, %208, %c0_80, %c0_81] : memref<2x8x16x32xbf16, #tpu.memory_space<vmem>>, vector<2x1x16x32xbf16>
    tpu.vector_store %arg4[%c0_79, %208, %c0_80, %c0_81], %207 {strides = array<i32>} : memref<2x8x16x32xbf16, #tpu.memory_space<vmem>>, vector<2x1x16x32xbf16>,
    %c5_i32 = arith.constant 5 : i32
    %c0_82 = arith.constant 0 : index
    %c0_83 = arith.constant 0 : index
    %210 = vector.load %arg6[%c0_82, %c0_83] : memref<32x96xbf16, #tpu.memory_space<vmem>>, vector<32x96xbf16>
    %c0_84 = arith.constant 0 : index
    %211 = arith.index_cast %c5_i32 : i32 to index
    %c0_85 = arith.constant 0 : index
    %c0_86 = arith.constant 0 : index
    %212 = vector.load %arg2[%c0_84, %211, %c0_85, %c0_86] : memref<2x8x16x128xbf16, #tpu.memory_space<vmem>>, vector<2x1x16x128xbf16>
    %213 = vector.shape_cast %212 : vector<2x1x16x128xbf16> to vector<32x128xbf16>
    %214 = arith.extf %213 : vector<32x128xbf16> to vector<32x128xf32>
    %cst_87 = arith.constant dense<0.000000e+00> : vector<32x128xf32>
    %215 = tpu.matmul %210, %3, %cst_87 {dimension_numbers = #tpu.dot_dimension_numbers<[1], [0], [0], [1], [0, 0, 1, 1], [], []>} : vector<32x96xbf16>, vector<96x128xbf16>, vector<32x128xf32> -> vector<32x128xf32>
    %216 = arith.addf %214, %215 : vector<32x128xf32>
    %217 = math.tanh %216 : vector<32x128xf32>
    %218 = arith.negf %216 : vector<32x128xf32>
    %219 = math.exp %218 : vector<32x128xf32>
    %cst_88 = arith.constant 1.000000e+00 : f32
    %220 = vector.broadcast %cst_88 : f32 to vector<32x128xf32>
    %221 = arith.addf %220, %219 : vector<32x128xf32>
    %222 = arith.divf %220, %221 : vector<32x128xf32>
    %223 = arith.select %9, %217, %222 : vector<32x128xi1>, vector<32x128xf32>
    %224 = vector.extract_strided_slice %223 {offsets = [0, 0], sizes = [32, 32], strides = [1, 1]} : vector<32x128xf32> to vector<32x32xf32>
    %225 = vector.extract_strided_slice %223 {offsets = [0, 32], sizes = [32, 32], strides = [1, 1]} : vector<32x128xf32> to vector<32x32xf32>
    %226 = vector.extract_strided_slice %223 {offsets = [0, 64], sizes = [32, 32], strides = [1, 1]} : vector<32x128xf32> to vector<32x32xf32>
    %227 = vector.extract_strided_slice %223 {offsets = [0, 96], sizes = [32, 32], strides = [1, 1]} : vector<32x128xf32> to vector<32x32xf32>
    %c0_89 = arith.constant 0 : index
    %c0_90 = arith.constant 0 : index
    %228 = vector.load %arg7[%c0_89, %c0_90] : memref<32x32xf32, #tpu.memory_space<vmem>>, vector<32x32xf32>
    %229 = arith.mulf %225, %228 : vector<32x32xf32>
    %230 = arith.mulf %224, %226 : vector<32x32xf32>
    %231 = arith.addf %229, %230 : vector<32x32xf32>
    %232 = math.tanh %231 : vector<32x32xf32>
    %233 = arith.mulf %227, %232 : vector<32x32xf32>
    %c0_91 = arith.constant 0 : index
    %c0_92 = arith.constant 0 : index
    %234 = vector.load %arg7[%c0_91, %c0_92] : memref<32x32xf32, #tpu.memory_space<vmem>>, vector<32x32xf32>
    tpu.vector_store %arg7[%c0_91, %c0_92], %231 {strides = array<i32>} : memref<32x32xf32, #tpu.memory_space<vmem>>, vector<32x32xf32>,
    %235 = vector.shape_cast %233 : vector<32x32xf32> to vector<2x16x32xf32>
    %236 = vector.extract_strided_slice %235 {offsets = [0, 0, 0], sizes = [2, 1, 32], strides = [1, 1, 1]} : vector<2x16x32xf32> to vector<2x1x32xf32>
    %237 = vector.extract_strided_slice %235 {offsets = [0, 0, 0], sizes = [2, 15, 32], strides = [1, 1, 1]} : vector<2x16x32xf32> to vector<2x15x32xf32>
    %238 = tpu.concatenate %236, %237 in 1 : vector<2x1x32xf32>, vector<2x15x32xf32> -> vector<2x16x32xf32>
    %239 = vector.extract_strided_slice %235 {offsets = [0, 15, 0], sizes = [2, 1, 32], strides = [1, 1, 1]} : vector<2x16x32xf32> to vector<2x1x32xf32>
    %240 = vector.extract_strided_slice %235 {offsets = [0, 1, 0], sizes = [2, 15, 32], strides = [1, 1, 1]} : vector<2x16x32xf32> to vector<2x15x32xf32>
    %241 = tpu.concatenate %240, %239 in 1 : vector<2x15x32xf32>, vector<2x1x32xf32> -> vector<2x16x32xf32>
    %242 = tpu.concatenate %238, %235, %241 in 2 : vector<2x16x32xf32>, vector<2x16x32xf32>, vector<2x16x32xf32> -> vector<2x16x96xf32>
    %243 = vector.shape_cast %242 : vector<2x16x96xf32> to vector<32x96xf32>
    %244 = arith.truncf %243 : vector<32x96xf32> to vector<32x96xbf16>
    %c0_93 = arith.constant 0 : index
    %c0_94 = arith.constant 0 : index
    %245 = vector.load %arg6[%c0_93, %c0_94] : memref<32x96xbf16, #tpu.memory_space<vmem>>, vector<32x96xbf16>
    tpu.vector_store %arg6[%c0_93, %c0_94], %244 {strides = array<i32>} : memref<32x96xbf16, #tpu.memory_space<vmem>>, vector<32x96xbf16>,
    %246 = vector.shape_cast %235 : vector<2x16x32xf32> to vector<2x1x16x32xf32>
    %247 = arith.truncf %246 : vector<2x1x16x32xf32> to vector<2x1x16x32xbf16>
    %c0_95 = arith.constant 0 : index
    %248 = arith.index_cast %c5_i32 : i32 to index
    %c0_96 = arith.constant 0 : index
    %c0_97 = arith.constant 0 : index
    %249 = vector.load %arg4[%c0_95, %248, %c0_96, %c0_97] : memref<2x8x16x32xbf16, #tpu.memory_space<vmem>>, vector<2x1x16x32xbf16>
    tpu.vector_store %arg4[%c0_95, %248, %c0_96, %c0_97], %247 {strides = array<i32>} : memref<2x8x16x32xbf16, #tpu.memory_space<vmem>>, vector<2x1x16x32xbf16>,
    %c6_i32 = arith.constant 6 : i32
    %c0_98 = arith.constant 0 : index
    %c0_99 = arith.constant 0 : index
    %250 = vector.load %arg6[%c0_98, %c0_99] : memref<32x96xbf16, #tpu.memory_space<vmem>>, vector<32x96xbf16>
    %c0_100 = arith.constant 0 : index
    %251 = arith.index_cast %c6_i32 : i32 to index
    %c0_101 = arith.constant 0 : index
    %c0_102 = arith.constant 0 : index
    %252 = vector.load %arg2[%c0_100, %251, %c0_101, %c0_102] : memref<2x8x16x128xbf16, #tpu.memory_space<vmem>>, vector<2x1x16x128xbf16>
    %253 = vector.shape_cast %252 : vector<2x1x16x128xbf16> to vector<32x128xbf16>
    %254 = arith.extf %253 : vector<32x128xbf16> to vector<32x128xf32>
    %cst_103 = arith.constant dense<0.000000e+00> : vector<32x128xf32>
    %255 = tpu.matmul %250, %3, %cst_103 {dimension_numbers = #tpu.dot_dimension_numbers<[1], [0], [0], [1], [0, 0, 1, 1], [], []>} : vector<32x96xbf16>, vector<96x128xbf16>, vector<32x128xf32> -> vector<32x128xf32>
    %256 = arith.addf %254, %255 : vector<32x128xf32>
    %257 = math.tanh %256 : vector<32x128xf32>
    %258 = arith.negf %256 : vector<32x128xf32>
    %259 = math.exp %258 : vector<32x128xf32>
    %cst_104 = arith.constant 1.000000e+00 : f32
    %260 = vector.broadcast %cst_104 : f32 to vector<32x128xf32>
    %261 = arith.addf %260, %259 : vector<32x128xf32>
    %262 = arith.divf %260, %261 : vector<32x128xf32>
    %263 = arith.select %9, %257, %262 : vector<32x128xi1>, vector<32x128xf32>
    %264 = vector.extract_strided_slice %263 {offsets = [0, 0], sizes = [32, 32], strides = [1, 1]} : vector<32x128xf32> to vector<32x32xf32>
    %265 = vector.extract_strided_slice %263 {offsets = [0, 32], sizes = [32, 32], strides = [1, 1]} : vector<32x128xf32> to vector<32x32xf32>
    %266 = vector.extract_strided_slice %263 {offsets = [0, 64], sizes = [32, 32], strides = [1, 1]} : vector<32x128xf32> to vector<32x32xf32>
    %267 = vector.extract_strided_slice %263 {offsets = [0, 96], sizes = [32, 32], strides = [1, 1]} : vector<32x128xf32> to vector<32x32xf32>
    %c0_105 = arith.constant 0 : index
    %c0_106 = arith.constant 0 : index
    %268 = vector.load %arg7[%c0_105, %c0_106] : memref<32x32xf32, #tpu.memory_space<vmem>>, vector<32x32xf32>
    %269 = arith.mulf %265, %268 : vector<32x32xf32>
    %270 = arith.mulf %264, %266 : vector<32x32xf32>
    %271 = arith.addf %269, %270 : vector<32x32xf32>
    %272 = math.tanh %271 : vector<32x32xf32>
    %273 = arith.mulf %267, %272 : vector<32x32xf32>
    %c0_107 = arith.constant 0 : index
    %c0_108 = arith.constant 0 : index
    %274 = vector.load %arg7[%c0_107, %c0_108] : memref<32x32xf32, #tpu.memory_space<vmem>>, vector<32x32xf32>
    tpu.vector_store %arg7[%c0_107, %c0_108], %271 {strides = array<i32>} : memref<32x32xf32, #tpu.memory_space<vmem>>, vector<32x32xf32>,
    %275 = vector.shape_cast %273 : vector<32x32xf32> to vector<2x16x32xf32>
    %276 = vector.extract_strided_slice %275 {offsets = [0, 0, 0], sizes = [2, 1, 32], strides = [1, 1, 1]} : vector<2x16x32xf32> to vector<2x1x32xf32>
    %277 = vector.extract_strided_slice %275 {offsets = [0, 0, 0], sizes = [2, 15, 32], strides = [1, 1, 1]} : vector<2x16x32xf32> to vector<2x15x32xf32>
    %278 = tpu.concatenate %276, %277 in 1 : vector<2x1x32xf32>, vector<2x15x32xf32> -> vector<2x16x32xf32>
    %279 = vector.extract_strided_slice %275 {offsets = [0, 15, 0], sizes = [2, 1, 32], strides = [1, 1, 1]} : vector<2x16x32xf32> to vector<2x1x32xf32>
    %280 = vector.extract_strided_slice %275 {offsets = [0, 1, 0], sizes = [2, 15, 32], strides = [1, 1, 1]} : vector<2x16x32xf32> to vector<2x15x32xf32>
    %281 = tpu.concatenate %280, %279 in 1 : vector<2x15x32xf32>, vector<2x1x32xf32> -> vector<2x16x32xf32>
    %282 = tpu.concatenate %278, %275, %281 in 2 : vector<2x16x32xf32>, vector<2x16x32xf32>, vector<2x16x32xf32> -> vector<2x16x96xf32>
    %283 = vector.shape_cast %282 : vector<2x16x96xf32> to vector<32x96xf32>
    %284 = arith.truncf %283 : vector<32x96xf32> to vector<32x96xbf16>
    %c0_109 = arith.constant 0 : index
    %c0_110 = arith.constant 0 : index
    %285 = vector.load %arg6[%c0_109, %c0_110] : memref<32x96xbf16, #tpu.memory_space<vmem>>, vector<32x96xbf16>
    tpu.vector_store %arg6[%c0_109, %c0_110], %284 {strides = array<i32>} : memref<32x96xbf16, #tpu.memory_space<vmem>>, vector<32x96xbf16>,
    %286 = vector.shape_cast %275 : vector<2x16x32xf32> to vector<2x1x16x32xf32>
    %287 = arith.truncf %286 : vector<2x1x16x32xf32> to vector<2x1x16x32xbf16>
    %c0_111 = arith.constant 0 : index
    %288 = arith.index_cast %c6_i32 : i32 to index
    %c0_112 = arith.constant 0 : index
    %c0_113 = arith.constant 0 : index
    %289 = vector.load %arg4[%c0_111, %288, %c0_112, %c0_113] : memref<2x8x16x32xbf16, #tpu.memory_space<vmem>>, vector<2x1x16x32xbf16>
    tpu.vector_store %arg4[%c0_111, %288, %c0_112, %c0_113], %287 {strides = array<i32>} : memref<2x8x16x32xbf16, #tpu.memory_space<vmem>>, vector<2x1x16x32xbf16>,
    %c7_i32 = arith.constant 7 : i32
    %c0_114 = arith.constant 0 : index
    %c0_115 = arith.constant 0 : index
    %290 = vector.load %arg6[%c0_114, %c0_115] : memref<32x96xbf16, #tpu.memory_space<vmem>>, vector<32x96xbf16>
    %c0_116 = arith.constant 0 : index
    %291 = arith.index_cast %c7_i32 : i32 to index
    %c0_117 = arith.constant 0 : index
    %c0_118 = arith.constant 0 : index
    %292 = vector.load %arg2[%c0_116, %291, %c0_117, %c0_118] : memref<2x8x16x128xbf16, #tpu.memory_space<vmem>>, vector<2x1x16x128xbf16>
    %293 = vector.shape_cast %292 : vector<2x1x16x128xbf16> to vector<32x128xbf16>
    %294 = arith.extf %293 : vector<32x128xbf16> to vector<32x128xf32>
    %cst_119 = arith.constant dense<0.000000e+00> : vector<32x128xf32>
    %295 = tpu.matmul %290, %3, %cst_119 {dimension_numbers = #tpu.dot_dimension_numbers<[1], [0], [0], [1], [0, 0, 1, 1], [], []>} : vector<32x96xbf16>, vector<96x128xbf16>, vector<32x128xf32> -> vector<32x128xf32>
    %296 = arith.addf %294, %295 : vector<32x128xf32>
    %297 = math.tanh %296 : vector<32x128xf32>
    %298 = arith.negf %296 : vector<32x128xf32>
    %299 = math.exp %298 : vector<32x128xf32>
    %cst_120 = arith.constant 1.000000e+00 : f32
    %300 = vector.broadcast %cst_120 : f32 to vector<32x128xf32>
    %301 = arith.addf %300, %299 : vector<32x128xf32>
    %302 = arith.divf %300, %301 : vector<32x128xf32>
    %303 = arith.select %9, %297, %302 : vector<32x128xi1>, vector<32x128xf32>
    %304 = vector.extract_strided_slice %303 {offsets = [0, 0], sizes = [32, 32], strides = [1, 1]} : vector<32x128xf32> to vector<32x32xf32>
    %305 = vector.extract_strided_slice %303 {offsets = [0, 32], sizes = [32, 32], strides = [1, 1]} : vector<32x128xf32> to vector<32x32xf32>
    %306 = vector.extract_strided_slice %303 {offsets = [0, 64], sizes = [32, 32], strides = [1, 1]} : vector<32x128xf32> to vector<32x32xf32>
    %307 = vector.extract_strided_slice %303 {offsets = [0, 96], sizes = [32, 32], strides = [1, 1]} : vector<32x128xf32> to vector<32x32xf32>
    %c0_121 = arith.constant 0 : index
    %c0_122 = arith.constant 0 : index
    %308 = vector.load %arg7[%c0_121, %c0_122] : memref<32x32xf32, #tpu.memory_space<vmem>>, vector<32x32xf32>
    %309 = arith.mulf %305, %308 : vector<32x32xf32>
    %310 = arith.mulf %304, %306 : vector<32x32xf32>
    %311 = arith.addf %309, %310 : vector<32x32xf32>
    %312 = math.tanh %311 : vector<32x32xf32>
    %313 = arith.mulf %307, %312 : vector<32x32xf32>
    %c0_123 = arith.constant 0 : index
    %c0_124 = arith.constant 0 : index
    %314 = vector.load %arg7[%c0_123, %c0_124] : memref<32x32xf32, #tpu.memory_space<vmem>>, vector<32x32xf32>
    tpu.vector_store %arg7[%c0_123, %c0_124], %311 {strides = array<i32>} : memref<32x32xf32, #tpu.memory_space<vmem>>, vector<32x32xf32>,
    %315 = vector.shape_cast %313 : vector<32x32xf32> to vector<2x16x32xf32>
    %316 = vector.extract_strided_slice %315 {offsets = [0, 0, 0], sizes = [2, 1, 32], strides = [1, 1, 1]} : vector<2x16x32xf32> to vector<2x1x32xf32>
    %317 = vector.extract_strided_slice %315 {offsets = [0, 0, 0], sizes = [2, 15, 32], strides = [1, 1, 1]} : vector<2x16x32xf32> to vector<2x15x32xf32>
    %318 = tpu.concatenate %316, %317 in 1 : vector<2x1x32xf32>, vector<2x15x32xf32> -> vector<2x16x32xf32>
    %319 = vector.extract_strided_slice %315 {offsets = [0, 15, 0], sizes = [2, 1, 32], strides = [1, 1, 1]} : vector<2x16x32xf32> to vector<2x1x32xf32>
    %320 = vector.extract_strided_slice %315 {offsets = [0, 1, 0], sizes = [2, 15, 32], strides = [1, 1, 1]} : vector<2x16x32xf32> to vector<2x15x32xf32>
    %321 = tpu.concatenate %320, %319 in 1 : vector<2x15x32xf32>, vector<2x1x32xf32> -> vector<2x16x32xf32>
    %322 = tpu.concatenate %318, %315, %321 in 2 : vector<2x16x32xf32>, vector<2x16x32xf32>, vector<2x16x32xf32> -> vector<2x16x96xf32>
    %323 = vector.shape_cast %322 : vector<2x16x96xf32> to vector<32x96xf32>
    %324 = arith.truncf %323 : vector<32x96xf32> to vector<32x96xbf16>
    %c0_125 = arith.constant 0 : index
    %c0_126 = arith.constant 0 : index
    %325 = vector.load %arg6[%c0_125, %c0_126] : memref<32x96xbf16, #tpu.memory_space<vmem>>, vector<32x96xbf16>
    tpu.vector_store %arg6[%c0_125, %c0_126], %324 {strides = array<i32>} : memref<32x96xbf16, #tpu.memory_space<vmem>>, vector<32x96xbf16>,
    %326 = vector.shape_cast %315 : vector<2x16x32xf32> to vector<2x1x16x32xf32>
    %327 = arith.truncf %326 : vector<2x1x16x32xf32> to vector<2x1x16x32xbf16>
    %c0_127 = arith.constant 0 : index
    %328 = arith.index_cast %c7_i32 : i32 to index
    %c0_128 = arith.constant 0 : index
    %c0_129 = arith.constant 0 : index
    %329 = vector.load %arg4[%c0_127, %328, %c0_128, %c0_129] : memref<2x8x16x32xbf16, #tpu.memory_space<vmem>>, vector<2x1x16x32xbf16>
    tpu.vector_store %arg4[%c0_127, %328, %c0_128, %c0_129], %327 {strides = array<i32>} : memref<2x8x16x32xbf16, #tpu.memory_space<vmem>>, vector<2x1x16x32xbf16>,
    %c8_i32 = arith.constant 8 : i32
    %c0_i32_130 = arith.constant 0 : i32
    %330 = arith.cmpi eq, %arg1, %c0_i32_130 : i32
    %331 = arith.extui %330 : i1 to i32
    %c0_i32_131 = arith.constant 0 : i32
    %332 = arith.cmpi ne, %331, %c0_i32_131 : i32
    scf.if %332 {
      %c0_132 = arith.constant 0 : index
      %c0_133 = arith.constant 0 : index
      %333 = vector.load %arg7[%c0_132, %c0_133] : memref<32x32xf32, #tpu.memory_space<vmem>>, vector<32x32xf32>
      %c0_134 = arith.constant 0 : index
      %c0_135 = arith.constant 0 : index
      %334 = vector.load %arg5[%c0_134, %c0_135] : memref<32x32xf32, #tpu.memory_space<vmem>>, vector<32x32xf32>
      tpu.vector_store %arg5[%c0_134, %c0_135], %333 {strides = array<i32>} : memref<32x32xf32, #tpu.memory_space<vmem>>, vector<32x32xf32>,
    } else {
    }
    return
  }
  func.func @transform_0(%arg0: i32, %arg1: i32) -> (i32, i32, i32, i32) {
    %c0_i32 = arith.constant 0 : i32
    %c0_i32_0 = arith.constant 0 : i32
    %c0_i32_1 = arith.constant 0 : i32
    return %arg0, %arg1, %c0_i32, %c0_i32_0 : i32, i32, i32, i32
  }
  func.func @transform_1(%arg0: i32, %arg1: i32) -> (i32, i32) {
    %c0_i32 = arith.constant 0 : i32
    %c0_i32_0 = arith.constant 0 : i32
    %c0_i32_1 = arith.constant 0 : i32
    return %c0_i32, %c0_i32_0 : i32, i32
  }
  func.func @transform_2(%arg0: i32, %arg1: i32) -> (i32, i32, i32, i32) {
    %c0_i32 = arith.constant 0 : i32
    %c0_i32_0 = arith.constant 0 : i32
    %c0_i32_1 = arith.constant 0 : i32
    return %arg0, %arg1, %c0_i32, %c0_i32_0 : i32, i32, i32, i32
  }
  func.func @transform_3(%arg0: i32, %arg1: i32) -> (i32, i32) {
    %c0_i32 = arith.constant 0 : i32
    %c0_i32_0 = arith.constant 0 : i32
    return %arg0, %c0_i32 : i32, i32
  }
}

</mosaic_0001>

<llo_original>
// kernel: conv1d_lstm_forward.2
$region0: #{conv1d_lstm_forward.2}
  #allocation0 [shape = 'u32[]', space=smem, size = 0x4, offset = 0x4, fixed_abs, tag = 'smem constant byte address 0x4 - core index']
  #allocation1 [shape = 'u32[144,128]{1,0:T(1,128)}', space=vmem, size = 0x12000, scoped, tag = 'internal scratch']
  #allocation2 [shape = 'bf16[32,96]{1,0:T(8,128)(2,1)}', space=vmem, size = 0x2000, scoped, tag = 'scratch operand']
  #allocation3 [shape = 'f32[32,32]{1,0:T(8,128)}', space=vmem, size = 0x4000, scoped, tag = 'scratch operand']
  %s0 = inlined_call_operand.vmem [shape: bf16[2,8,16,128], index: 0, kind: input, shape index: {}]
  %s1 = inlined_call_operand.vmem [shape: bf16[96,128], index: 1, kind: input, shape index: {}]
  %s2 = inlined_call_operand.vmem [shape: bf16[2,8,16,32], index: 2, kind: output, shape index: {0}]
  %s3 = inlined_call_operand.hbm [shape: f32[32,32], index: 3, kind: output, shape index: {1}]
  %4 = xla_tuple %s2, %s3
  %s5 = sld [smem:[#allocation0]]
  $region34: #{conv1d_lstm_forward.2} parent=0
    _
  %s7 = ssub.s32 1, %s5
  %s8 = scalar_select 0, %s7, %s5
  $region1: #{conv1d_lstm_forward.2} parent=0
    #allocation4 [shape = 'u8[16384]{0}', space=vmem, size = 0x4000, scoped, tag = 'output window, operand 1, single buffered']
    #allocation5 [shape = 's32[1]{0}', space=sflag, size = 0x4, scoped, tag = 'scoped memory for conv1d_lstm_forward.2']
    %9 = vsyncpa [#allocation5], 0
    // Predicated region
    $region2: #{conv1d_lstm_forward.2} parent=1 // pred_check
      _
    $region3: #{conv1d_lstm_forward.2} parent=1 // pred_check_branch
      %11 = sbr.rel (0) target = $region5
    $region4: #{conv1d_lstm_forward.2} parent=1 // pred_region
      _
    $region5: #{conv1d_lstm_forward.2} parent=1 // pred_fallthru
      _
    // Predicated region
    $region6: #{conv1d_lstm_forward.2} parent=1 // pred_check
      _
    $region7: #{conv1d_lstm_forward.2} parent=1 // pred_check_branch
      %13 = sbr.rel (0) target = $region9
    $region8: #{conv1d_lstm_forward.2} parent=1 // pred_region
      _
    $region9: #{conv1d_lstm_forward.2} parent=1 // pred_fallthru
      _
    %p15 = scmp.eq.s32.totalorder 0, 0
    // Predicated region
    $region10: #{conv1d_lstm_forward.2} parent=1 // pred_check
      %p16 = pneg %p15
    $region11: #{conv1d_lstm_forward.2} parent=1 // pred_check_branch
      %18 = sbr.rel (%p16) target = $region13
    $region12: #{conv1d_lstm_forward.2} parent=1 // pred_region
      %vm19 = vcmask 781312
      %20 = vst.msk [vmem:[#allocation2] sm:$0xf] %vm19, 0
      %21 = vst.msk [vmem:[#allocation2 + $0x4] sm:$0xf] %vm19, 0
      %22 = vst.msk [vmem:[#allocation2 + $0x8] sm:$0xf] %vm19, 0
      %23 = vst.msk [vmem:[#allocation2 + $0xc] sm:$0xf] %vm19, 0
      %vm24 = vcmask 261120
      %25 = vst.msk [vmem:[#allocation3] sm:$0xff] %vm24, 0.0
      %26 = vst.msk [vmem:[#allocation3 + $0x8] sm:$0xff] %vm24, 0.0
      %27 = vst.msk [vmem:[#allocation3 + $0x10] sm:$0xff] %vm24, 0.0
      %28 = vst.msk [vmem:[#allocation3 + $0x18] sm:$0xff] %vm24, 0.0
    $region13: #{conv1d_lstm_forward.2} parent=1 // pred_fallthru
      _
    %v29 = vld [vmem:[%s1] sm:$0xf]
    %v30 = vld [vmem:[%s1 + $0x4] sm:$0xf]
    %v31 = vld [vmem:[%s1 + $0x8] sm:$0xf]
    %v32 = vld [vmem:[%s1 + $0xc] sm:$0xf]
    %v33 = vld [vmem:[%s1 + $0x10] sm:$0xf]
    %v34 = vld [vmem:[%s1 + $0x14] sm:$0xf]
    %v35 = vld [vmem:[%s1 + $0x18] sm:$0xf]
    %v36 = vld [vmem:[%s1 + $0x1c] sm:$0xf]
    %v37 = vld [vmem:[%s1 + $0x20] sm:$0xf]
    %v38 = vld [vmem:[%s1 + $0x24] sm:$0xf]
    %v39 = vld [vmem:[%s1 + $0x28] sm:$0xf]
    %v40 = vld [vmem:[%s1 + $0x2c] sm:$0xf]
    %v41 = vlaneseq
    %v42 = vand.u32 %v41, 127
    %vm43 = vcmp.ge.s32.totalorder %v42, 64
    %vm44 = vcmp.lt.s32.totalorder %v42, 96
    %vm45 = vmand %vm43, %vm44
    %v46 = vld [vmem:[#allocation2] sm:$0xf]
    %v47 = vld [vmem:[#allocation2 + $0x4] sm:$0xf]
    %v48 = vld [vmem:[#allocation2 + $0x8] sm:$0xf]
    %v49 = vld [vmem:[#allocation2 + $0xc] sm:$0xf]
    %v50 = vld [vmem:[%s0] sm:$0xf]
    %v51 = vld [vmem:[%s0 + $0x4] sm:$0xf]
    %v52 = vld [vmem:[%s0 + $0x40] sm:$0xf]
    %v53 = vld [vmem:[%s0 + $0x44] sm:$0xf]
    %v54 = vunpack.c.l.bf16 %v50
    %v55 = vunpack.c.l.bf16 %v51
    %v56 = vunpack.c.l.bf16 %v52
    %v57 = vunpack.c.l.bf16 %v53
    %v62 = vunpack.c.l.b16 %v46
    %v63 = vunpack.c.l.b16 %v47
    %v64 = vunpack.c.l.b16 %v48
    %v65 = vunpack.c.l.b16 %v49
    %v66 = vpack.c.b16 %v63, %v62
    %v67 = vpack.c.b16 %v65, %v64
    %v80 = vunpack.c.l.b16 %v29
    %v81 = vunpack.c.l.b16 %v30
    %v82 = vunpack.c.l.b16 %v31
    %v83 = vunpack.c.l.b16 %v32
    %v84 = vunpack.c.l.b16 %v33
    %v85 = vunpack.c.l.b16 %v34
    %v86 = vunpack.c.l.b16 %v35
    %v87 = vunpack.c.l.b16 %v36
    %v88 = vunpack.c.l.b16 %v37
    %v89 = vunpack.c.l.b16 %v38
    %v90 = vunpack.c.l.b16 %v39
    %v91 = vunpack.c.l.b16 %v40
    %v92 = vpack.c.b16 %v81, %v80
    %v93 = vpack.c.b16 %v83, %v82
    %v94 = vpack.c.b16 %v85, %v84
    %v95 = vpack.c.b16 %v87, %v86
    %v96 = vpack.c.b16 %v89, %v88
    %v97 = vpack.c.b16 %v91, %v90
    %vm104 = vcmask 785408
    %v106 = vsel %vm104, %v66, 0
    %v109 = vsel %vm104, %v67, 0
    %111 = vmatprep.subr.bf16.mxu0 0
    %112 = vmatpush1.bf16.msra.mxu0 0
    %113 = vmatprep.subr.bf16.mxu0 0
    %114 = vmatpush1.bf16.msra.mxu0 0
    %115 = vmatprep.subr.bf16.mxu0 0
    %116 = vmatpush1.bf16.msra.mxu0 %v97
    %117 = vmatprep.subr.bf16.mxu0 0
    %118 = vmatpush1.bf16.msra.mxu0 %v96
    %119 = vmatprep.subr.bf16.mxu0 0
    %120 = vmatpush1.bf16.msra.mxu0 %v95
    %121 = vmatprep.subr.bf16.mxu0 0
    %122 = vmatpush1.bf16.msra.mxu0 %v94
    %123 = vmatprep.subr.bf16.mxu0 0
    %124 = vmatpush1.bf16.msra.mxu0 %v93
    %125 = vmatprep.subr.bf16.mxu0 0
    %126 = vmatpush1.bf16.msra.mxu0 %v92
    %127 = vmatprep.subr.bf16.mxu0 0
    %128 = vmatpush2.bf16.msra.mxu0 0
    %129 = vmatprep.subr.bf16.mxu0 0
    %130 = vmatpush2.bf16.msra.mxu0 0
    %131 = vmatprep.subr.bf16.mxu0 0
    %132 = vmatpush2.bf16.msra.mxu0 0
    %133 = vmatprep.subr.bf16.mxu0 0
    %134 = vmatpush2.bf16.msra.mxu0 0
    %135 = vmatprep.subr.bf16.mxu0 0
    %136 = vmatpush2.bf16.msra.mxu0 0
    %137 = vmatprep.subr.bf16.mxu0 0
    %138 = vmatpush2.bf16.msra.mxu0 0
    %139 = vmatprep.subr.bf16.mxu0 0
    %140 = vmatpush2.bf16.msra.mxu0 0
    %141 = vmatprep.subr.bf16.mxu0 0
    %142 = vmatpush2.bf16.msra.mxu0 0
    %143 = vmatprep.mubr.bf16.mxu0 0
    %144 = vmatmul.mubr.bf16.gmra.mxu0 %v106
    %v145 = vpop.f32.mrf.mxu0
    %v146 = vadd.f32 0.0, %v145
    %v147 = vpop.f32.mrf.mxu0
    %v148 = vpop.f32.mrf.mxu0
    %v149 = vadd.f32 0.0, %v148
    %v150 = vpop.f32.mrf.mxu0
    %151 = vmatprep.mubr.bf16.mxu0 0
    %152 = vmatmul.mubr.bf16.gmra.mxu0 %v109
    %v153 = vpop.f32.mrf.mxu0
    %v154 = vadd.f32 0.0, %v153
    %v155 = vpop.f32.mrf.mxu0
    %v156 = vpop.f32.mrf.mxu0
    %v157 = vadd.f32 0.0, %v156
    %v158 = vpop.f32.mrf.mxu0
    %159 = vdwg.mxu0
    %v160 = vadd.f32 %v54, %v146
    %v161 = vadd.f32 %v55, %v149
    %v162 = vadd.f32 %v56, %v154
    %v163 = vadd.f32 %v57, %v157
    %v164 = vtanh.pop %v160
    %v165 = vtanh.pop %v161
    %v166 = vtanh.pop %v162
    %v167 = vtanh.pop %v163
    %v168 = vxor.u32 %v160, 2147483648
    %v169 = vxor.u32 %v161, 2147483648
    %v170 = vxor.u32 %v162, 2147483648
    %v171 = vxor.u32 %v163, 2147483648
    %v172 = vmul.f32 %v168, 1.442695
    %v173 = vpow.pop %v172
    %v174 = vmul.f32 %v169, 1.442695
    %v175 = vpow.pop %v174
    %v176 = vmul.f32 %v170, 1.442695
    %v177 = vpow.pop %v176
    %v178 = vmul.f32 %v171, 1.442695
    %v179 = vpow.pop %v178
    %v180 = vadd.f32 %v173, 1.0
    %v181 = vadd.f32 %v175, 1.0
    %v182 = vadd.f32 %v177, 1.0
    %v183 = vadd.f32 %v179, 1.0
    %v184 = vrcp.pop %v180
    %v185 = vmul.f32 1.0, %v184
    %v186 = vrcp.pop %v181
    %v187 = vmul.f32 1.0, %v186
    %v188 = vrcp.pop %v182
    %v189 = vmul.f32 1.0, %v188
    %v190 = vrcp.pop %v183
    %v191 = vmul.f32 1.0, %v190
    %v192 = vsel %vm45, %v164, %v185
    %v193 = vsel %vm45, %v165, %v187
    %v194 = vsel %vm45, %v166, %v189
    %v195 = vsel %vm45, %v167, %v191
    %v196 = vld [vmem:[#allocation3] sm:$0xff]
    %v197 = vld [vmem:[#allocation3 + $0x8] sm:$0xff]
    %v198 = vld [vmem:[#allocation3 + $0x10] sm:$0xff]
    %v199 = vld [vmem:[#allocation3 + $0x18] sm:$0xff]
    %204 = vrot.lane.b32.xlu0 %v196, 32
    %v205 = vpop.permute.xlu0 %204
    %206 = vrot.lane.b32.xlu0 %v197, 32
    %v207 = vpop.permute.xlu0 %206
    %208 = vrot.lane.b32.xlu0 %v198, 32
    %v209 = vpop.permute.xlu0 %208
    %210 = vrot.lane.b32.xlu0 %v199, 32
    %v211 = vpop.permute.xlu0 %210
    %v216 = vmul.f32 %v192, %v205
    %v217 = vmul.f32 %v193, %v207
    %v218 = vmul.f32 %v194, %v209
    %v219 = vmul.f32 %v195, %v211
    %224 = vrot.lane.b32.xlu0 %v192, 64
    %v225 = vpop.permute.xlu0 %224
    %226 = vrot.lane.b32.xlu0 %v193, 64
    %v227 = vpop.permute.xlu0 %226
    %228 = vrot.lane.b32.xlu0 %v194, 64
    %v229 = vpop.permute.xlu0 %228
    %230 = vrot.lane.b32.xlu0 %v195, 64
    %v231 = vpop.permute.xlu0 %230
    %v236 = vmul.f32 %v192, %v225
    %v237 = vmul.f32 %v193, %v227
    %v238 = vmul.f32 %v194, %v229
    %v239 = vmul.f32 %v195, %v231
    %244 = vrot.lane.b32.xlu0 %v236, 32
    %v245 = vpop.permute.xlu0 %244
    %246 = vrot.lane.b32.xlu0 %v237, 32
    %v247 = vpop.permute.xlu0 %246
    %248 = vrot.lane.b32.xlu0 %v238, 32
    %v249 = vpop.permute.xlu0 %248
    %250 = vrot.lane.b32.xlu0 %v239, 32
    %v251 = vpop.permute.xlu0 %250
    %v256 = vadd.f32 %v216, %v245
    %v257 = vadd.f32 %v217, %v247
    %v258 = vadd.f32 %v218, %v249
    %v259 = vadd.f32 %v219, %v251
    %v260 = vtanh.pop %v256
    %v261 = vtanh.pop %v257
    %v262 = vtanh.pop %v258
    %v263 = vtanh.pop %v259
    %268 = vrot.lane.b32.xlu0 %v260, 64
    %v269 = vpop.permute.xlu0 %268
    %270 = vrot.lane.b32.xlu0 %v261, 64
    %v271 = vpop.permute.xlu0 %270
    %272 = vrot.lane.b32.xlu0 %v262, 64
    %v273 = vpop.permute.xlu0 %272
    %274 = vrot.lane.b32.xlu0 %v263, 64
    %v275 = vpop.permute.xlu0 %274
    %v280 = vmul.f32 %v192, %v269
    %v281 = vmul.f32 %v193, %v271
    %v282 = vmul.f32 %v194, %v273
    %v283 = vmul.f32 %v195, %v275
    %288 = vrot.lane.b32.xlu0 %v256, 96
    %v289 = vpop.permute.xlu0 %288
    %290 = vrot.lane.b32.xlu0 %v257, 96
    %v291 = vpop.permute.xlu0 %290
    %292 = vrot.lane.b32.xlu0 %v258, 96
    %v293 = vpop.permute.xlu0 %292
    %294 = vrot.lane.b32.xlu0 %v259, 96
    %v295 = vpop.permute.xlu0 %294
    %vm300 = vcmask 261120
    %301 = vst.msk [vmem:[#allocation3] sm:$0xff] %vm300, %v289
    %302 = vst.msk [vmem:[#allocation3 + $0x8] sm:$0xff] %vm300, %v291
    %303 = vst.msk [vmem:[#allocation3 + $0x10] sm:$0xff] %vm300, %v293
    %304 = vst.msk [vmem:[#allocation3 + $0x18] sm:$0xff] %vm300, %v295
    %vm309 = vcmask 1040384
    %v310 = vrot.slane %v280, 7
    %v311 = vrot.slane %v281, 7
    %v312 = vsel %vm309, %v310, %v311
    %v313 = vrot.slane %v282, 7
    %v314 = vrot.slane %v283, 7
    %v315 = vsel %vm309, %v313, %v314
    %v318 = vsel %vm309, %v280, %v310
    %v319 = vsel %vm309, %v282, %v313
    %vm320 = vcmask 1046528
    %v321 = vrot.slane %v280, 1
    %v322 = vrot.slane %v281, 1
    %v323 = vsel %vm320, %v321, %v322
    %v324 = vrot.slane %v282, 1
    %v325 = vrot.slane %v283, 1
    %v326 = vsel %vm320, %v324, %v325
    %v329 = vsel %vm320, %v322, %v281
    %v330 = vsel %vm320, %v325, %v283
    %333 = vrot.lane.b32.xlu0 %v318, 32
    %v334 = vpop.permute.xlu0 %333
    %335 = vrot.lane.b32.xlu0 %v312, 32
    %v336 = vpop.permute.xlu0 %335
    %337 = vrot.lane.b32.xlu0 %v319, 32
    %v338 = vpop.permute.xlu0 %337
    %339 = vrot.lane.b32.xlu0 %v315, 32
    %v340 = vpop.permute.xlu0 %339
    %345 = vrot.lane.b32.xlu0 %v280, 64
    %v346 = vpop.permute.xlu0 %345
    %347 = vrot.lane.b32.xlu0 %v281, 64
    %v348 = vpop.permute.xlu0 %347
    %349 = vrot.lane.b32.xlu0 %v282, 64
    %v350 = vpop.permute.xlu0 %349
    %351 = vrot.lane.b32.xlu0 %v283, 64
    %v352 = vpop.permute.xlu0 %351
    %359 = vrot.lane.b32.xlu0 %v323, 96
    %v360 = vpop.permute.xlu0 %359
    %361 = vrot.lane.b32.xlu0 %v329, 96
    %v362 = vpop.permute.xlu0 %361
    %363 = vrot.lane.b32.xlu0 %v326, 96
    %v364 = vpop.permute.xlu0 %363
    %365 = vrot.lane.b32.xlu0 %v330, 96
    %v366 = vpop.permute.xlu0 %365
    %v371 = vsel %vm300, %v334, %v346
    %v372 = vsel %vm300, %v336, %v348
    %v373 = vsel %vm300, %v338, %v350
    %v374 = vsel %vm300, %v340, %v352
    %vm375 = vcmask 523264
    %v376 = vsel %vm375, %v371, %v360
    %v377 = vsel %vm375, %v372, %v362
    %v378 = vsel %vm375, %v373, %v364
    %v379 = vsel %vm375, %v374, %v366
    %v380 = vpack.c.bf16 %v377, %v376
    %v381 = vpack.c.bf16 %v379, %v378
    %v384 = vunpack.c.l.b16 %v380
    %v385 = vunpack.c.h.b16 %v380
    %v386 = vunpack.c.l.b16 %v381
    %v387 = vunpack.c.h.b16 %v381
    %v388 = vpack.c.b16 %v384, %v384
    %v389 = vpack.c.b16 %v385, %v385
    %v390 = vpack.c.b16 %v386, %v386
    %v391 = vpack.c.b16 %v387, %v387
    %vm396 = vcmask 781312
    %397 = vst.msk [vmem:[#allocation2] sm:$0xf] %vm396, %v388
    %398 = vst.msk [vmem:[#allocation2 + $0x4] sm:$0xf] %vm396, %v389
    %399 = vst.msk [vmem:[#allocation2 + $0x8] sm:$0xf] %vm396, %v390
    %400 = vst.msk [vmem:[#allocation2 + $0xc] sm:$0xf] %vm396, %v391
    %v401 = vpack.c.bf16 %v281, %v280
    %v402 = vpack.c.bf16 %v283, %v282
    %v405 = vunpack.c.l.b16 %v401
    %v406 = vunpack.c.h.b16 %v401
    %v407 = vunpack.c.l.b16 %v402
    %v408 = vunpack.c.h.b16 %v402
    %v409 = vpack.c.b16 %v405, %v405
    %v410 = vpack.c.b16 %v406, %v406
    %v411 = vpack.c.b16 %v407, %v407
    %v412 = vpack.c.b16 %v408, %v408
    %413 = vrot.lane.b32.xlu0 %v409, 32
    %v414 = vpop.permute.xlu0 %413
    %415 = vrot.lane.b32.xlu0 %v410, 32
    %v416 = vpop.permute.xlu0 %415
    %417 = vrot.lane.b32.xlu0 %v411, 32
    %v418 = vpop.permute.xlu0 %417
    %419 = vrot.lane.b32.xlu0 %v412, 32
    %v420 = vpop.permute.xlu0 %419
    %vm425 = vcmask 257024
    %426 = vst.msk [vmem:[%s2] sm:$0xf] %vm425, %v414
    %427 = vst.msk [vmem:[%s2 + $0x4] sm:$0xf] %vm425, %v416
    %428 = vst.msk [vmem:[%s2 + $0x40] sm:$0xf] %vm425, %v418
    %429 = vst.msk [vmem:[%s2 + $0x44] sm:$0xf] %vm425, %v420
    %v430 = vld [vmem:[#allocation2] sm:$0xf]
    %v431 = vld [vmem:[#allocation2 + $0x4] sm:$0xf]
    %v432 = vld [vmem:[#allocation2 + $0x8] sm:$0xf]
    %v433 = vld [vmem:[#allocation2 + $0xc] sm:$0xf]
    %s434 = scalar_lea.vmem %s0, 8
    %v435 = vld [vmem:[%s434] sm:$0xf]
    %v436 = vld [vmem:[%s434 + $0x4] sm:$0xf]
    %v437 = vld [vmem:[%s434 + $0x40] sm:$0xf]
    %v438 = vld [vmem:[%s434 + $0x44] sm:$0xf]
    %v439 = vunpack.c.l.bf16 %v435
    %v440 = vunpack.c.l.bf16 %v436
    %v441 = vunpack.c.l.bf16 %v437
    %v442 = vunpack.c.l.bf16 %v438
    %v447 = vunpack.c.l.b16 %v430
    %v448 = vunpack.c.l.b16 %v431
    %v449 = vunpack.c.l.b16 %v432
    %v450 = vunpack.c.l.b16 %v433
    %v451 = vpack.c.b16 %v448, %v447
    %v452 = vpack.c.b16 %v450, %v449
    %v454 = vsel %vm104, %v451, 0
    %v457 = vsel %vm104, %v452, 0
    %459 = vmatprep.subr.bf16.mxu0 0
    %460 = vmatpush1.bf16.msra.mxu0 0
    %461 = vmatprep.subr.bf16.mxu0 0
    %462 = vmatpush1.bf16.msra.mxu0 0
    %463 = vmatprep.subr.bf16.mxu0 0
    %464 = vmatpush1.bf16.msra.mxu0 %v97
    %465 = vmatprep.subr.bf16.mxu0 0
    %466 = vmatpush1.bf16.msra.mxu0 %v96
    %467 = vmatprep.subr.bf16.mxu0 0
    %468 = vmatpush1.bf16.msra.mxu0 %v95
    %469 = vmatprep.subr.bf16.mxu0 0
    %470 = vmatpush1.bf16.msra.mxu0 %v94
    %471 = vmatprep.subr.bf16.mxu0 0
    %472 = vmatpush1.bf16.msra.mxu0 %v93
    %473 = vmatprep.subr.bf16.mxu0 0
    %474 = vmatpush1.bf16.msra.mxu0 %v92
    %475 = vmatprep.subr.bf16.mxu0 0
    %476 = vmatpush2.bf16.msra.mxu0 0
    %477 = vmatprep.subr.bf16.mxu0 0
    %478 = vmatpush2.bf16.msra.mxu0 0
    %479 = vmatprep.subr.bf16.mxu0 0
    %480 = vmatpush2.bf16.msra.mxu0 0
    %481 = vmatprep.subr.bf16.mxu0 0
    %482 = vmatpush2.bf16.msra.mxu0 0
    %483 = vmatprep.subr.bf16.mxu0 0
    %484 = vmatpush2.bf16.msra.mxu0 0
    %485 = vmatprep.subr.bf16.mxu0 0
    %486 = vmatpush2.bf16.msra.mxu0 0
    %487 = vmatprep.subr.bf16.mxu0 0
    %488 = vmatpush2.bf16.msra.mxu0 0
    %489 = vmatprep.subr.bf16.mxu0 0
    %490 = vmatpush2.bf16.msra.mxu0 0
    %491 = vmatprep.mubr.bf16.mxu0 0
    %492 = vmatmul.mubr.bf16.gmra.mxu0 %v454
    %v493 = vpop.f32.mrf.mxu0
    %v494 = vadd.f32 0.0, %v493
    %v495 = vpop.f32.mrf.mxu0
    %v496 = vpop.f32.mrf.mxu0
    %v497 = vadd.f32 0.0, %v496
    %v498 = vpop.f32.mrf.mxu0
    %499 = vmatprep.mubr.bf16.mxu0 0
    %500 = vmatmul.mubr.bf16.gmra.mxu0 %v457
    %v501 = vpop.f32.mrf.mxu0
    %v502 = vadd.f32 0.0, %v501
    %v503 = vpop.f32.mrf.mxu0
    %v504 = vpop.f32.mrf.mxu0
    %v505 = vadd.f32 0.0, %v504
    %v506 = vpop.f32.mrf.mxu0
    %507 = vdwg.mxu0
    %v508 = vadd.f32 %v439, %v494
    %v509 = vadd.f32 %v440, %v497
    %v510 = vadd.f32 %v441, %v502
    %v511 = vadd.f32 %v442, %v505
    %v512 = vtanh.pop %v508
    %v513 = vtanh.pop %v509
    %v514 = vtanh.pop %v510
    %v515 = vtanh.pop %v511
    %v516 = vxor.u32 %v508, 2147483648
    %v517 = vxor.u32 %v509, 2147483648
    %v518 = vxor.u32 %v510, 2147483648
    %v519 = vxor.u32 %v511, 2147483648
    %v520 = vmul.f32 %v516, 1.442695
    %v521 = vpow.pop %v520
    %v522 = vmul.f32 %v517, 1.442695
    %v523 = vpow.pop %v522
    %v524 = vmul.f32 %v518, 1.442695
    %v525 = vpow.pop %v524
    %v526 = vmul.f32 %v519, 1.442695
    %v527 = vpow.pop %v526
    %v528 = vadd.f32 %v521, 1.0
    %v529 = vadd.f32 %v523, 1.0
    %v530 = vadd.f32 %v525, 1.0
    %v531 = vadd.f32 %v527, 1.0
    %v532 = vrcp.pop %v528
    %v533 = vmul.f32 1.0, %v532
    %v534 = vrcp.pop %v529
    %v535 = vmul.f32 1.0, %v534
    %v536 = vrcp.pop %v530
    %v537 = vmul.f32 1.0, %v536
    %v538 = vrcp.pop %v531
    %v539 = vmul.f32 1.0, %v538
    %v540 = vsel %vm45, %v512, %v533
    %v541 = vsel %vm45, %v513, %v535
    %v542 = vsel %vm45, %v514, %v537
    %v543 = vsel %vm45, %v515, %v539
    %v544 = vld [vmem:[#allocation3] sm:$0xff]
    %v545 = vld [vmem:[#allocation3 + $0x8] sm:$0xff]
    %v546 = vld [vmem:[#allocation3 + $0x10] sm:$0xff]
    %v547 = vld [vmem:[#allocation3 + $0x18] sm:$0xff]
    %552 = vrot.lane.b32.xlu0 %v544, 32
    %v553 = vpop.permute.xlu0 %552
    %554 = vrot.lane.b32.xlu0 %v545, 32
    %v555 = vpop.permute.xlu0 %554
    %556 = vrot.lane.b32.xlu0 %v546, 32
    %v557 = vpop.permute.xlu0 %556
    %558 = vrot.lane.b32.xlu0 %v547, 32
    %v559 = vpop.permute.xlu0 %558
    %v564 = vmul.f32 %v540, %v553
    %v565 = vmul.f32 %v541, %v555
    %v566 = vmul.f32 %v542, %v557
    %v567 = vmul.f32 %v543, %v559
    %572 = vrot.lane.b32.xlu0 %v540, 64
    %v573 = vpop.permute.xlu0 %572
    %574 = vrot.lane.b32.xlu0 %v541, 64
    %v575 = vpop.permute.xlu0 %574
    %576 = vrot.lane.b32.xlu0 %v542, 64
    %v577 = vpop.permute.xlu0 %576
    %578 = vrot.lane.b32.xlu0 %v543, 64
    %v579 = vpop.permute.xlu0 %578
    %v584 = vmul.f32 %v540, %v573
    %v585 = vmul.f32 %v541, %v575
    %v586 = vmul.f32 %v542, %v577
    %v587 = vmul.f32 %v543, %v579
    %592 = vrot.lane.b32.xlu0 %v584, 32
    %v593 = vpop.permute.xlu0 %592
    %594 = vrot.lane.b32.xlu0 %v585, 32
    %v595 = vpop.permute.xlu0 %594
    %596 = vrot.lane.b32.xlu0 %v586, 32
    %v597 = vpop.permute.xlu0 %596
    %598 = vrot.lane.b32.xlu0 %v587, 32
    %v599 = vpop.permute.xlu0 %598
    %v604 = vadd.f32 %v564, %v593
    %v605 = vadd.f32 %v565, %v595
    %v606 = vadd.f32 %v566, %v597
    %v607 = vadd.f32 %v567, %v599
    %v608 = vtanh.pop %v604
    %v609 = vtanh.pop %v605
    %v610 = vtanh.pop %v606
    %v611 = vtanh.pop %v607
    %616 = vrot.lane.b32.xlu0 %v608, 64
    %v617 = vpop.permute.xlu0 %616
    %618 = vrot.lane.b32.xlu0 %v609, 64
    %v619 = vpop.permute.xlu0 %618
    %620 = vrot.lane.b32.xlu0 %v610, 64
    %v621 = vpop.permute.xlu0 %620
    %622 = vrot.lane.b32.xlu0 %v611, 64
    %v623 = vpop.permute.xlu0 %622
    %v628 = vmul.f32 %v540, %v617
    %v629 = vmul.f32 %v541, %v619
    %v630 = vmul.f32 %v542, %v621
    %v631 = vmul.f32 %v543, %v623
    %636 = vrot.lane.b32.xlu0 %v604, 96
    %v637 = vpop.permute.xlu0 %636
    %638 = vrot.lane.b32.xlu0 %v605, 96
    %v639 = vpop.permute.xlu0 %638
    %640 = vrot.lane.b32.xlu0 %v606, 96
    %v641 = vpop.permute.xlu0 %640
    %642 = vrot.lane.b32.xlu0 %v607, 96
    %v643 = vpop.permute.xlu0 %642
    %648 = vst.msk [vmem:[#allocation3] sm:$0xff] %vm300, %v637
    %649 = vst.msk [vmem:[#allocation3 + $0x8] sm:$0xff] %vm300, %v639
    %650 = vst.msk [vmem:[#allocation3 + $0x10] sm:$0xff] %vm300, %v641
    %651 = vst.msk [vmem:[#allocation3 + $0x18] sm:$0xff] %vm300, %v643
    %v656 = vrot.slane %v628, 7
    %v657 = vrot.slane %v629, 7
    %v658 = vsel %vm309, %v656, %v657
    %v659 = vrot.slane %v630, 7
    %v660 = vrot.slane %v631, 7
    %v661 = vsel %vm309, %v659, %v660
    %v664 = vsel %vm309, %v628, %v656
    %v665 = vsel %vm309, %v630, %v659
    %v666 = vrot.slane %v628, 1
    %v667 = vrot.slane %v629, 1
    %v668 = vsel %vm320, %v666, %v667
    %v669 = vrot.slane %v630, 1
    %v670 = vrot.slane %v631, 1
    %v671 = vsel %vm320, %v669, %v670
    %v674 = vsel %vm320, %v667, %v629
    %v675 = vsel %vm320, %v670, %v631
    %678 = vrot.lane.b32.xlu0 %v664, 32
    %v679 = vpop.permute.xlu0 %678
    %680 = vrot.lane.b32.xlu0 %v658, 32
    %v681 = vpop.permute.xlu0 %680
    %682 = vrot.lane.b32.xlu0 %v665, 32
    %v683 = vpop.permute.xlu0 %682
    %684 = vrot.lane.b32.xlu0 %v661, 32
    %v685 = vpop.permute.xlu0 %684
    %690 = vrot.lane.b32.xlu0 %v628, 64
    %v691 = vpop.permute.xlu0 %690
    %692 = vrot.lane.b32.xlu0 %v629, 64
    %v693 = vpop.permute.xlu0 %692
    %694 = vrot.lane.b32.xlu0 %v630, 64
    %v695 = vpop.permute.xlu0 %694
    %696 = vrot.lane.b32.xlu0 %v631, 64
    %v697 = vpop.permute.xlu0 %696
    %704 = vrot.lane.b32.xlu0 %v668, 96
    %v705 = vpop.permute.xlu0 %704
    %706 = vrot.lane.b32.xlu0 %v674, 96
    %v707 = vpop.permute.xlu0 %706
    %708 = vrot.lane.b32.xlu0 %v671, 96
    %v709 = vpop.permute.xlu0 %708
    %710 = vrot.lane.b32.xlu0 %v675, 96
    %v711 = vpop.permute.xlu0 %710
    %v716 = vsel %vm300, %v679, %v691
    %v717 = vsel %vm300, %v681, %v693
    %v718 = vsel %vm300, %v683, %v695
    %v719 = vsel %vm300, %v685, %v697
    %v720 = vsel %vm375, %v716, %v705
    %v721 = vsel %vm375, %v717, %v707
    %v722 = vsel %vm375, %v718, %v709
    %v723 = vsel %vm375, %v719, %v711
    %v724 = vpack.c.bf16 %v721, %v720
    %v725 = vpack.c.bf16 %v723, %v722
    %v728 = vunpack.c.l.b16 %v724
    %v729 = vunpack.c.h.b16 %v724
    %v730 = vunpack.c.l.b16 %v725
    %v731 = vunpack.c.h.b16 %v725
    %v732 = vpack.c.b16 %v728, %v728
    %v733 = vpack.c.b16 %v729, %v729
    %v734 = vpack.c.b16 %v730, %v730
    %v735 = vpack.c.b16 %v731, %v731
    %740 = vst.msk [vmem:[#allocation2] sm:$0xf] %vm396, %v732
    %741 = vst.msk [vmem:[#allocation2 + $0x4] sm:$0xf] %vm396, %v733
    %742 = vst.msk [vmem:[#allocation2 + $0x8] sm:$0xf] %vm396, %v734
    %743 = vst.msk [vmem:[#allocation2 + $0xc] sm:$0xf] %vm396, %v735
    %v744 = vpack.c.bf16 %v629, %v628
    %v745 = vpack.c.bf16 %v631, %v630
    %v748 = vunpack.c.l.b16 %v744
    %v749 = vunpack.c.h.b16 %v744
    %v750 = vunpack.c.l.b16 %v745
    %v751 = vunpack.c.h.b16 %v745
    %v752 = vpack.c.b16 %v748, %v748
    %v753 = vpack.c.b16 %v749, %v749
    %v754 = vpack.c.b16 %v750, %v750
    %v755 = vpack.c.b16 %v751, %v751
    %756 = vrot.lane.b32.xlu0 %v752, 32
    %v757 = vpop.permute.xlu0 %756
    %758 = vrot.lane.b32.xlu0 %v753, 32
    %v759 = vpop.permute.xlu0 %758
    %760 = vrot.lane.b32.xlu0 %v754, 32
    %v761 = vpop.permute.xlu0 %760
    %762 = vrot.lane.b32.xlu0 %v755, 32
    %v763 = vpop.permute.xlu0 %762
    %s768 = scalar_lea.vmem %s2, 8
    %769 = vst.msk [vmem:[%s768] sm:$0xf] %vm425, %v757
    %770 = vst.msk [vmem:[%s768 + $0x4] sm:$0xf] %vm425, %v759
    %771 = vst.msk [vmem:[%s768 + $0x40] sm:$0xf] %vm425, %v761
    %772 = vst.msk [vmem:[%s768 + $0x44] sm:$0xf] %vm425, %v763
    %v773 = vld [vmem:[#allocation2] sm:$0xf]
    %v774 = vld [vmem:[#allocation2 + $0x4] sm:$0xf]
    %v775 = vld [vmem:[#allocation2 + $0x8] sm:$0xf]
    %v776 = vld [vmem:[#allocation2 + $0xc] sm:$0xf]
    %s777 = scalar_lea.vmem %s0, 16
    %v778 = vld [vmem:[%s777] sm:$0xf]
    %v779 = vld [vmem:[%s777 + $0x4] sm:$0xf]
    %v780 = vld [vmem:[%s777 + $0x40] sm:$0xf]
    %v781 = vld [vmem:[%s777 + $0x44] sm:$0xf]
    %v782 = vunpack.c.l.bf16 %v778
    %v783 = vunpack.c.l.bf16 %v779
    %v784 = vunpack.c.l.bf16 %v780
    %v785 = vunpack.c.l.bf16 %v781
    %v790 = vunpack.c.l.b16 %v773
    %v791 = vunpack.c.l.b16 %v774
    %v792 = vunpack.c.l.b16 %v775
    %v793 = vunpack.c.l.b16 %v776
    %v794 = vpack.c.b16 %v791, %v790
    %v795 = vpack.c.b16 %v793, %v792
    %v797 = vsel %vm104, %v794, 0
    %v800 = vsel %vm104, %v795, 0
    %802 = vmatprep.subr.bf16.mxu0 0
    %803 = vmatpush1.bf16.msra.mxu0 0
    %804 = vmatprep.subr.bf16.mxu0 0
    %805 = vmatpush1.bf16.msra.mxu0 0
    %806 = vmatprep.subr.bf16.mxu0 0
    %807 = vmatpush1.bf16.msra.mxu0 %v97
    %808 = vmatprep.subr.bf16.mxu0 0
    %809 = vmatpush1.bf16.msra.mxu0 %v96
    %810 = vmatprep.subr.bf16.mxu0 0
    %811 = vmatpush1.bf16.msra.mxu0 %v95
    %812 = vmatprep.subr.bf16.mxu0 0
    %813 = vmatpush1.bf16.msra.mxu0 %v94
    %814 = vmatprep.subr.bf16.mxu0 0
    %815 = vmatpush1.bf16.msra.mxu0 %v93
    %816 = vmatprep.subr.bf16.mxu0 0
    %817 = vmatpush1.bf16.msra.mxu0 %v92
    %818 = vmatprep.subr.bf16.mxu0 0
    %819 = vmatpush2.bf16.msra.mxu0 0
    %820 = vmatprep.subr.bf16.mxu0 0
    %821 = vmatpush2.bf16.msra.mxu0 0
    %822 = vmatprep.subr.bf16.mxu0 0
    %823 = vmatpush2.bf16.msra.mxu0 0
    %824 = vmatprep.subr.bf16.mxu0 0
    %825 = vmatpush2.bf16.msra.mxu0 0
    %826 = vmatprep.subr.bf16.mxu0 0
    %827 = vmatpush2.bf16.msra.mxu0 0
    %828 = vmatprep.subr.bf16.mxu0 0
    %829 = vmatpush2.bf16.msra.mxu0 0
    %830 = vmatprep.subr.bf16.mxu0 0
    %831 = vmatpush2.bf16.msra.mxu0 0
    %832 = vmatprep.subr.bf16.mxu0 0
    %833 = vmatpush2.bf16.msra.mxu0 0
    %834 = vmatprep.mubr.bf16.mxu0 0
    %835 = vmatmul.mubr.bf16.gmra.mxu0 %v797
    %v836 = vpop.f32.mrf.mxu0
    %v837 = vadd.f32 0.0, %v836
    %v838 = vpop.f32.mrf.mxu0
    %v839 = vpop.f32.mrf.mxu0
    %v840 = vadd.f32 0.0, %v839
    %v841 = vpop.f32.mrf.mxu0
    %842 = vmatprep.mubr.bf16.mxu0 0
    %843 = vmatmul.mubr.bf16.gmra.mxu0 %v800
    %v844 = vpop.f32.mrf.mxu0
    %v845 = vadd.f32 0.0, %v844
    %v846 = vpop.f32.mrf.mxu0
    %v847 = vpop.f32.mrf.mxu0
    %v848 = vadd.f32 0.0, %v847
    %v849 = vpop.f32.mrf.mxu0
    %850 = vdwg.mxu0
    %v851 = vadd.f32 %v782, %v837
    %v852 = vadd.f32 %v783, %v840
    %v853 = vadd.f32 %v784, %v845
    %v854 = vadd.f32 %v785, %v848
    %v855 = vtanh.pop %v851
    %v856 = vtanh.pop %v852
    %v857 = vtanh.pop %v853
    %v858 = vtanh.pop %v854
    %v859 = vxor.u32 %v851, 2147483648
    %v860 = vxor.u32 %v852, 2147483648
    %v861 = vxor.u32 %v853, 2147483648
    %v862 = vxor.u32 %v854, 2147483648
    %v863 = vmul.f32 %v859, 1.442695
    %v864 = vpow.pop %v863
    %v865 = vmul.f32 %v860, 1.442695
    %v866 = vpow.pop %v865
    %v867 = vmul.f32 %v861, 1.442695
    %v868 = vpow.pop %v867
    %v869 = vmul.f32 %v862, 1.442695
    %v870 = vpow.pop %v869
    %v871 = vadd.f32 %v864, 1.0
    %v872 = vadd.f32 %v866, 1.0
    %v873 = vadd.f32 %v868, 1.0
    %v874 = vadd.f32 %v870, 1.0
    %v875 = vrcp.pop %v871
    %v876 = vmul.f32 1.0, %v875
    %v877 = vrcp.pop %v872
    %v878 = vmul.f32 1.0, %v877
    %v879 = vrcp.pop %v873
    %v880 = vmul.f32 1.0, %v879
    %v881 = vrcp.pop %v874
    %v882 = vmul.f32 1.0, %v881
    %v883 = vsel %vm45, %v855, %v876
    %v884 = vsel %vm45, %v856, %v878
    %v885 = vsel %vm45, %v857, %v880
    %v886 = vsel %vm45, %v858, %v882
    %v887 = vld [vmem:[#allocation3] sm:$0xff]
    %v888 = vld [vmem:[#allocation3 + $0x8] sm:$0xff]
    %v889 = vld [vmem:[#allocation3 + $0x10] sm:$0xff]
    %v890 = vld [vmem:[#allocation3 + $0x18] sm:$0xff]
    %895 = vrot.lane.b32.xlu0 %v887, 32
    %v896 = vpop.permute.xlu0 %895
    %897 = vrot.lane.b32.xlu0 %v888, 32
    %v898 = vpop.permute.xlu0 %897
    %899 = vrot.lane.b32.xlu0 %v889, 32
    %v900 = vpop.permute.xlu0 %899
    %901 = vrot.lane.b32.xlu0 %v890, 32
    %v902 = vpop.permute.xlu0 %901
    %v907 = vmul.f32 %v883, %v896
    %v908 = vmul.f32 %v884, %v898
    %v909 = vmul.f32 %v885, %v900
    %v910 = vmul.f32 %v886, %v902
    %915 = vrot.lane.b32.xlu0 %v883, 64
    %v916 = vpop.permute.xlu0 %915
    %917 = vrot.lane.b32.xlu0 %v884, 64
    %v918 = vpop.permute.xlu0 %917
    %919 = vrot.lane.b32.xlu0 %v885, 64
    %v920 = vpop.permute.xlu0 %919
    %921 = vrot.lane.b32.xlu0 %v886, 64
    %v922 = vpop.permute.xlu0 %921
    %v927 = vmul.f32 %v883, %v916
    %v928 = vmul.f32 %v884, %v918
    %v929 = vmul.f32 %v885, %v920
    %v930 = vmul.f32 %v886, %v922
    %935 = vrot.lane.b32.xlu0 %v927, 32
    %v936 = vpop.permute.xlu0 %935
    %937 = vrot.lane.b32.xlu0 %v928, 32
    %v938 = vpop.permute.xlu0 %937
    %939 = vrot.lane.b32.xlu0 %v929, 32
    %v940 = vpop.permute.xlu0 %939
    %941 = vrot.lane.b32.xlu0 %v930, 32
    %v942 = vpop.permute.xlu0 %941
    %v947 = vadd.f32 %v907, %v936
    %v948 = vadd.f32 %v908, %v938
    %v949 = vadd.f32 %v909, %v940
    %v950 = vadd.f32 %v910, %v942
    %v951 = vtanh.pop %v947
    %v952 = vtanh.pop %v948
    %v953 = vtanh.pop %v949
    %v954 = vtanh.pop %v950
    %959 = vrot.lane.b32.xlu0 %v951, 64
    %v960 = vpop.permute.xlu0 %959
    %961 = vrot.lane.b32.xlu0 %v952, 64
    %v962 = vpop.permute.xlu0 %961
    %963 = vrot.lane.b32.xlu0 %v953, 64
    %v964 = vpop.permute.xlu0 %963
    %965 = vrot.lane.b32.xlu0 %v954, 64
    %v966 = vpop.permute.xlu0 %965
    %v971 = vmul.f32 %v883, %v960
    %v972 = vmul.f32 %v884, %v962
    %v973 = vmul.f32 %v885, %v964
    %v974 = vmul.f32 %v886, %v966
    %979 = vrot.lane.b32.xlu0 %v947, 96
    %v980 = vpop.permute.xlu0 %979
    %981 = vrot.lane.b32.xlu0 %v948, 96
    %v982 = vpop.permute.xlu0 %981
    %983 = vrot.lane.b32.xlu0 %v949, 96
    %v984 = vpop.permute.xlu0 %983
    %985 = vrot.lane.b32.xlu0 %v950, 96
    %v986 = vpop.permute.xlu0 %985
    %991 = vst.msk [vmem:[#allocation3] sm:$0xff] %vm300, %v980
    %992 = vst.msk [vmem:[#allocation3 + $0x8] sm:$0xff] %vm300, %v982
    %993 = vst.msk [vmem:[#allocation3 + $0x10] sm:$0xff] %vm300, %v984
    %994 = vst.msk [vmem:[#allocation3 + $0x18] sm:$0xff] %vm300, %v986
    %v999 = vrot.slane %v971, 7
    %v1000 = vrot.slane %v972, 7
    %v1001 = vsel %vm309, %v999, %v1000
    %v1002 = vrot.slane %v973, 7
    %v1003 = vrot.slane %v974, 7
    %v1004 = vsel %vm309, %v1002, %v1003
    %v1007 = vsel %vm309, %v971, %v999
    %v1008 = vsel %vm309, %v973, %v1002
    %v1009 = vrot.slane %v971, 1
    %v1010 = vrot.slane %v972, 1
    %v1011 = vsel %vm320, %v1009, %v1010
    %v1012 = vrot.slane %v973, 1
    %v1013 = vrot.slane %v974, 1
    %v1014 = vsel %vm320, %v1012, %v1013
    %v1017 = vsel %vm320, %v1010, %v972
    %v1018 = vsel %vm320, %v1013, %v974
    %1021 = vrot.lane.b32.xlu0 %v1007, 32
    %v1022 = vpop.permute.xlu0 %1021
    %1023 = vrot.lane.b32.xlu0 %v1001, 32
    %v1024 = vpop.permute.xlu0 %1023
    %1025 = vrot.lane.b32.xlu0 %v1008, 32
    %v1026 = vpop.permute.xlu0 %1025
    %1027 = vrot.lane.b32.xlu0 %v1004, 32
    %v1028 = vpop.permute.xlu0 %1027
    %1033 = vrot.lane.b32.xlu0 %v971, 64
    %v1034 = vpop.permute.xlu0 %1033
    %1035 = vrot.lane.b32.xlu0 %v972, 64
    %v1036 = vpop.permute.xlu0 %1035
    %1037 = vrot.lane.b32.xlu0 %v973, 64
    %v1038 = vpop.permute.xlu0 %1037
    %1039 = vrot.lane.b32.xlu0 %v974, 64
    %v1040 = vpop.permute.xlu0 %1039
    %1047 = vrot.lane.b32.xlu0 %v1011, 96
    %v1048 = vpop.permute.xlu0 %1047
    %1049 = vrot.lane.b32.xlu0 %v1017, 96
    %v1050 = vpop.permute.xlu0 %1049
    %1051 = vrot.lane.b32.xlu0 %v1014, 96
    %v1052 = vpop.permute.xlu0 %1051
    %1053 = vrot.lane.b32.xlu0 %v1018, 96
    %v1054 = vpop.permute.xlu0 %1053
    %v1059 = vsel %vm300, %v1022, %v1034
    %v1060 = vsel %vm300, %v1024, %v1036
    %v1061 = vsel %vm300, %v1026, %v1038
    %v1062 = vsel %vm300, %v1028, %v1040
    %v1063 = vsel %vm375, %v1059, %v1048
    %v1064 = vsel %vm375, %v1060, %v1050
    %v1065 = vsel %vm375, %v1061, %v1052
    %v1066 = vsel %vm375, %v1062, %v1054
    %v1067 = vpack.c.bf16 %v1064, %v1063
    %v1068 = vpack.c.bf16 %v1066, %v1065
    %v1071 = vunpack.c.l.b16 %v1067
    %v1072 = vunpack.c.h.b16 %v1067
    %v1073 = vunpack.c.l.b16 %v1068
    %v1074 = vunpack.c.h.b16 %v1068
    %v1075 = vpack.c.b16 %v1071, %v1071
    %v1076 = vpack.c.b16 %v1072, %v1072
    %v1077 = vpack.c.b16 %v1073, %v1073
    %v1078 = vpack.c.b16 %v1074, %v1074
    %1083 = vst.msk [vmem:[#allocation2] sm:$0xf] %vm396, %v1075
    %1084 = vst.msk [vmem:[#allocation2 + $0x4] sm:$0xf] %vm396, %v1076
    %1085 = vst.msk [vmem:[#allocation2 + $0x8] sm:$0xf] %vm396, %v1077
    %1086 = vst.msk [vmem:[#allocation2 + $0xc] sm:$0xf] %vm396, %v1078
    %v1087 = vpack.c.bf16 %v972, %v971
    %v1088 = vpack.c.bf16 %v974, %v973
    %v1091 = vunpack.c.l.b16 %v1087
    %v1092 = vunpack.c.h.b16 %v1087
    %v1093 = vunpack.c.l.b16 %v1088
    %v1094 = vunpack.c.h.b16 %v1088
    %v1095 = vpack.c.b16 %v1091, %v1091
    %v1096 = vpack.c.b16 %v1092, %v1092
    %v1097 = vpack.c.b16 %v1093, %v1093
    %v1098 = vpack.c.b16 %v1094, %v1094
    %1099 = vrot.lane.b32.xlu0 %v1095, 32
    %v1100 = vpop.permute.xlu0 %1099
    %1101 = vrot.lane.b32.xlu0 %v1096, 32
    %v1102 = vpop.permute.xlu0 %1101
    %1103 = vrot.lane.b32.xlu0 %v1097, 32
    %v1104 = vpop.permute.xlu0 %1103
    %1105 = vrot.lane.b32.xlu0 %v1098, 32
    %v1106 = vpop.permute.xlu0 %1105
    %s1111 = scalar_lea.vmem %s2, 16
    %1112 = vst.msk [vmem:[%s1111] sm:$0xf] %vm425, %v1100
    %1113 = vst.msk [vmem:[%s1111 + $0x4] sm:$0xf] %vm425, %v1102
    %1114 = vst.msk [vmem:[%s1111 + $0x40] sm:$0xf] %vm425, %v1104
    %1115 = vst.msk [vmem:[%s1111 + $0x44] sm:$0xf] %vm425, %v1106
    %v1116 = vld [vmem:[#allocation2] sm:$0xf]
    %v1117 = vld [vmem:[#allocation2 + $0x4] sm:$0xf]
    %v1118 = vld [vmem:[#allocation2 + $0x8] sm:$0xf]
    %v1119 = vld [vmem:[#allocation2 + $0xc] sm:$0xf]
    %s1120 = scalar_lea.vmem %s0, 24
    %v1121 = vld [vmem:[%s1120] sm:$0xf]
    %v1122 = vld [vmem:[%s1120 + $0x4] sm:$0xf]
    %v1123 = vld [vmem:[%s1120 + $0x40] sm:$0xf]
    %v1124 = vld [vmem:[%s1120 + $0x44] sm:$0xf]
    %v1125 = vunpack.c.l.bf16 %v1121
    %v1126 = vunpack.c.l.bf16 %v1122
    %v1127 = vunpack.c.l.bf16 %v1123
    %v1128 = vunpack.c.l.bf16 %v1124
    %v1133 = vunpack.c.l.b16 %v1116
    %v1134 = vunpack.c.l.b16 %v1117
    %v1135 = vunpack.c.l.b16 %v1118
    %v1136 = vunpack.c.l.b16 %v1119
    %v1137 = vpack.c.b16 %v1134, %v1133
    %v1138 = vpack.c.b16 %v1136, %v1135
    %v1140 = vsel %vm104, %v1137, 0
    %v1143 = vsel %vm104, %v1138, 0
    %1145 = vmatprep.subr.bf16.mxu0 0
    %1146 = vmatpush1.bf16.msra.mxu0 0
    %1147 = vmatprep.subr.bf16.mxu0 0
    %1148 = vmatpush1.bf16.msra.mxu0 0
    %1149 = vmatprep.subr.bf16.mxu0 0
    %1150 = vmatpush1.bf16.msra.mxu0 %v97
    %1151 = vmatprep.subr.bf16.mxu0 0
    %1152 = vmatpush1.bf16.msra.mxu0 %v96
    %1153 = vmatprep.subr.bf16.mxu0 0
    %1154 = vmatpush1.bf16.msra.mxu0 %v95
    %1155 = vmatprep.subr.bf16.mxu0 0
    %1156 = vmatpush1.bf16.msra.mxu0 %v94
    %1157 = vmatprep.subr.bf16.mxu0 0
    %1158 = vmatpush1.bf16.msra.mxu0 %v93
    %1159 = vmatprep.subr.bf16.mxu0 0
    %1160 = vmatpush1.bf16.msra.mxu0 %v92
    %1161 = vmatprep.subr.bf16.mxu0 0
    %1162 = vmatpush2.bf16.msra.mxu0 0
    %1163 = vmatprep.subr.bf16.mxu0 0
    %1164 = vmatpush2.bf16.msra.mxu0 0
    %1165 = vmatprep.subr.bf16.mxu0 0
    %1166 = vmatpush2.bf16.msra.mxu0 0
    %1167 = vmatprep.subr.bf16.mxu0 0
    %1168 = vmatpush2.bf16.msra.mxu0 0
    %1169 = vmatprep.subr.bf16.mxu0 0
    %1170 = vmatpush2.bf16.msra.mxu0 0
    %1171 = vmatprep.subr.bf16.mxu0 0
    %1172 = vmatpush2.bf16.msra.mxu0 0
    %1173 = vmatprep.subr.bf16.mxu0 0
    %1174 = vmatpush2.bf16.msra.mxu0 0
    %1175 = vmatprep.subr.bf16.mxu0 0
    %1176 = vmatpush2.bf16.msra.mxu0 0
    %1177 = vmatprep.mubr.bf16.mxu0 0
    %1178 = vmatmul.mubr.bf16.gmra.mxu0 %v1140
    %v1179 = vpop.f32.mrf.mxu0
    %v1180 = vadd.f32 0.0, %v1179
    %v1181 = vpop.f32.mrf.mxu0
    %v1182 = vpop.f32.mrf.mxu0
    %v1183 = vadd.f32 0.0, %v1182
    %v1184 = vpop.f32.mrf.mxu0
    %1185 = vmatprep.mubr.bf16.mxu0 0
    %1186 = vmatmul.mubr.bf16.gmra.mxu0 %v1143
    %v1187 = vpop.f32.mrf.mxu0
    %v1188 = vadd.f32 0.0, %v1187
    %v1189 = vpop.f32.mrf.mxu0
    %v1190 = vpop.f32.mrf.mxu0
    %v1191 = vadd.f32 0.0, %v1190
    %v1192 = vpop.f32.mrf.mxu0
    %1193 = vdwg.mxu0
    %v1194 = vadd.f32 %v1125, %v1180
    %v1195 = vadd.f32 %v1126, %v1183
    %v1196 = vadd.f32 %v1127, %v1188
    %v1197 = vadd.f32 %v1128, %v1191
    %v1198 = vtanh.pop %v1194
    %v1199 = vtanh.pop %v1195
    %v1200 = vtanh.pop %v1196
    %v1201 = vtanh.pop %v1197
    %v1202 = vxor.u32 %v1194, 2147483648
    %v1203 = vxor.u32 %v1195, 2147483648
    %v1204 = vxor.u32 %v1196, 2147483648
    %v1205 = vxor.u32 %v1197, 2147483648
    %v1206 = vmul.f32 %v1202, 1.442695
    %v1207 = vpow.pop %v1206
    %v1208 = vmul.f32 %v1203, 1.442695
    %v1209 = vpow.pop %v1208
    %v1210 = vmul.f32 %v1204, 1.442695
    %v1211 = vpow.pop %v1210
    %v1212 = vmul.f32 %v1205, 1.442695
    %v1213 = vpow.pop %v1212
    %v1214 = vadd.f32 %v1207, 1.0
    %v1215 = vadd.f32 %v1209, 1.0
    %v1216 = vadd.f32 %v1211, 1.0
    %v1217 = vadd.f32 %v1213, 1.0
    %v1218 = vrcp.pop %v1214
    %v1219 = vmul.f32 1.0, %v1218
    %v1220 = vrcp.pop %v1215
    %v1221 = vmul.f32 1.0, %v1220
    %v1222 = vrcp.pop %v1216
    %v1223 = vmul.f32 1.0, %v1222
    %v1224 = vrcp.pop %v1217
    %v1225 = vmul.f32 1.0, %v1224
    %v1226 = vsel %vm45, %v1198, %v1219
    %v1227 = vsel %vm45, %v1199, %v1221
    %v1228 = vsel %vm45, %v1200, %v1223
    %v1229 = vsel %vm45, %v1201, %v1225
    %v1230 = vld [vmem:[#allocation3] sm:$0xff]
    %v1231 = vld [vmem:[#allocation3 + $0x8] sm:$0xff]
    %v1232 = vld [vmem:[#allocation3 + $0x10] sm:$0xff]
    %v1233 = vld [vmem:[#allocation3 + $0x18] sm:$0xff]
    %1238 = vrot.lane.b32.xlu0 %v1230, 32
    %v1239 = vpop.permute.xlu0 %1238
    %1240 = vrot.lane.b32.xlu0 %v1231, 32
    %v1241 = vpop.permute.xlu0 %1240
    %1242 = vrot.lane.b32.xlu0 %v1232, 32
    %v1243 = vpop.permute.xlu0 %1242
    %1244 = vrot.lane.b32.xlu0 %v1233, 32
    %v1245 = vpop.permute.xlu0 %1244
    %v1250 = vmul.f32 %v1226, %v1239
    %v1251 = vmul.f32 %v1227, %v1241
    %v1252 = vmul.f32 %v1228, %v1243
    %v1253 = vmul.f32 %v1229, %v1245
    %1258 = vrot.lane.b32.xlu0 %v1226, 64
    %v1259 = vpop.permute.xlu0 %1258
    %1260 = vrot.lane.b32.xlu0 %v1227, 64
    %v1261 = vpop.permute.xlu0 %1260
    %1262 = vrot.lane.b32.xlu0 %v1228, 64
    %v1263 = vpop.permute.xlu0 %1262
    %1264 = vrot.lane.b32.xlu0 %v1229, 64
    %v1265 = vpop.permute.xlu0 %1264
    %v1270 = vmul.f32 %v1226, %v1259
    %v1271 = vmul.f32 %v1227, %v1261
    %v1272 = vmul.f32 %v1228, %v1263
    %v1273 = vmul.f32 %v1229, %v1265
    %1278 = vrot.lane.b32.xlu0 %v1270, 32
    %v1279 = vpop.permute.xlu0 %1278
    %1280 = vrot.lane.b32.xlu0 %v1271, 32
    %v1281 = vpop.permute.xlu0 %1280
    %1282 = vrot.lane.b32.xlu0 %v1272, 32
    %v1283 = vpop.permute.xlu0 %1282
    %1284 = vrot.lane.b32.xlu0 %v1273, 32
    %v1285 = vpop.permute.xlu0 %1284
    %v1290 = vadd.f32 %v1250, %v1279
    %v1291 = vadd.f32 %v1251, %v1281
    %v1292 = vadd.f32 %v1252, %v1283
    %v1293 = vadd.f32 %v1253, %v1285
    %v1294 = vtanh.pop %v1290
    %v1295 = vtanh.pop %v1291
    %v1296 = vtanh.pop %v1292
    %v1297 = vtanh.pop %v1293
    %1302 = vrot.lane.b32.xlu0 %v1294, 64
    %v1303 = vpop.permute.xlu0 %1302
    %1304 = vrot.lane.b32.xlu0 %v1295, 64
    %v1305 = vpop.permute.xlu0 %1304
    %1306 = vrot.lane.b32.xlu0 %v1296, 64
    %v1307 = vpop.permute.xlu0 %1306
    %1308 = vrot.lane.b32.xlu0 %v1297, 64
    %v1309 = vpop.permute.xlu0 %1308
    %v1314 = vmul.f32 %v1226, %v1303
    %v1315 = vmul.f32 %v1227, %v1305
    %v1316 = vmul.f32 %v1228, %v1307
    %v1317 = vmul.f32 %v1229, %v1309
    %1322 = vrot.lane.b32.xlu0 %v1290, 96
    %v1323 = vpop.permute.xlu0 %1322
    %1324 = vrot.lane.b32.xlu0 %v1291, 96
    %v1325 = vpop.permute.xlu0 %1324
    %1326 = vrot.lane.b32.xlu0 %v1292, 96
    %v1327 = vpop.permute.xlu0 %1326
    %1328 = vrot.lane.b32.xlu0 %v1293, 96
    %v1329 = vpop.permute.xlu0 %1328
    %1334 = vst.msk [vmem:[#allocation3] sm:$0xff] %vm300, %v1323
    %1335 = vst.msk [vmem:[#allocation3 + $0x8] sm:$0xff] %vm300, %v1325
    %1336 = vst.msk [vmem:[#allocation3 + $0x10] sm:$0xff] %vm300, %v1327
    %1337 = vst.msk [vmem:[#allocation3 + $0x18] sm:$0xff] %vm300, %v1329
    %v1342 = vrot.slane %v1314, 7
    %v1343 = vrot.slane %v1315, 7
    %v1344 = vsel %vm309, %v1342, %v1343
    %v1345 = vrot.slane %v1316, 7
    %v1346 = vrot.slane %v1317, 7
    %v1347 = vsel %vm309, %v1345, %v1346
    %v1350 = vsel %vm309, %v1314, %v1342
    %v1351 = vsel %vm309, %v1316, %v1345
    %v1352 = vrot.slane %v1314, 1
    %v1353 = vrot.slane %v1315, 1
    %v1354 = vsel %vm320, %v1352, %v1353
    %v1355 = vrot.slane %v1316, 1
    %v1356 = vrot.slane %v1317, 1
    %v1357 = vsel %vm320, %v1355, %v1356
    %v1360 = vsel %vm320, %v1353, %v1315
    %v1361 = vsel %vm320, %v1356, %v1317
    %1364 = vrot.lane.b32.xlu0 %v1350, 32
    %v1365 = vpop.permute.xlu0 %1364
    %1366 = vrot.lane.b32.xlu0 %v1344, 32
    %v1367 = vpop.permute.xlu0 %1366
    %1368 = vrot.lane.b32.xlu0 %v1351, 32
    %v1369 = vpop.permute.xlu0 %1368
    %1370 = vrot.lane.b32.xlu0 %v1347, 32
    %v1371 = vpop.permute.xlu0 %1370
    %1376 = vrot.lane.b32.xlu0 %v1314, 64
    %v1377 = vpop.permute.xlu0 %1376
    %1378 = vrot.lane.b32.xlu0 %v1315, 64
    %v1379 = vpop.permute.xlu0 %1378
    %1380 = vrot.lane.b32.xlu0 %v1316, 64
    %v1381 = vpop.permute.xlu0 %1380
    %1382 = vrot.lane.b32.xlu0 %v1317, 64
    %v1383 = vpop.permute.xlu0 %1382
    %1390 = vrot.lane.b32.xlu0 %v1354, 96
    %v1391 = vpop.permute.xlu0 %1390
    %1392 = vrot.lane.b32.xlu0 %v1360, 96
    %v1393 = vpop.permute.xlu0 %1392
    %1394 = vrot.lane.b32.xlu0 %v1357, 96
    %v1395 = vpop.permute.xlu0 %1394
    %1396 = vrot.lane.b32.xlu0 %v1361, 96
    %v1397 = vpop.permute.xlu0 %1396
    %v1402 = vsel %vm300, %v1365, %v1377
    %v1403 = vsel %vm300, %v1367, %v1379
    %v1404 = vsel %vm300, %v1369, %v1381
    %v1405 = vsel %vm300, %v1371, %v1383
    %v1406 = vsel %vm375, %v1402, %v1391
    %v1407 = vsel %vm375, %v1403, %v1393
    %v1408 = vsel %vm375, %v1404, %v1395
    %v1409 = vsel %vm375, %v1405, %v1397
    %v1410 = vpack.c.bf16 %v1407, %v1406
    %v1411 = vpack.c.bf16 %v1409, %v1408
    %v1414 = vunpack.c.l.b16 %v1410
    %v1415 = vunpack.c.h.b16 %v1410
    %v1416 = vunpack.c.l.b16 %v1411
    %v1417 = vunpack.c.h.b16 %v1411
    %v1418 = vpack.c.b16 %v1414, %v1414
    %v1419 = vpack.c.b16 %v1415, %v1415
    %v1420 = vpack.c.b16 %v1416, %v1416
    %v1421 = vpack.c.b16 %v1417, %v1417
    %1426 = vst.msk [vmem:[#allocation2] sm:$0xf] %vm396, %v1418
    %1427 = vst.msk [vmem:[#allocation2 + $0x4] sm:$0xf] %vm396, %v1419
    %1428 = vst.msk [vmem:[#allocation2 + $0x8] sm:$0xf] %vm396, %v1420
    %1429 = vst.msk [vmem:[#allocation2 + $0xc] sm:$0xf] %vm396, %v1421
    %v1430 = vpack.c.bf16 %v1315, %v1314
    %v1431 = vpack.c.bf16 %v1317, %v1316
    %v1434 = vunpack.c.l.b16 %v1430
    %v1435 = vunpack.c.h.b16 %v1430
    %v1436 = vunpack.c.l.b16 %v1431
    %v1437 = vunpack.c.h.b16 %v1431
    %v1438 = vpack.c.b16 %v1434, %v1434
    %v1439 = vpack.c.b16 %v1435, %v1435
    %v1440 = vpack.c.b16 %v1436, %v1436
    %v1441 = vpack.c.b16 %v1437, %v1437
    %1442 = vrot.lane.b32.xlu0 %v1438, 32
    %v1443 = vpop.permute.xlu0 %1442
    %1444 = vrot.lane.b32.xlu0 %v1439, 32
    %v1445 = vpop.permute.xlu0 %1444
    %1446 = vrot.lane.b32.xlu0 %v1440, 32
    %v1447 = vpop.permute.xlu0 %1446
    %1448 = vrot.lane.b32.xlu0 %v1441, 32
    %v1449 = vpop.permute.xlu0 %1448
    %s1454 = scalar_lea.vmem %s2, 24
    %1455 = vst.msk [vmem:[%s1454] sm:$0xf] %vm425, %v1443
    %1456 = vst.msk [vmem:[%s1454 + $0x4] sm:$0xf] %vm425, %v1445
    %1457 = vst.msk [vmem:[%s1454 + $0x40] sm:$0xf] %vm425, %v1447
    %1458 = vst.msk [vmem:[%s1454 + $0x44] sm:$0xf] %vm425, %v1449
    %v1459 = vld [vmem:[#allocation2] sm:$0xf]
    %v1460 = vld [vmem:[#allocation2 + $0x4] sm:$0xf]
    %v1461 = vld [vmem:[#allocation2 + $0x8] sm:$0xf]
    %v1462 = vld [vmem:[#allocation2 + $0xc] sm:$0xf]
    %s1463 = scalar_lea.vmem %s0, 32
    %v1464 = vld [vmem:[%s1463] sm:$0xf]
    %v1465 = vld [vmem:[%s1463 + $0x4] sm:$0xf]
    %v1466 = vld [vmem:[%s1463 + $0x40] sm:$0xf]
    %v1467 = vld [vmem:[%s1463 + $0x44] sm:$0xf]
    %v1468 = vunpack.c.l.bf16 %v1464
    %v1469 = vunpack.c.l.bf16 %v1465
    %v1470 = vunpack.c.l.bf16 %v1466
    %v1471 = vunpack.c.l.bf16 %v1467
    %v1476 = vunpack.c.l.b16 %v1459
    %v1477 = vunpack.c.l.b16 %v1460
    %v1478 = vunpack.c.l.b16 %v1461
    %v1479 = vunpack.c.l.b16 %v1462
    %v1480 = vpack.c.b16 %v1477, %v1476
    %v1481 = vpack.c.b16 %v1479, %v1478
    %v1483 = vsel %vm104, %v1480, 0
    %v1486 = vsel %vm104, %v1481, 0
    %1488 = vmatprep.subr.bf16.mxu0 0
    %1489 = vmatpush1.bf16.msra.mxu0 0
    %1490 = vmatprep.subr.bf16.mxu0 0
    %1491 = vmatpush1.bf16.msra.mxu0 0
    %1492 = vmatprep.subr.bf16.mxu0 0
    %1493 = vmatpush1.bf16.msra.mxu0 %v97
    %1494 = vmatprep.subr.bf16.mxu0 0
    %1495 = vmatpush1.bf16.msra.mxu0 %v96
    %1496 = vmatprep.subr.bf16.mxu0 0
    %1497 = vmatpush1.bf16.msra.mxu0 %v95
    %1498 = vmatprep.subr.bf16.mxu0 0
    %1499 = vmatpush1.bf16.msra.mxu0 %v94
    %1500 = vmatprep.subr.bf16.mxu0 0
    %1501 = vmatpush1.bf16.msra.mxu0 %v93
    %1502 = vmatprep.subr.bf16.mxu0 0
    %1503 = vmatpush1.bf16.msra.mxu0 %v92
    %1504 = vmatprep.subr.bf16.mxu0 0
    %1505 = vmatpush2.bf16.msra.mxu0 0
    %1506 = vmatprep.subr.bf16.mxu0 0
    %1507 = vmatpush2.bf16.msra.mxu0 0
    %1508 = vmatprep.subr.bf16.mxu0 0
    %1509 = vmatpush2.bf16.msra.mxu0 0
    %1510 = vmatprep.subr.bf16.mxu0 0
    %1511 = vmatpush2.bf16.msra.mxu0 0
    %1512 = vmatprep.subr.bf16.mxu0 0
    %1513 = vmatpush2.bf16.msra.mxu0 0
    %1514 = vmatprep.subr.bf16.mxu0 0
    %1515 = vmatpush2.bf16.msra.mxu0 0
    %1516 = vmatprep.subr.bf16.mxu0 0
    %1517 = vmatpush2.bf16.msra.mxu0 0
    %1518 = vmatprep.subr.bf16.mxu0 0
    %1519 = vmatpush2.bf16.msra.mxu0 0
    %1520 = vmatprep.mubr.bf16.mxu0 0
    %1521 = vmatmul.mubr.bf16.gmra.mxu0 %v1483
    %v1522 = vpop.f32.mrf.mxu0
    %v1523 = vadd.f32 0.0, %v1522
    %v1524 = vpop.f32.mrf.mxu0
    %v1525 = vpop.f32.mrf.mxu0
    %v1526 = vadd.f32 0.0, %v1525
    %v1527 = vpop.f32.mrf.mxu0
    %1528 = vmatprep.mubr.bf16.mxu0 0
    %1529 = vmatmul.mubr.bf16.gmra.mxu0 %v1486
    %v1530 = vpop.f32.mrf.mxu0
    %v1531 = vadd.f32 0.0, %v1530
    %v1532 = vpop.f32.mrf.mxu0
    %v1533 = vpop.f32.mrf.mxu0
    %v1534 = vadd.f32 0.0, %v1533
    %v1535 = vpop.f32.mrf.mxu0
    %1536 = vdwg.mxu0
    %v1537 = vadd.f32 %v1468, %v1523
    %v1538 = vadd.f32 %v1469, %v1526
    %v1539 = vadd.f32 %v1470, %v1531
    %v1540 = vadd.f32 %v1471, %v1534
    %v1541 = vtanh.pop %v1537
    %v1542 = vtanh.pop %v1538
    %v1543 = vtanh.pop %v1539
    %v1544 = vtanh.pop %v1540
    %v1545 = vxor.u32 %v1537, 2147483648
    %v1546 = vxor.u32 %v1538, 2147483648
    %v1547 = vxor.u32 %v1539, 2147483648
    %v1548 = vxor.u32 %v1540, 2147483648
    %v1549 = vmul.f32 %v1545, 1.442695
    %v1550 = vpow.pop %v1549
    %v1551 = vmul.f32 %v1546, 1.442695
    %v1552 = vpow.pop %v1551
    %v1553 = vmul.f32 %v1547, 1.442695
    %v1554 = vpow.pop %v1553
    %v1555 = vmul.f32 %v1548, 1.442695
    %v1556 = vpow.pop %v1555
    %v1557 = vadd.f32 %v1550, 1.0
    %v1558 = vadd.f32 %v1552, 1.0
    %v1559 = vadd.f32 %v1554, 1.0
    %v1560 = vadd.f32 %v1556, 1.0
    %v1561 = vrcp.pop %v1557
    %v1562 = vmul.f32 1.0, %v1561
    %v1563 = vrcp.pop %v1558
    %v1564 = vmul.f32 1.0, %v1563
    %v1565 = vrcp.pop %v1559
    %v1566 = vmul.f32 1.0, %v1565
    %v1567 = vrcp.pop %v1560
    %v1568 = vmul.f32 1.0, %v1567
    %v1569 = vsel %vm45, %v1541, %v1562
    %v1570 = vsel %vm45, %v1542, %v1564
    %v1571 = vsel %vm45, %v1543, %v1566
    %v1572 = vsel %vm45, %v1544, %v1568
    %v1573 = vld [vmem:[#allocation3] sm:$0xff]
    %v1574 = vld [vmem:[#allocation3 + $0x8] sm:$0xff]
    %v1575 = vld [vmem:[#allocation3 + $0x10] sm:$0xff]
    %v1576 = vld [vmem:[#allocation3 + $0x18] sm:$0xff]
    %1581 = vrot.lane.b32.xlu0 %v1573, 32
    %v1582 = vpop.permute.xlu0 %1581
    %1583 = vrot.lane.b32.xlu0 %v1574, 32
    %v1584 = vpop.permute.xlu0 %1583
    %1585 = vrot.lane.b32.xlu0 %v1575, 32
    %v1586 = vpop.permute.xlu0 %1585
    %1587 = vrot.lane.b32.xlu0 %v1576, 32
    %v1588 = vpop.permute.xlu0 %1587
    %v1593 = vmul.f32 %v1569, %v1582
    %v1594 = vmul.f32 %v1570, %v1584
    %v1595 = vmul.f32 %v1571, %v1586
    %v1596 = vmul.f32 %v1572, %v1588
    %1601 = vrot.lane.b32.xlu0 %v1569, 64
    %v1602 = vpop.permute.xlu0 %1601
    %1603 = vrot.lane.b32.xlu0 %v1570, 64
    %v1604 = vpop.permute.xlu0 %1603
    %1605 = vrot.lane.b32.xlu0 %v1571, 64
    %v1606 = vpop.permute.xlu0 %1605
    %1607 = vrot.lane.b32.xlu0 %v1572, 64
    %v1608 = vpop.permute.xlu0 %1607
    %v1613 = vmul.f32 %v1569, %v1602
    %v1614 = vmul.f32 %v1570, %v1604
    %v1615 = vmul.f32 %v1571, %v1606
    %v1616 = vmul.f32 %v1572, %v1608
    %1621 = vrot.lane.b32.xlu0 %v1613, 32
    %v1622 = vpop.permute.xlu0 %1621
    %1623 = vrot.lane.b32.xlu0 %v1614, 32
    %v1624 = vpop.permute.xlu0 %1623
    %1625 = vrot.lane.b32.xlu0 %v1615, 32
    %v1626 = vpop.permute.xlu0 %1625
    %1627 = vrot.lane.b32.xlu0 %v1616, 32
    %v1628 = vpop.permute.xlu0 %1627
    %v1633 = vadd.f32 %v1593, %v1622
    %v1634 = vadd.f32 %v1594, %v1624
    %v1635 = vadd.f32 %v1595, %v1626
    %v1636 = vadd.f32 %v1596, %v1628
    %v1637 = vtanh.pop %v1633
    %v1638 = vtanh.pop %v1634
    %v1639 = vtanh.pop %v1635
    %v1640 = vtanh.pop %v1636
    %1645 = vrot.lane.b32.xlu0 %v1637, 64
    %v1646 = vpop.permute.xlu0 %1645
    %1647 = vrot.lane.b32.xlu0 %v1638, 64
    %v1648 = vpop.permute.xlu0 %1647
    %1649 = vrot.lane.b32.xlu0 %v1639, 64
    %v1650 = vpop.permute.xlu0 %1649
    %1651 = vrot.lane.b32.xlu0 %v1640, 64
    %v1652 = vpop.permute.xlu0 %1651
    %v1657 = vmul.f32 %v1569, %v1646
    %v1658 = vmul.f32 %v1570, %v1648
    %v1659 = vmul.f32 %v1571, %v1650
    %v1660 = vmul.f32 %v1572, %v1652
    %1665 = vrot.lane.b32.xlu0 %v1633, 96
    %v1666 = vpop.permute.xlu0 %1665
    %1667 = vrot.lane.b32.xlu0 %v1634, 96
    %v1668 = vpop.permute.xlu0 %1667
    %1669 = vrot.lane.b32.xlu0 %v1635, 96
    %v1670 = vpop.permute.xlu0 %1669
    %1671 = vrot.lane.b32.xlu0 %v1636, 96
    %v1672 = vpop.permute.xlu0 %1671
    %1677 = vst.msk [vmem:[#allocation3] sm:$0xff] %vm300, %v1666
    %1678 = vst.msk [vmem:[#allocation3 + $0x8] sm:$0xff] %vm300, %v1668
    %1679 = vst.msk [vmem:[#allocation3 + $0x10] sm:$0xff] %vm300, %v1670
    %1680 = vst.msk [vmem:[#allocation3 + $0x18] sm:$0xff] %vm300, %v1672
    %v1685 = vrot.slane %v1657, 7
    %v1686 = vrot.slane %v1658, 7
    %v1687 = vsel %vm309, %v1685, %v1686
    %v1688 = vrot.slane %v1659, 7
    %v1689 = vrot.slane %v1660, 7
    %v1690 = vsel %vm309, %v1688, %v1689
    %v1693 = vsel %vm309, %v1657, %v1685
    %v1694 = vsel %vm309, %v1659, %v1688
    %v1695 = vrot.slane %v1657, 1
    %v1696 = vrot.slane %v1658, 1
    %v1697 = vsel %vm320, %v1695, %v1696
    %v1698 = vrot.slane %v1659, 1
    %v1699 = vrot.slane %v1660, 1
    %v1700 = vsel %vm320, %v1698, %v1699
    %v1703 = vsel %vm320, %v1696, %v1658
    %v1704 = vsel %vm320, %v1699, %v1660
    %1707 = vrot.lane.b32.xlu0 %v1693, 32
    %v1708 = vpop.permute.xlu0 %1707
    %1709 = vrot.lane.b32.xlu0 %v1687, 32
    %v1710 = vpop.permute.xlu0 %1709
    %1711 = vrot.lane.b32.xlu0 %v1694, 32
    %v1712 = vpop.permute.xlu0 %1711
    %1713 = vrot.lane.b32.xlu0 %v1690, 32
    %v1714 = vpop.permute.xlu0 %1713
    %1719 = vrot.lane.b32.xlu0 %v1657, 64
    %v1720 = vpop.permute.xlu0 %1719
    %1721 = vrot.lane.b32.xlu0 %v1658, 64
    %v1722 = vpop.permute.xlu0 %1721
    %1723 = vrot.lane.b32.xlu0 %v1659, 64
    %v1724 = vpop.permute.xlu0 %1723
    %1725 = vrot.lane.b32.xlu0 %v1660, 64
    %v1726 = vpop.permute.xlu0 %1725
    %1733 = vrot.lane.b32.xlu0 %v1697, 96
    %v1734 = vpop.permute.xlu0 %1733
    %1735 = vrot.lane.b32.xlu0 %v1703, 96
    %v1736 = vpop.permute.xlu0 %1735
    %1737 = vrot.lane.b32.xlu0 %v1700, 96
    %v1738 = vpop.permute.xlu0 %1737
    %1739 = vrot.lane.b32.xlu0 %v1704, 96
    %v1740 = vpop.permute.xlu0 %1739
    %v1745 = vsel %vm300, %v1708, %v1720
    %v1746 = vsel %vm300, %v1710, %v1722
    %v1747 = vsel %vm300, %v1712, %v1724
    %v1748 = vsel %vm300, %v1714, %v1726
    %v1749 = vsel %vm375, %v1745, %v1734
    %v1750 = vsel %vm375, %v1746, %v1736
    %v1751 = vsel %vm375, %v1747, %v1738
    %v1752 = vsel %vm375, %v1748, %v1740
    %v1753 = vpack.c.bf16 %v1750, %v1749
    %v1754 = vpack.c.bf16 %v1752, %v1751
    %v1757 = vunpack.c.l.b16 %v1753
    %v1758 = vunpack.c.h.b16 %v1753
    %v1759 = vunpack.c.l.b16 %v1754
    %v1760 = vunpack.c.h.b16 %v1754
    %v1761 = vpack.c.b16 %v1757, %v1757
    %v1762 = vpack.c.b16 %v1758, %v1758
    %v1763 = vpack.c.b16 %v1759, %v1759
    %v1764 = vpack.c.b16 %v1760, %v1760
    %1769 = vst.msk [vmem:[#allocation2] sm:$0xf] %vm396, %v1761
    %1770 = vst.msk [vmem:[#allocation2 + $0x4] sm:$0xf] %vm396, %v1762
    %1771 = vst.msk [vmem:[#allocation2 + $0x8] sm:$0xf] %vm396, %v1763
    %1772 = vst.msk [vmem:[#allocation2 + $0xc] sm:$0xf] %vm396, %v1764
    %v1773 = vpack.c.bf16 %v1658, %v1657
    %v1774 = vpack.c.bf16 %v1660, %v1659
    %v1777 = vunpack.c.l.b16 %v1773
    %v1778 = vunpack.c.h.b16 %v1773
    %v1779 = vunpack.c.l.b16 %v1774
    %v1780 = vunpack.c.h.b16 %v1774
    %v1781 = vpack.c.b16 %v1777, %v1777
    %v1782 = vpack.c.b16 %v1778, %v1778
    %v1783 = vpack.c.b16 %v1779, %v1779
    %v1784 = vpack.c.b16 %v1780, %v1780
    %1785 = vrot.lane.b32.xlu0 %v1781, 32
    %v1786 = vpop.permute.xlu0 %1785
    %1787 = vrot.lane.b32.xlu0 %v1782, 32
    %v1788 = vpop.permute.xlu0 %1787
    %1789 = vrot.lane.b32.xlu0 %v1783, 32
    %v1790 = vpop.permute.xlu0 %1789
    %1791 = vrot.lane.b32.xlu0 %v1784, 32
    %v1792 = vpop.permute.xlu0 %1791
    %s1797 = scalar_lea.vmem %s2, 32
    %1798 = vst.msk [vmem:[%s1797] sm:$0xf] %vm425, %v1786
    %1799 = vst.msk [vmem:[%s1797 + $0x4] sm:$0xf] %vm425, %v1788
    %1800 = vst.msk [vmem:[%s1797 + $0x40] sm:$0xf] %vm425, %v1790
    %1801 = vst.msk [vmem:[%s1797 + $0x44] sm:$0xf] %vm425, %v1792
    %v1802 = vld [vmem:[#allocation2] sm:$0xf]
    %v1803 = vld [vmem:[#allocation2 + $0x4] sm:$0xf]
    %v1804 = vld [vmem:[#allocation2 + $0x8] sm:$0xf]
    %v1805 = vld [vmem:[#allocation2 + $0xc] sm:$0xf]
    %s1806 = scalar_lea.vmem %s0, 40
    %v1807 = vld [vmem:[%s1806] sm:$0xf]
    %v1808 = vld [vmem:[%s1806 + $0x4] sm:$0xf]
    %v1809 = vld [vmem:[%s1806 + $0x40] sm:$0xf]
    %v1810 = vld [vmem:[%s1806 + $0x44] sm:$0xf]
    %v1811 = vunpack.c.l.bf16 %v1807
    %v1812 = vunpack.c.l.bf16 %v1808
    %v1813 = vunpack.c.l.bf16 %v1809
    %v1814 = vunpack.c.l.bf16 %v1810
    %v1819 = vunpack.c.l.b16 %v1802
    %v1820 = vunpack.c.l.b16 %v1803
    %v1821 = vunpack.c.l.b16 %v1804
    %v1822 = vunpack.c.l.b16 %v1805
    %v1823 = vpack.c.b16 %v1820, %v1819
    %v1824 = vpack.c.b16 %v1822, %v1821
    %v1826 = vsel %vm104, %v1823, 0
    %v1829 = vsel %vm104, %v1824, 0
    %1831 = vmatprep.subr.bf16.mxu0 0
    %1832 = vmatpush1.bf16.msra.mxu0 0
    %1833 = vmatprep.subr.bf16.mxu0 0
    %1834 = vmatpush1.bf16.msra.mxu0 0
    %1835 = vmatprep.subr.bf16.mxu0 0
    %1836 = vmatpush1.bf16.msra.mxu0 %v97
    %1837 = vmatprep.subr.bf16.mxu0 0
    %1838 = vmatpush1.bf16.msra.mxu0 %v96
    %1839 = vmatprep.subr.bf16.mxu0 0
    %1840 = vmatpush1.bf16.msra.mxu0 %v95
    %1841 = vmatprep.subr.bf16.mxu0 0
    %1842 = vmatpush1.bf16.msra.mxu0 %v94
    %1843 = vmatprep.subr.bf16.mxu0 0
    %1844 = vmatpush1.bf16.msra.mxu0 %v93
    %1845 = vmatprep.subr.bf16.mxu0 0
    %1846 = vmatpush1.bf16.msra.mxu0 %v92
    %1847 = vmatprep.subr.bf16.mxu0 0
    %1848 = vmatpush2.bf16.msra.mxu0 0
    %1849 = vmatprep.subr.bf16.mxu0 0
    %1850 = vmatpush2.bf16.msra.mxu0 0
    %1851 = vmatprep.subr.bf16.mxu0 0
    %1852 = vmatpush2.bf16.msra.mxu0 0
    %1853 = vmatprep.subr.bf16.mxu0 0
    %1854 = vmatpush2.bf16.msra.mxu0 0
    %1855 = vmatprep.subr.bf16.mxu0 0
    %1856 = vmatpush2.bf16.msra.mxu0 0
    %1857 = vmatprep.subr.bf16.mxu0 0
    %1858 = vmatpush2.bf16.msra.mxu0 0
    %1859 = vmatprep.subr.bf16.mxu0 0
    %1860 = vmatpush2.bf16.msra.mxu0 0
    %1861 = vmatprep.subr.bf16.mxu0 0
    %1862 = vmatpush2.bf16.msra.mxu0 0
    %1863 = vmatprep.mubr.bf16.mxu0 0
    %1864 = vmatmul.mubr.bf16.gmra.mxu0 %v1826
    %v1865 = vpop.f32.mrf.mxu0
    %v1866 = vadd.f32 0.0, %v1865
    %v1867 = vpop.f32.mrf.mxu0
    %v1868 = vpop.f32.mrf.mxu0
    %v1869 = vadd.f32 0.0, %v1868
    %v1870 = vpop.f32.mrf.mxu0
    %1871 = vmatprep.mubr.bf16.mxu0 0
    %1872 = vmatmul.mubr.bf16.gmra.mxu0 %v1829
    %v1873 = vpop.f32.mrf.mxu0
    %v1874 = vadd.f32 0.0, %v1873
    %v1875 = vpop.f32.mrf.mxu0
    %v1876 = vpop.f32.mrf.mxu0
    %v1877 = vadd.f32 0.0, %v1876
    %v1878 = vpop.f32.mrf.mxu0
    %1879 = vdwg.mxu0
    %v1880 = vadd.f32 %v1811, %v1866
    %v1881 = vadd.f32 %v1812, %v1869
    %v1882 = vadd.f32 %v1813, %v1874
    %v1883 = vadd.f32 %v1814, %v1877
    %v1884 = vtanh.pop %v1880
    %v1885 = vtanh.pop %v1881
    %v1886 = vtanh.pop %v1882
    %v1887 = vtanh.pop %v1883
    %v1888 = vxor.u32 %v1880, 2147483648
    %v1889 = vxor.u32 %v1881, 2147483648
    %v1890 = vxor.u32 %v1882, 2147483648
    %v1891 = vxor.u32 %v1883, 2147483648
    %v1892 = vmul.f32 %v1888, 1.442695
    %v1893 = vpow.pop %v1892
    %v1894 = vmul.f32 %v1889, 1.442695
    %v1895 = vpow.pop %v1894
    %v1896 = vmul.f32 %v1890, 1.442695
    %v1897 = vpow.pop %v1896
    %v1898 = vmul.f32 %v1891, 1.442695
    %v1899 = vpow.pop %v1898
    %v1900 = vadd.f32 %v1893, 1.0
    %v1901 = vadd.f32 %v1895, 1.0
    %v1902 = vadd.f32 %v1897, 1.0
    %v1903 = vadd.f32 %v1899, 1.0
    %v1904 = vrcp.pop %v1900
    %v1905 = vmul.f32 1.0, %v1904
    %v1906 = vrcp.pop %v1901
    %v1907 = vmul.f32 1.0, %v1906
    %v1908 = vrcp.pop %v1902
    %v1909 = vmul.f32 1.0, %v1908
    %v1910 = vrcp.pop %v1903
    %v1911 = vmul.f32 1.0, %v1910
    %v1912 = vsel %vm45, %v1884, %v1905
    %v1913 = vsel %vm45, %v1885, %v1907
    %v1914 = vsel %vm45, %v1886, %v1909
    %v1915 = vsel %vm45, %v1887, %v1911
    %v1916 = vld [vmem:[#allocation3] sm:$0xff]
    %v1917 = vld [vmem:[#allocation3 + $0x8] sm:$0xff]
    %v1918 = vld [vmem:[#allocation3 + $0x10] sm:$0xff]
    %v1919 = vld [vmem:[#allocation3 + $0x18] sm:$0xff]
    %1924 = vrot.lane.b32.xlu0 %v1916, 32
    %v1925 = vpop.permute.xlu0 %1924
    %1926 = vrot.lane.b32.xlu0 %v1917, 32
    %v1927 = vpop.permute.xlu0 %1926
    %1928 = vrot.lane.b32.xlu0 %v1918, 32
    %v1929 = vpop.permute.xlu0 %1928
    %1930 = vrot.lane.b32.xlu0 %v1919, 32
    %v1931 = vpop.permute.xlu0 %1930
    %v1936 = vmul.f32 %v1912, %v1925
    %v1937 = vmul.f32 %v1913, %v1927
    %v1938 = vmul.f32 %v1914, %v1929
    %v1939 = vmul.f32 %v1915, %v1931
    %1944 = vrot.lane.b32.xlu0 %v1912, 64
    %v1945 = vpop.permute.xlu0 %1944
    %1946 = vrot.lane.b32.xlu0 %v1913, 64
    %v1947 = vpop.permute.xlu0 %1946
    %1948 = vrot.lane.b32.xlu0 %v1914, 64
    %v1949 = vpop.permute.xlu0 %1948
    %1950 = vrot.lane.b32.xlu0 %v1915, 64
    %v1951 = vpop.permute.xlu0 %1950
    %v1956 = vmul.f32 %v1912, %v1945
    %v1957 = vmul.f32 %v1913, %v1947
    %v1958 = vmul.f32 %v1914, %v1949
    %v1959 = vmul.f32 %v1915, %v1951
    %1964 = vrot.lane.b32.xlu0 %v1956, 32
    %v1965 = vpop.permute.xlu0 %1964
    %1966 = vrot.lane.b32.xlu0 %v1957, 32
    %v1967 = vpop.permute.xlu0 %1966
    %1968 = vrot.lane.b32.xlu0 %v1958, 32
    %v1969 = vpop.permute.xlu0 %1968
    %1970 = vrot.lane.b32.xlu0 %v1959, 32
    %v1971 = vpop.permute.xlu0 %1970
    %v1976 = vadd.f32 %v1936, %v1965
    %v1977 = vadd.f32 %v1937, %v1967
    %v1978 = vadd.f32 %v1938, %v1969
    %v1979 = vadd.f32 %v1939, %v1971
    %v1980 = vtanh.pop %v1976
    %v1981 = vtanh.pop %v1977
    %v1982 = vtanh.pop %v1978
    %v1983 = vtanh.pop %v1979
    %1988 = vrot.lane.b32.xlu0 %v1980, 64
    %v1989 = vpop.permute.xlu0 %1988
    %1990 = vrot.lane.b32.xlu0 %v1981, 64
    %v1991 = vpop.permute.xlu0 %1990
    %1992 = vrot.lane.b32.xlu0 %v1982, 64
    %v1993 = vpop.permute.xlu0 %1992
    %1994 = vrot.lane.b32.xlu0 %v1983, 64
    %v1995 = vpop.permute.xlu0 %1994
    %v2000 = vmul.f32 %v1912, %v1989
    %v2001 = vmul.f32 %v1913, %v1991
    %v2002 = vmul.f32 %v1914, %v1993
    %v2003 = vmul.f32 %v1915, %v1995
    %2008 = vrot.lane.b32.xlu0 %v1976, 96
    %v2009 = vpop.permute.xlu0 %2008
    %2010 = vrot.lane.b32.xlu0 %v1977, 96
    %v2011 = vpop.permute.xlu0 %2010
    %2012 = vrot.lane.b32.xlu0 %v1978, 96
    %v2013 = vpop.permute.xlu0 %2012
    %2014 = vrot.lane.b32.xlu0 %v1979, 96
    %v2015 = vpop.permute.xlu0 %2014
    %2020 = vst.msk [vmem:[#allocation3] sm:$0xff] %vm300, %v2009
    %2021 = vst.msk [vmem:[#allocation3 + $0x8] sm:$0xff] %vm300, %v2011
    %2022 = vst.msk [vmem:[#allocation3 + $0x10] sm:$0xff] %vm300, %v2013
    %2023 = vst.msk [vmem:[#allocation3 + $0x18] sm:$0xff] %vm300, %v2015
    %v2028 = vrot.slane %v2000, 7
    %v2029 = vrot.slane %v2001, 7
    %v2030 = vsel %vm309, %v2028, %v2029
    %v2031 = vrot.slane %v2002, 7
    %v2032 = vrot.slane %v2003, 7
    %v2033 = vsel %vm309, %v2031, %v2032
    %v2036 = vsel %vm309, %v2000, %v2028
    %v2037 = vsel %vm309, %v2002, %v2031
    %v2038 = vrot.slane %v2000, 1
    %v2039 = vrot.slane %v2001, 1
    %v2040 = vsel %vm320, %v2038, %v2039
    %v2041 = vrot.slane %v2002, 1
    %v2042 = vrot.slane %v2003, 1
    %v2043 = vsel %vm320, %v2041, %v2042
    %v2046 = vsel %vm320, %v2039, %v2001
    %v2047 = vsel %vm320, %v2042, %v2003
    %2050 = vrot.lane.b32.xlu0 %v2036, 32
    %v2051 = vpop.permute.xlu0 %2050
    %2052 = vrot.lane.b32.xlu0 %v2030, 32
    %v2053 = vpop.permute.xlu0 %2052
    %2054 = vrot.lane.b32.xlu0 %v2037, 32
    %v2055 = vpop.permute.xlu0 %2054
    %2056 = vrot.lane.b32.xlu0 %v2033, 32
    %v2057 = vpop.permute.xlu0 %2056
    %2062 = vrot.lane.b32.xlu0 %v2000, 64
    %v2063 = vpop.permute.xlu0 %2062
    %2064 = vrot.lane.b32.xlu0 %v2001, 64
    %v2065 = vpop.permute.xlu0 %2064
    %2066 = vrot.lane.b32.xlu0 %v2002, 64
    %v2067 = vpop.permute.xlu0 %2066
    %2068 = vrot.lane.b32.xlu0 %v2003, 64
    %v2069 = vpop.permute.xlu0 %2068
    %2076 = vrot.lane.b32.xlu0 %v2040, 96
    %v2077 = vpop.permute.xlu0 %2076
    %2078 = vrot.lane.b32.xlu0 %v2046, 96
    %v2079 = vpop.permute.xlu0 %2078
    %2080 = vrot.lane.b32.xlu0 %v2043, 96
    %v2081 = vpop.permute.xlu0 %2080
    %2082 = vrot.lane.b32.xlu0 %v2047, 96
    %v2083 = vpop.permute.xlu0 %2082
    %v2088 = vsel %vm300, %v2051, %v2063
    %v2089 = vsel %vm300, %v2053, %v2065
    %v2090 = vsel %vm300, %v2055, %v2067
    %v2091 = vsel %vm300, %v2057, %v2069
    %v2092 = vsel %vm375, %v2088, %v2077
    %v2093 = vsel %vm375, %v2089, %v2079
    %v2094 = vsel %vm375, %v2090, %v2081
    %v2095 = vsel %vm375, %v2091, %v2083
    %v2096 = vpack.c.bf16 %v2093, %v2092
    %v2097 = vpack.c.bf16 %v2095, %v2094
    %v2100 = vunpack.c.l.b16 %v2096
    %v2101 = vunpack.c.h.b16 %v2096
    %v2102 = vunpack.c.l.b16 %v2097
    %v2103 = vunpack.c.h.b16 %v2097
    %v2104 = vpack.c.b16 %v2100, %v2100
    %v2105 = vpack.c.b16 %v2101, %v2101
    %v2106 = vpack.c.b16 %v2102, %v2102
    %v2107 = vpack.c.b16 %v2103, %v2103
    %2112 = vst.msk [vmem:[#allocation2] sm:$0xf] %vm396, %v2104
    %2113 = vst.msk [vmem:[#allocation2 + $0x4] sm:$0xf] %vm396, %v2105
    %2114 = vst.msk [vmem:[#allocation2 + $0x8] sm:$0xf] %vm396, %v2106
    %2115 = vst.msk [vmem:[#allocation2 + $0xc] sm:$0xf] %vm396, %v2107
    %v2116 = vpack.c.bf16 %v2001, %v2000
    %v2117 = vpack.c.bf16 %v2003, %v2002
    %v2120 = vunpack.c.l.b16 %v2116
    %v2121 = vunpack.c.h.b16 %v2116
    %v2122 = vunpack.c.l.b16 %v2117
    %v2123 = vunpack.c.h.b16 %v2117
    %v2124 = vpack.c.b16 %v2120, %v2120
    %v2125 = vpack.c.b16 %v2121, %v2121
    %v2126 = vpack.c.b16 %v2122, %v2122
    %v2127 = vpack.c.b16 %v2123, %v2123
    %2128 = vrot.lane.b32.xlu0 %v2124, 32
    %v2129 = vpop.permute.xlu0 %2128
    %2130 = vrot.lane.b32.xlu0 %v2125, 32
    %v2131 = vpop.permute.xlu0 %2130
    %2132 = vrot.lane.b32.xlu0 %v2126, 32
    %v2133 = vpop.permute.xlu0 %2132
    %2134 = vrot.lane.b32.xlu0 %v2127, 32
    %v2135 = vpop.permute.xlu0 %2134
    %s2140 = scalar_lea.vmem %s2, 40
    %2141 = vst.msk [vmem:[%s2140] sm:$0xf] %vm425, %v2129
    %2142 = vst.msk [vmem:[%s2140 + $0x4] sm:$0xf] %vm425, %v2131
    %2143 = vst.msk [vmem:[%s2140 + $0x40] sm:$0xf] %vm425, %v2133
    %2144 = vst.msk [vmem:[%s2140 + $0x44] sm:$0xf] %vm425, %v2135
    %v2145 = vld [vmem:[#allocation2] sm:$0xf]
    %v2146 = vld [vmem:[#allocation2 + $0x4] sm:$0xf]
    %v2147 = vld [vmem:[#allocation2 + $0x8] sm:$0xf]
    %v2148 = vld [vmem:[#allocation2 + $0xc] sm:$0xf]
    %s2149 = scalar_lea.vmem %s0, 48
    %v2150 = vld [vmem:[%s2149] sm:$0xf]
    %v2151 = vld [vmem:[%s2149 + $0x4] sm:$0xf]
    %v2152 = vld [vmem:[%s2149 + $0x40] sm:$0xf]
    %v2153 = vld [vmem:[%s2149 + $0x44] sm:$0xf]
    %v2154 = vunpack.c.l.bf16 %v2150
    %v2155 = vunpack.c.l.bf16 %v2151
    %v2156 = vunpack.c.l.bf16 %v2152
    %v2157 = vunpack.c.l.bf16 %v2153
    %v2162 = vunpack.c.l.b16 %v2145
    %v2163 = vunpack.c.l.b16 %v2146
    %v2164 = vunpack.c.l.b16 %v2147
    %v2165 = vunpack.c.l.b16 %v2148
    %v2166 = vpack.c.b16 %v2163, %v2162
    %v2167 = vpack.c.b16 %v2165, %v2164
    %v2169 = vsel %vm104, %v2166, 0
    %v2172 = vsel %vm104, %v2167, 0
    %2174 = vmatprep.subr.bf16.mxu0 0
    %2175 = vmatpush1.bf16.msra.mxu0 0
    %2176 = vmatprep.subr.bf16.mxu0 0
    %2177 = vmatpush1.bf16.msra.mxu0 0
    %2178 = vmatprep.subr.bf16.mxu0 0
    %2179 = vmatpush1.bf16.msra.mxu0 %v97
    %2180 = vmatprep.subr.bf16.mxu0 0
    %2181 = vmatpush1.bf16.msra.mxu0 %v96
    %2182 = vmatprep.subr.bf16.mxu0 0
    %2183 = vmatpush1.bf16.msra.mxu0 %v95
    %2184 = vmatprep.subr.bf16.mxu0 0
    %2185 = vmatpush1.bf16.msra.mxu0 %v94
    %2186 = vmatprep.subr.bf16.mxu0 0
    %2187 = vmatpush1.bf16.msra.mxu0 %v93
    %2188 = vmatprep.subr.bf16.mxu0 0
    %2189 = vmatpush1.bf16.msra.mxu0 %v92
    %2190 = vmatprep.subr.bf16.mxu0 0
    %2191 = vmatpush2.bf16.msra.mxu0 0
    %2192 = vmatprep.subr.bf16.mxu0 0
    %2193 = vmatpush2.bf16.msra.mxu0 0
    %2194 = vmatprep.subr.bf16.mxu0 0
    %2195 = vmatpush2.bf16.msra.mxu0 0
    %2196 = vmatprep.subr.bf16.mxu0 0
    %2197 = vmatpush2.bf16.msra.mxu0 0
    %2198 = vmatprep.subr.bf16.mxu0 0
    %2199 = vmatpush2.bf16.msra.mxu0 0
    %2200 = vmatprep.subr.bf16.mxu0 0
    %2201 = vmatpush2.bf16.msra.mxu0 0
    %2202 = vmatprep.subr.bf16.mxu0 0
    %2203 = vmatpush2.bf16.msra.mxu0 0
    %2204 = vmatprep.subr.bf16.mxu0 0
    %2205 = vmatpush2.bf16.msra.mxu0 0
    %2206 = vmatprep.mubr.bf16.mxu0 0
    %2207 = vmatmul.mubr.bf16.gmra.mxu0 %v2169
    %v2208 = vpop.f32.mrf.mxu0
    %v2209 = vadd.f32 0.0, %v2208
    %v2210 = vpop.f32.mrf.mxu0
    %v2211 = vpop.f32.mrf.mxu0
    %v2212 = vadd.f32 0.0, %v2211
    %v2213 = vpop.f32.mrf.mxu0
    %2214 = vmatprep.mubr.bf16.mxu0 0
    %2215 = vmatmul.mubr.bf16.gmra.mxu0 %v2172
    %v2216 = vpop.f32.mrf.mxu0
    %v2217 = vadd.f32 0.0, %v2216
    %v2218 = vpop.f32.mrf.mxu0
    %v2219 = vpop.f32.mrf.mxu0
    %v2220 = vadd.f32 0.0, %v2219
    %v2221 = vpop.f32.mrf.mxu0
    %2222 = vdwg.mxu0
    %v2223 = vadd.f32 %v2154, %v2209
    %v2224 = vadd.f32 %v2155, %v2212
    %v2225 = vadd.f32 %v2156, %v2217
    %v2226 = vadd.f32 %v2157, %v2220
    %v2227 = vtanh.pop %v2223
    %v2228 = vtanh.pop %v2224
    %v2229 = vtanh.pop %v2225
    %v2230 = vtanh.pop %v2226
    %v2231 = vxor.u32 %v2223, 2147483648
    %v2232 = vxor.u32 %v2224, 2147483648
    %v2233 = vxor.u32 %v2225, 2147483648
    %v2234 = vxor.u32 %v2226, 2147483648
    %v2235 = vmul.f32 %v2231, 1.442695
    %v2236 = vpow.pop %v2235
    %v2237 = vmul.f32 %v2232, 1.442695
    %v2238 = vpow.pop %v2237
    %v2239 = vmul.f32 %v2233, 1.442695
    %v2240 = vpow.pop %v2239
    %v2241 = vmul.f32 %v2234, 1.442695
    %v2242 = vpow.pop %v2241
    %v2243 = vadd.f32 %v2236, 1.0
    %v2244 = vadd.f32 %v2238, 1.0
    %v2245 = vadd.f32 %v2240, 1.0
    %v2246 = vadd.f32 %v2242, 1.0
    %v2247 = vrcp.pop %v2243
    %v2248 = vmul.f32 1.0, %v2247
    %v2249 = vrcp.pop %v2244
    %v2250 = vmul.f32 1.0, %v2249
    %v2251 = vrcp.pop %v2245
    %v2252 = vmul.f32 1.0, %v2251
    %v2253 = vrcp.pop %v2246
    %v2254 = vmul.f32 1.0, %v2253
    %v2255 = vsel %vm45, %v2227, %v2248
    %v2256 = vsel %vm45, %v2228, %v2250
    %v2257 = vsel %vm45, %v2229, %v2252
    %v2258 = vsel %vm45, %v2230, %v2254
    %v2259 = vld [vmem:[#allocation3] sm:$0xff]
    %v2260 = vld [vmem:[#allocation3 + $0x8] sm:$0xff]
    %v2261 = vld [vmem:[#allocation3 + $0x10] sm:$0xff]
    %v2262 = vld [vmem:[#allocation3 + $0x18] sm:$0xff]
    %2267 = vrot.lane.b32.xlu0 %v2259, 32
    %v2268 = vpop.permute.xlu0 %2267
    %2269 = vrot.lane.b32.xlu0 %v2260, 32
    %v2270 = vpop.permute.xlu0 %2269
    %2271 = vrot.lane.b32.xlu0 %v2261, 32
    %v2272 = vpop.permute.xlu0 %2271
    %2273 = vrot.lane.b32.xlu0 %v2262, 32
    %v2274 = vpop.permute.xlu0 %2273
    %v2279 = vmul.f32 %v2255, %v2268
    %v2280 = vmul.f32 %v2256, %v2270
    %v2281 = vmul.f32 %v2257, %v2272
    %v2282 = vmul.f32 %v2258, %v2274
    %2287 = vrot.lane.b32.xlu0 %v2255, 64
    %v2288 = vpop.permute.xlu0 %2287
    %2289 = vrot.lane.b32.xlu0 %v2256, 64
    %v2290 = vpop.permute.xlu0 %2289
    %2291 = vrot.lane.b32.xlu0 %v2257, 64
    %v2292 = vpop.permute.xlu0 %2291
    %2293 = vrot.lane.b32.xlu0 %v2258, 64
    %v2294 = vpop.permute.xlu0 %2293
    %v2299 = vmul.f32 %v2255, %v2288
    %v2300 = vmul.f32 %v2256, %v2290
    %v2301 = vmul.f32 %v2257, %v2292
    %v2302 = vmul.f32 %v2258, %v2294
    %2307 = vrot.lane.b32.xlu0 %v2299, 32
    %v2308 = vpop.permute.xlu0 %2307
    %2309 = vrot.lane.b32.xlu0 %v2300, 32
    %v2310 = vpop.permute.xlu0 %2309
    %2311 = vrot.lane.b32.xlu0 %v2301, 32
    %v2312 = vpop.permute.xlu0 %2311
    %2313 = vrot.lane.b32.xlu0 %v2302, 32
    %v2314 = vpop.permute.xlu0 %2313
    %v2319 = vadd.f32 %v2279, %v2308
    %v2320 = vadd.f32 %v2280, %v2310
    %v2321 = vadd.f32 %v2281, %v2312
    %v2322 = vadd.f32 %v2282, %v2314
    %v2323 = vtanh.pop %v2319
    %v2324 = vtanh.pop %v2320
    %v2325 = vtanh.pop %v2321
    %v2326 = vtanh.pop %v2322
    %2331 = vrot.lane.b32.xlu0 %v2323, 64
    %v2332 = vpop.permute.xlu0 %2331
    %2333 = vrot.lane.b32.xlu0 %v2324, 64
    %v2334 = vpop.permute.xlu0 %2333
    %2335 = vrot.lane.b32.xlu0 %v2325, 64
    %v2336 = vpop.permute.xlu0 %2335
    %2337 = vrot.lane.b32.xlu0 %v2326, 64
    %v2338 = vpop.permute.xlu0 %2337
    %v2343 = vmul.f32 %v2255, %v2332
    %v2344 = vmul.f32 %v2256, %v2334
    %v2345 = vmul.f32 %v2257, %v2336
    %v2346 = vmul.f32 %v2258, %v2338
    %2351 = vrot.lane.b32.xlu0 %v2319, 96
    %v2352 = vpop.permute.xlu0 %2351
    %2353 = vrot.lane.b32.xlu0 %v2320, 96
    %v2354 = vpop.permute.xlu0 %2353
    %2355 = vrot.lane.b32.xlu0 %v2321, 96
    %v2356 = vpop.permute.xlu0 %2355
    %2357 = vrot.lane.b32.xlu0 %v2322, 96
    %v2358 = vpop.permute.xlu0 %2357
    %2363 = vst.msk [vmem:[#allocation3] sm:$0xff] %vm300, %v2352
    %2364 = vst.msk [vmem:[#allocation3 + $0x8] sm:$0xff] %vm300, %v2354
    %2365 = vst.msk [vmem:[#allocation3 + $0x10] sm:$0xff] %vm300, %v2356
    %2366 = vst.msk [vmem:[#allocation3 + $0x18] sm:$0xff] %vm300, %v2358
    %v2371 = vrot.slane %v2343, 7
    %v2372 = vrot.slane %v2344, 7
    %v2373 = vsel %vm309, %v2371, %v2372
    %v2374 = vrot.slane %v2345, 7
    %v2375 = vrot.slane %v2346, 7
    %v2376 = vsel %vm309, %v2374, %v2375
    %v2379 = vsel %vm309, %v2343, %v2371
    %v2380 = vsel %vm309, %v2345, %v2374
    %v2381 = vrot.slane %v2343, 1
    %v2382 = vrot.slane %v2344, 1
    %v2383 = vsel %vm320, %v2381, %v2382
    %v2384 = vrot.slane %v2345, 1
    %v2385 = vrot.slane %v2346, 1
    %v2386 = vsel %vm320, %v2384, %v2385
    %v2389 = vsel %vm320, %v2382, %v2344
    %v2390 = vsel %vm320, %v2385, %v2346
    %2393 = vrot.lane.b32.xlu0 %v2379, 32
    %v2394 = vpop.permute.xlu0 %2393
    %2395 = vrot.lane.b32.xlu0 %v2373, 32
    %v2396 = vpop.permute.xlu0 %2395
    %2397 = vrot.lane.b32.xlu0 %v2380, 32
    %v2398 = vpop.permute.xlu0 %2397
    %2399 = vrot.lane.b32.xlu0 %v2376, 32
    %v2400 = vpop.permute.xlu0 %2399
    %2405 = vrot.lane.b32.xlu0 %v2343, 64
    %v2406 = vpop.permute.xlu0 %2405
    %2407 = vrot.lane.b32.xlu0 %v2344, 64
    %v2408 = vpop.permute.xlu0 %2407
    %2409 = vrot.lane.b32.xlu0 %v2345, 64
    %v2410 = vpop.permute.xlu0 %2409
    %2411 = vrot.lane.b32.xlu0 %v2346, 64
    %v2412 = vpop.permute.xlu0 %2411
    %2419 = vrot.lane.b32.xlu0 %v2383, 96
    %v2420 = vpop.permute.xlu0 %2419
    %2421 = vrot.lane.b32.xlu0 %v2389, 96
    %v2422 = vpop.permute.xlu0 %2421
    %2423 = vrot.lane.b32.xlu0 %v2386, 96
    %v2424 = vpop.permute.xlu0 %2423
    %2425 = vrot.lane.b32.xlu0 %v2390, 96
    %v2426 = vpop.permute.xlu0 %2425
    %v2431 = vsel %vm300, %v2394, %v2406
    %v2432 = vsel %vm300, %v2396, %v2408
    %v2433 = vsel %vm300, %v2398, %v2410
    %v2434 = vsel %vm300, %v2400, %v2412
    %v2435 = vsel %vm375, %v2431, %v2420
    %v2436 = vsel %vm375, %v2432, %v2422
    %v2437 = vsel %vm375, %v2433, %v2424
    %v2438 = vsel %vm375, %v2434, %v2426
    %v2439 = vpack.c.bf16 %v2436, %v2435
    %v2440 = vpack.c.bf16 %v2438, %v2437
    %v2443 = vunpack.c.l.b16 %v2439
    %v2444 = vunpack.c.h.b16 %v2439
    %v2445 = vunpack.c.l.b16 %v2440
    %v2446 = vunpack.c.h.b16 %v2440
    %v2447 = vpack.c.b16 %v2443, %v2443
    %v2448 = vpack.c.b16 %v2444, %v2444
    %v2449 = vpack.c.b16 %v2445, %v2445
    %v2450 = vpack.c.b16 %v2446, %v2446
    %2455 = vst.msk [vmem:[#allocation2] sm:$0xf] %vm396, %v2447
    %2456 = vst.msk [vmem:[#allocation2 + $0x4] sm:$0xf] %vm396, %v2448
    %2457 = vst.msk [vmem:[#allocation2 + $0x8] sm:$0xf] %vm396, %v2449
    %2458 = vst.msk [vmem:[#allocation2 + $0xc] sm:$0xf] %vm396, %v2450
    %v2459 = vpack.c.bf16 %v2344, %v2343
    %v2460 = vpack.c.bf16 %v2346, %v2345
    %v2463 = vunpack.c.l.b16 %v2459
    %v2464 = vunpack.c.h.b16 %v2459
    %v2465 = vunpack.c.l.b16 %v2460
    %v2466 = vunpack.c.h.b16 %v2460
    %v2467 = vpack.c.b16 %v2463, %v2463
    %v2468 = vpack.c.b16 %v2464, %v2464
    %v2469 = vpack.c.b16 %v2465, %v2465
    %v2470 = vpack.c.b16 %v2466, %v2466
    %2471 = vrot.lane.b32.xlu0 %v2467, 32
    %v2472 = vpop.permute.xlu0 %2471
    %2473 = vrot.lane.b32.xlu0 %v2468, 32
    %v2474 = vpop.permute.xlu0 %2473
    %2475 = vrot.lane.b32.xlu0 %v2469, 32
    %v2476 = vpop.permute.xlu0 %2475
    %2477 = vrot.lane.b32.xlu0 %v2470, 32
    %v2478 = vpop.permute.xlu0 %2477
    %s2483 = scalar_lea.vmem %s2, 48
    %2484 = vst.msk [vmem:[%s2483] sm:$0xf] %vm425, %v2472
    %2485 = vst.msk [vmem:[%s2483 + $0x4] sm:$0xf] %vm425, %v2474
    %2486 = vst.msk [vmem:[%s2483 + $0x40] sm:$0xf] %vm425, %v2476
    %2487 = vst.msk [vmem:[%s2483 + $0x44] sm:$0xf] %vm425, %v2478
    %v2488 = vld [vmem:[#allocation2] sm:$0xf]
    %v2489 = vld [vmem:[#allocation2 + $0x4] sm:$0xf]
    %v2490 = vld [vmem:[#allocation2 + $0x8] sm:$0xf]
    %v2491 = vld [vmem:[#allocation2 + $0xc] sm:$0xf]
    %s2492 = scalar_lea.vmem %s0, 56
    %v2493 = vld [vmem:[%s2492] sm:$0xf]
    %v2494 = vld [vmem:[%s2492 + $0x4] sm:$0xf]
    %v2495 = vld [vmem:[%s2492 + $0x40] sm:$0xf]
    %v2496 = vld [vmem:[%s2492 + $0x44] sm:$0xf]
    %v2497 = vunpack.c.l.bf16 %v2493
    %v2498 = vunpack.c.l.bf16 %v2494
    %v2499 = vunpack.c.l.bf16 %v2495
    %v2500 = vunpack.c.l.bf16 %v2496
    %v2505 = vunpack.c.l.b16 %v2488
    %v2506 = vunpack.c.l.b16 %v2489
    %v2507 = vunpack.c.l.b16 %v2490
    %v2508 = vunpack.c.l.b16 %v2491
    %v2509 = vpack.c.b16 %v2506, %v2505
    %v2510 = vpack.c.b16 %v2508, %v2507
    %v2512 = vsel %vm104, %v2509, 0
    %v2515 = vsel %vm104, %v2510, 0
    %2517 = vmatprep.subr.bf16.mxu0 0
    %2518 = vmatpush1.bf16.msra.mxu0 0
    %2519 = vmatprep.subr.bf16.mxu0 0
    %2520 = vmatpush1.bf16.msra.mxu0 0
    %2521 = vmatprep.subr.bf16.mxu0 0
    %2522 = vmatpush1.bf16.msra.mxu0 %v97
    %2523 = vmatprep.subr.bf16.mxu0 0
    %2524 = vmatpush1.bf16.msra.mxu0 %v96
    %2525 = vmatprep.subr.bf16.mxu0 0
    %2526 = vmatpush1.bf16.msra.mxu0 %v95
    %2527 = vmatprep.subr.bf16.mxu0 0
    %2528 = vmatpush1.bf16.msra.mxu0 %v94
    %2529 = vmatprep.subr.bf16.mxu0 0
    %2530 = vmatpush1.bf16.msra.mxu0 %v93
    %2531 = vmatprep.subr.bf16.mxu0 0
    %2532 = vmatpush1.bf16.msra.mxu0 %v92
    %2533 = vmatprep.subr.bf16.mxu0 0
    %2534 = vmatpush2.bf16.msra.mxu0 0
    %2535 = vmatprep.subr.bf16.mxu0 0
    %2536 = vmatpush2.bf16.msra.mxu0 0
    %2537 = vmatprep.subr.bf16.mxu0 0
    %2538 = vmatpush2.bf16.msra.mxu0 0
    %2539 = vmatprep.subr.bf16.mxu0 0
    %2540 = vmatpush2.bf16.msra.mxu0 0
    %2541 = vmatprep.subr.bf16.mxu0 0
    %2542 = vmatpush2.bf16.msra.mxu0 0
    %2543 = vmatprep.subr.bf16.mxu0 0
    %2544 = vmatpush2.bf16.msra.mxu0 0
    %2545 = vmatprep.subr.bf16.mxu0 0
    %2546 = vmatpush2.bf16.msra.mxu0 0
    %2547 = vmatprep.subr.bf16.mxu0 0
    %2548 = vmatpush2.bf16.msra.mxu0 0
    %2549 = vmatprep.mubr.bf16.mxu0 0
    %2550 = vmatmul.mubr.bf16.gmra.mxu0 %v2512
    %v2551 = vpop.f32.mrf.mxu0
    %v2552 = vadd.f32 0.0, %v2551
    %v2553 = vpop.f32.mrf.mxu0
    %v2554 = vpop.f32.mrf.mxu0
    %v2555 = vadd.f32 0.0, %v2554
    %v2556 = vpop.f32.mrf.mxu0
    %2557 = vmatprep.mubr.bf16.mxu0 0
    %2558 = vmatmul.mubr.bf16.gmra.mxu0 %v2515
    %v2559 = vpop.f32.mrf.mxu0
    %v2560 = vadd.f32 0.0, %v2559
    %v2561 = vpop.f32.mrf.mxu0
    %v2562 = vpop.f32.mrf.mxu0
    %v2563 = vadd.f32 0.0, %v2562
    %v2564 = vpop.f32.mrf.mxu0
    %2565 = vdwg.mxu0
    %v2566 = vadd.f32 %v2497, %v2552
    %v2567 = vadd.f32 %v2498, %v2555
    %v2568 = vadd.f32 %v2499, %v2560
    %v2569 = vadd.f32 %v2500, %v2563
    %v2570 = vtanh.pop %v2566
    %v2571 = vtanh.pop %v2567
    %v2572 = vtanh.pop %v2568
    %v2573 = vtanh.pop %v2569
    %v2574 = vxor.u32 %v2566, 2147483648
    %v2575 = vxor.u32 %v2567, 2147483648
    %v2576 = vxor.u32 %v2568, 2147483648
    %v2577 = vxor.u32 %v2569, 2147483648
    %v2578 = vmul.f32 %v2574, 1.442695
    %v2579 = vpow.pop %v2578
    %v2580 = vmul.f32 %v2575, 1.442695
    %v2581 = vpow.pop %v2580
    %v2582 = vmul.f32 %v2576, 1.442695
    %v2583 = vpow.pop %v2582
    %v2584 = vmul.f32 %v2577, 1.442695
    %v2585 = vpow.pop %v2584
    %v2586 = vadd.f32 %v2579, 1.0
    %v2587 = vadd.f32 %v2581, 1.0
    %v2588 = vadd.f32 %v2583, 1.0
    %v2589 = vadd.f32 %v2585, 1.0
    %v2590 = vrcp.pop %v2586
    %v2591 = vmul.f32 1.0, %v2590
    %v2592 = vrcp.pop %v2587
    %v2593 = vmul.f32 1.0, %v2592
    %v2594 = vrcp.pop %v2588
    %v2595 = vmul.f32 1.0, %v2594
    %v2596 = vrcp.pop %v2589
    %v2597 = vmul.f32 1.0, %v2596
    %v2598 = vsel %vm45, %v2570, %v2591
    %v2599 = vsel %vm45, %v2571, %v2593
    %v2600 = vsel %vm45, %v2572, %v2595
    %v2601 = vsel %vm45, %v2573, %v2597
    %v2602 = vld [vmem:[#allocation3] sm:$0xff]
    %v2603 = vld [vmem:[#allocation3 + $0x8] sm:$0xff]
    %v2604 = vld [vmem:[#allocation3 + $0x10] sm:$0xff]
    %v2605 = vld [vmem:[#allocation3 + $0x18] sm:$0xff]
    %2610 = vrot.lane.b32.xlu0 %v2602, 32
    %v2611 = vpop.permute.xlu0 %2610
    %2612 = vrot.lane.b32.xlu0 %v2603, 32
    %v2613 = vpop.permute.xlu0 %2612
    %2614 = vrot.lane.b32.xlu0 %v2604, 32
    %v2615 = vpop.permute.xlu0 %2614
    %2616 = vrot.lane.b32.xlu0 %v2605, 32
    %v2617 = vpop.permute.xlu0 %2616
    %v2622 = vmul.f32 %v2598, %v2611
    %v2623 = vmul.f32 %v2599, %v2613
    %v2624 = vmul.f32 %v2600, %v2615
    %v2625 = vmul.f32 %v2601, %v2617
    %2630 = vrot.lane.b32.xlu0 %v2598, 64
    %v2631 = vpop.permute.xlu0 %2630
    %2632 = vrot.lane.b32.xlu0 %v2599, 64
    %v2633 = vpop.permute.xlu0 %2632
    %2634 = vrot.lane.b32.xlu0 %v2600, 64
    %v2635 = vpop.permute.xlu0 %2634
    %2636 = vrot.lane.b32.xlu0 %v2601, 64
    %v2637 = vpop.permute.xlu0 %2636
    %v2642 = vmul.f32 %v2598, %v2631
    %v2643 = vmul.f32 %v2599, %v2633
    %v2644 = vmul.f32 %v2600, %v2635
    %v2645 = vmul.f32 %v2601, %v2637
    %2650 = vrot.lane.b32.xlu0 %v2642, 32
    %v2651 = vpop.permute.xlu0 %2650
    %2652 = vrot.lane.b32.xlu0 %v2643, 32
    %v2653 = vpop.permute.xlu0 %2652
    %2654 = vrot.lane.b32.xlu0 %v2644, 32
    %v2655 = vpop.permute.xlu0 %2654
    %2656 = vrot.lane.b32.xlu0 %v2645, 32
    %v2657 = vpop.permute.xlu0 %2656
    %v2662 = vadd.f32 %v2622, %v2651
    %v2663 = vadd.f32 %v2623, %v2653
    %v2664 = vadd.f32 %v2624, %v2655
    %v2665 = vadd.f32 %v2625, %v2657
    %v2666 = vtanh.pop %v2662
    %v2667 = vtanh.pop %v2663
    %v2668 = vtanh.pop %v2664
    %v2669 = vtanh.pop %v2665
    %2674 = vrot.lane.b32.xlu0 %v2666, 64
    %v2675 = vpop.permute.xlu0 %2674
    %2676 = vrot.lane.b32.xlu0 %v2667, 64
    %v2677 = vpop.permute.xlu0 %2676
    %2678 = vrot.lane.b32.xlu0 %v2668, 64
    %v2679 = vpop.permute.xlu0 %2678
    %2680 = vrot.lane.b32.xlu0 %v2669, 64
    %v2681 = vpop.permute.xlu0 %2680
    %v2686 = vmul.f32 %v2598, %v2675
    %v2687 = vmul.f32 %v2599, %v2677
    %v2688 = vmul.f32 %v2600, %v2679
    %v2689 = vmul.f32 %v2601, %v2681
    %2694 = vrot.lane.b32.xlu0 %v2662, 96
    %v2695 = vpop.permute.xlu0 %2694
    %2696 = vrot.lane.b32.xlu0 %v2663, 96
    %v2697 = vpop.permute.xlu0 %2696
    %2698 = vrot.lane.b32.xlu0 %v2664, 96
    %v2699 = vpop.permute.xlu0 %2698
    %2700 = vrot.lane.b32.xlu0 %v2665, 96
    %v2701 = vpop.permute.xlu0 %2700
    %2706 = vst.msk [vmem:[#allocation3] sm:$0xff] %vm300, %v2695
    %2707 = vst.msk [vmem:[#allocation3 + $0x8] sm:$0xff] %vm300, %v2697
    %2708 = vst.msk [vmem:[#allocation3 + $0x10] sm:$0xff] %vm300, %v2699
    %2709 = vst.msk [vmem:[#allocation3 + $0x18] sm:$0xff] %vm300, %v2701
    %v2714 = vrot.slane %v2686, 7
    %v2715 = vrot.slane %v2687, 7
    %v2716 = vsel %vm309, %v2714, %v2715
    %v2717 = vrot.slane %v2688, 7
    %v2718 = vrot.slane %v2689, 7
    %v2719 = vsel %vm309, %v2717, %v2718
    %v2722 = vsel %vm309, %v2686, %v2714
    %v2723 = vsel %vm309, %v2688, %v2717
    %v2724 = vrot.slane %v2686, 1
    %v2725 = vrot.slane %v2687, 1
    %v2726 = vsel %vm320, %v2724, %v2725
    %v2727 = vrot.slane %v2688, 1
    %v2728 = vrot.slane %v2689, 1
    %v2729 = vsel %vm320, %v2727, %v2728
    %v2732 = vsel %vm320, %v2725, %v2687
    %v2733 = vsel %vm320, %v2728, %v2689
    %2736 = vrot.lane.b32.xlu0 %v2722, 32
    %v2737 = vpop.permute.xlu0 %2736
    %2738 = vrot.lane.b32.xlu0 %v2716, 32
    %v2739 = vpop.permute.xlu0 %2738
    %2740 = vrot.lane.b32.xlu0 %v2723, 32
    %v2741 = vpop.permute.xlu0 %2740
    %2742 = vrot.lane.b32.xlu0 %v2719, 32
    %v2743 = vpop.permute.xlu0 %2742
    %2748 = vrot.lane.b32.xlu0 %v2686, 64
    %v2749 = vpop.permute.xlu0 %2748
    %2750 = vrot.lane.b32.xlu0 %v2687, 64
    %v2751 = vpop.permute.xlu0 %2750
    %2752 = vrot.lane.b32.xlu0 %v2688, 64
    %v2753 = vpop.permute.xlu0 %2752
    %2754 = vrot.lane.b32.xlu0 %v2689, 64
    %v2755 = vpop.permute.xlu0 %2754
    %2762 = vrot.lane.b32.xlu0 %v2726, 96
    %v2763 = vpop.permute.xlu0 %2762
    %2764 = vrot.lane.b32.xlu0 %v2732, 96
    %v2765 = vpop.permute.xlu0 %2764
    %2766 = vrot.lane.b32.xlu0 %v2729, 96
    %v2767 = vpop.permute.xlu0 %2766
    %2768 = vrot.lane.b32.xlu0 %v2733, 96
    %v2769 = vpop.permute.xlu0 %2768
    %v2774 = vsel %vm300, %v2737, %v2749
    %v2775 = vsel %vm300, %v2739, %v2751
    %v2776 = vsel %vm300, %v2741, %v2753
    %v2777 = vsel %vm300, %v2743, %v2755
    %v2778 = vsel %vm375, %v2774, %v2763
    %v2779 = vsel %vm375, %v2775, %v2765
    %v2780 = vsel %vm375, %v2776, %v2767
    %v2781 = vsel %vm375, %v2777, %v2769
    %v2782 = vpack.c.bf16 %v2779, %v2778
    %v2783 = vpack.c.bf16 %v2781, %v2780
    %v2786 = vunpack.c.l.b16 %v2782
    %v2787 = vunpack.c.h.b16 %v2782
    %v2788 = vunpack.c.l.b16 %v2783
    %v2789 = vunpack.c.h.b16 %v2783
    %v2790 = vpack.c.b16 %v2786, %v2786
    %v2791 = vpack.c.b16 %v2787, %v2787
    %v2792 = vpack.c.b16 %v2788, %v2788
    %v2793 = vpack.c.b16 %v2789, %v2789
    %2798 = vst.msk [vmem:[#allocation2] sm:$0xf] %vm396, %v2790
    %2799 = vst.msk [vmem:[#allocation2 + $0x4] sm:$0xf] %vm396, %v2791
    %2800 = vst.msk [vmem:[#allocation2 + $0x8] sm:$0xf] %vm396, %v2792
    %2801 = vst.msk [vmem:[#allocation2 + $0xc] sm:$0xf] %vm396, %v2793
    %v2802 = vpack.c.bf16 %v2687, %v2686
    %v2803 = vpack.c.bf16 %v2689, %v2688
    %v2806 = vunpack.c.l.b16 %v2802
    %v2807 = vunpack.c.h.b16 %v2802
    %v2808 = vunpack.c.l.b16 %v2803
    %v2809 = vunpack.c.h.b16 %v2803
    %v2810 = vpack.c.b16 %v2806, %v2806
    %v2811 = vpack.c.b16 %v2807, %v2807
    %v2812 = vpack.c.b16 %v2808, %v2808
    %v2813 = vpack.c.b16 %v2809, %v2809
    %2814 = vrot.lane.b32.xlu0 %v2810, 32
    %v2815 = vpop.permute.xlu0 %2814
    %2816 = vrot.lane.b32.xlu0 %v2811, 32
    %v2817 = vpop.permute.xlu0 %2816
    %2818 = vrot.lane.b32.xlu0 %v2812, 32
    %v2819 = vpop.permute.xlu0 %2818
    %2820 = vrot.lane.b32.xlu0 %v2813, 32
    %v2821 = vpop.permute.xlu0 %2820
    %s2826 = scalar_lea.vmem %s2, 56
    %2827 = vst.msk [vmem:[%s2826] sm:$0xf] %vm425, %v2815
    %2828 = vst.msk [vmem:[%s2826 + $0x4] sm:$0xf] %vm425, %v2817
    %2829 = vst.msk [vmem:[%s2826 + $0x40] sm:$0xf] %vm425, %v2819
    %2830 = vst.msk [vmem:[%s2826 + $0x44] sm:$0xf] %vm425, %v2821
    // Predicated region
    $region14: #{conv1d_lstm_forward.2} parent=1 // pred_check
      %p2831 = pneg %p15
    $region15: #{conv1d_lstm_forward.2} parent=1 // pred_check_branch
      %2833 = sbr.rel (%p2831) target = $region17
    $region16: #{conv1d_lstm_forward.2} parent=1 // pred_region
      %v2834 = vld [vmem:[#allocation3] sm:$0xff]
      %v2835 = vld [vmem:[#allocation3 + $0x8] sm:$0xff]
      %v2836 = vld [vmem:[#allocation3 + $0x10] sm:$0xff]
      %v2837 = vld [vmem:[#allocation3 + $0x18] sm:$0xff]
      %2838 = vst.msk [vmem:[#allocation4] sm:$0xff] %vm300, %v2834
      %2839 = vst.msk [vmem:[#allocation4 + $0x8] sm:$0xff] %vm300, %v2835
      %2840 = vst.msk [vmem:[#allocation4 + $0x10] sm:$0xff] %vm300, %v2836
      %2841 = vst.msk [vmem:[#allocation4 + $0x18] sm:$0xff] %vm300, %v2837
    $region17: #{conv1d_lstm_forward.2} parent=1 // pred_fallthru
      _
    // Predicated region
    $region18: #{conv1d_lstm_forward.2} parent=1 // pred_check
      _
    $region19: #{conv1d_lstm_forward.2} parent=1 // pred_check_branch
      %2843 = sbr.rel (0) target = $region21
    $region20: #{conv1d_lstm_forward.2} parent=1 // pred_region
      _
    $region21: #{conv1d_lstm_forward.2} parent=1 // pred_fallthru
      _
    // Predicated region
    $region22: #{conv1d_lstm_forward.2} parent=1 // pred_check
      _
    $region23: #{conv1d_lstm_forward.2} parent=1 // pred_check_branch
      %2845 = sbr.rel (0) target = $region25
    $region24: #{conv1d_lstm_forward.2} parent=1 // pred_region
      %s2847 = ssub.s32 512, 512
      %2848 = vsyncadd [#allocation5], %s2847
      %s2849 = sshll.u32 [#allocation4], 4
      %s2850 = int_to_ptr.vmem [resolvable:$true] %s2849
      %2855 = dma.vmem_to_hbm [thread:$0]  %s2850, 512, %s3, [#allocation5], 128, 128, 8
    $region25: #{conv1d_lstm_forward.2} parent=1 // pred_fallthru
      _
    // Predicated region
    $region26: #{conv1d_lstm_forward.2} parent=1 // pred_check
      _
    $region27: #{conv1d_lstm_forward.2} parent=1 // pred_check_branch
      %2857 = sbr.rel (0) target = $region29
    $region28: #{conv1d_lstm_forward.2} parent=1 // pred_region
      _
    $region29: #{conv1d_lstm_forward.2} parent=1 // pred_fallthru
      _
    // Predicated region
    $region30: #{conv1d_lstm_forward.2} parent=1 // pred_check
      _
    $region31: #{conv1d_lstm_forward.2} parent=1 // pred_check_branch
      %2859 = sbr.rel (0) target = $region33
    $region32: #{conv1d_lstm_forward.2} parent=1 // pred_region
      %2860 = dma.done [#allocation5], 512
    $region33: #{conv1d_lstm_forward.2} parent=1 // pred_fallthru
      _
    %2861 = vsyncpa [#allocation5], 1

</llo_original>
